<compile_context>
chip_gen: v7x
topology: tpu7x:2x2x1
jax: 0.10.0
libtpu: 0.0.40
codegen_flags: <defaults>
</compile_context>

<pallas_src>
import numpy as np
import jax
import jax.numpy as jnp
from jax.experimental import pallas as pl
from jax.experimental.pallas import tpu as pltpu  # noqa: F401  (TPU backend assumed)


# ----------------------- host-side operator construction -----------------------

def _reflect_idx(i, n):
    """ReflectionPad(1) index map for offsets in [-1, n]."""
    if i < 0:
        return -i
    if i >= n:
        return 2 * n - 2 - i
    return i


def _upsample_blur_1d(n):
    """(2n, n): nearest x2 upsample followed by [1,2,1]/4 blur w/ reflect pad."""
    U = np.zeros((2 * n, n), np.float32)
    U[np.arange(2 * n), np.arange(2 * n) // 2] = 1.0
    B = np.zeros((2 * n, 2 * n), np.float32)
    for k in range(2 * n):
        for d, t in ((-1, 1.0), (0, 2.0), (1, 1.0)):
            B[k, _reflect_idx(k + d, 2 * n)] += t / 4.0
    return B @ U


def _shift_mat(n, off):
    """(n, n): S[p, reflect(p+off)] = 1  (reflect-padded spatial shift)."""
    S = np.zeros((n, n), np.float32)
    for p in range(n):
        S[p, _reflect_idx(p + off, n)] = 1.0
    return S


def _conv_left_stacked(w, H):
    """w: (Cout, Cin, 3, 3) -> stacked (3*Cout*H, Cin*H) bf16 operator.

    Block kx holds  L_kx = sum_ky kron(w[:, :, ky, kx], Rh_ky)  (reflect shift in H).
    """
    w = np.asarray(w, np.float32)
    Rh = [_shift_mat(H, ky - 1) for ky in range(3)]
    blocks = []
    for kx in range(3):
        Lkx = sum(np.kron(w[:, :, ky, kx], Rh[ky]) for ky in range(3))
        blocks.append(Lkx)
    return jnp.asarray(np.concatenate(blocks, axis=0), dtype=jnp.bfloat16)


def _width_shift_ops(W, n_batch):
    """(2, N*W, N*W): per-sample reflect-padded width shifts for offsets -1, +1."""
    eyeN = np.eye(n_batch, dtype=np.float32)
    mats = [np.kron(eyeN, _shift_mat(W, off).T) for off in (-1, +1)]
    return jnp.asarray(np.stack(mats), dtype=jnp.float32)


def _block_avg(n_blocks, blk):
    """(n_blocks*blk, n_blocks*blk): block-diagonal averaging operator (1/blk)."""
    return np.kron(np.eye(n_blocks, dtype=np.float32),
                   np.ones((blk, blk), np.float32) / float(blk))


def _gamma_beta_cols(g, bt, H):
    """(C*H, 2): column 0 = gamma per row, column 1 = beta per row."""
    g = np.repeat(np.asarray(g, np.float32), H)
    bt = np.repeat(np.asarray(bt, np.float32), H)
    return jnp.asarray(np.stack([g, bt], axis=1))


def precompute_decoder2_ops(params, in_hw, batch):
    """Build all (tiny) operator matrices once from the PyTorch-style params."""
    H0, W0 = in_hw
    N = batch
    C1, C0 = params["w1"].shape[:2]
    C2 = params["w2"].shape[0]
    H1, W1 = 2 * H0, 2 * W0
    H2, W2 = 2 * H1, 2 * W1
    bf = jnp.bfloat16
    f32 = np.float32
    return dict(
        shapes=(C0, C1, C2, H0, W0, H1, W1, H2, W2, N),
        # stage 1: upsample x2 + blur, conv1 (bias cancelled by IN), IN1 affine
        ub1L=jnp.asarray(np.kron(np.eye(C0, dtype=f32), _upsample_blur_1d(H0)), bf),   # (C0*H1, C0*H0)
        ub1R=jnp.asarray(np.kron(np.eye(N, dtype=f32), _upsample_blur_1d(W0).T), bf),  # (N*W0, N*W1)
        L1=_conv_left_stacked(params["w1"], H1),                                       # (3*C1*H1, C0*H1)
        R1=_width_shift_ops(W1, N),                                                    # (2, N*W1, N*W1)
        PnL1=jnp.asarray(_block_avg(2 * C1, H1)),                                      # (2*C1*H1, 2*C1*H1)
        PnR1=jnp.asarray(_block_avg(N, W1)),                                           # (N*W1, N*W1)
        gb1=_gamma_beta_cols(params["g1"], params["bt1"], H1),                         # (C1*H1, 2)
        # stage 2: upsample x2 + blur, conv2 (bias cancelled by IN), IN2 affine
        ub2L=jnp.asarray(np.kron(np.eye(C1, dtype=f32), _upsample_blur_1d(H1)), bf),   # (C1*H2, C1*H1)
        ub2R=jnp.asarray(np.kron(np.eye(N, dtype=f32), _upsample_blur_1d(W1).T), bf),  # (N*W1, N*W2)
        L2=_conv_left_stacked(params["w2"], H2),                                       # (3*C2*H2, C1*H2)
        R2=_width_shift_ops(W2, N),                                                    # (2, N*W2, N*W2), shared w/ conv3
        PnL2=jnp.asarray(_block_avg(2 * C2, H2)),                                      # (2*C2*H2, 2*C2*H2)
        PnR2=jnp.asarray(_block_avg(N, W2)),                                           # (N*W2, N*W2)
        gb2=_gamma_beta_cols(params["g2"], params["bt2"], H2),                         # (C2*H2, 2)
        # final conv to 3 channels (bias kept)
        L3=_conv_left_stacked(params["w3"], H2),                                       # (3*3*H2, C2*H2)
        b3=jnp.asarray(np.repeat(np.asarray(params["b3"], f32), H2)[:, None]),         # (3*H2, 1)
    )


_OP_ORDER = ["ub1L", "ub1R", "L1", "R1", "PnL1", "PnR1", "gb1",
             "ub2L", "ub2R", "L2", "R2", "PnL2", "PnR2", "gb2",
             "L3", "b3"]


# ------------------------------ fused Pallas kernel -----------------------------

def _decoder2_kernel(z_ref,
                     ub1L_ref, ub1R_ref, L1_ref, R1_ref, PnL1_ref, PnR1_ref, gb1_ref,
                     ub2L_ref, ub2R_ref, L2_ref, R2_ref, PnL2_ref, PnR2_ref, gb2_ref,
                     L3_ref, b3_ref,
                     o_ref):
    bf16 = jnp.bfloat16

    def mm(a, b):
        return jnp.dot(a, b, preferred_element_type=jnp.float32)

    def up_blur(a, ubL_ref, ubR_ref):
        # nearest x2 upsample + [1,2,1]/16 blur folded into two operator matmuls
        return mm(ubL_ref[...], mm(a.astype(bf16), ubR_ref[...]).astype(bf16))

    def conv3x3(a, L_ref, R_ref):
        # reflect-padded 3x3 conv: one stacked-taps MXU matmul (bf16) + two
        # per-sample width-shift matmuls; the kx=1 shift is the identity.
        ys = mm(L_ref[...], a.astype(bf16))          # (3*CoutH, N*W), f32 accum
        ch = L_ref.shape[0] // 3
        y = ys[ch:2 * ch, :]                         # kx = 1  (identity width shift)
        y = y + mm(ys[0:ch, :], R_ref[0])            # kx = 0  (width shift -1, reflect)
        y = y + mm(ys[2 * ch:3 * ch, :], R_ref[1])   # kx = 2  (width shift +1, reflect)
        return y

    def inst_norm_relu(y, PnL_ref, PnR_ref, gb_ref):
        # per-sample, per-channel InstanceNorm (biased var, eps=1e-5) + affine + ReLU.
        # E[y] and E[y^2] computed together from the row-stacked [Y; Y*Y].
        ch = y.shape[0]
        t = jnp.concatenate([y, y * y], axis=0)      # (2*CH, N*W), f32
        s = mm(mm(PnL_ref[...], t), PnR_ref[...])    # broadcast per-(chan, sample) means
        m = s[:ch, :]
        var = s[ch:, :] - m * m
        yn = (y - m) * jax.lax.rsqrt(var + 1e-5)
        return jnp.maximum(yn * gb_ref[:, 0:1] + gb_ref[:, 1:2], 0.0)

    # stage 1: Upsample(x2) + Blur + Conv3x3 + InstanceNorm + ReLU
    a = up_blur(z_ref[...], ub1L_ref, ub1R_ref)                          # (C0*H1, N*W1)
    a = inst_norm_relu(conv3x3(a, L1_ref, R1_ref), PnL1_ref, PnR1_ref, gb1_ref)

    # stage 2: Upsample(x2) + Blur + Conv3x3 + InstanceNorm + ReLU
    a = up_blur(a, ub2L_ref, ub2R_ref)                                   # (C1*H2, N*W2)
    a = inst_norm_relu(conv3x3(a, L2_ref, R2_ref), PnL2_ref, PnR2_ref, gb2_ref)

    # final Conv3x3 to 3 channels (bias, no norm / activation)
    o_ref[...] = conv3x3(a, L3_ref, R2_ref) + b3_ref[...]                # (3*H2, N*W2)


def decoder2_forward(x, ops):
    C0, C1, C2, H0, W0, H1, W1, H2, W2, N = ops["shapes"]
    assert x.shape == (N, C0, H0, W0), x.shape
    # Fold the batch into the lane (width) axis: Z[c*H0+h, n*W0+w] = x[n,c,h,w]
    z = jnp.transpose(x, (1, 2, 0, 3)).reshape(C0 * H0, N * W0)
    op_arrays = [ops[k] for k in _OP_ORDER]

    # Single invocation, no grid: every operand is a whole-array VMEM block
    # (all constants staged exactly once, no per-step grid overhead).
    out = pl.pallas_call(
        _decoder2_kernel,
        out_shape=jax.ShapeDtypeStruct((3 * H2, N * W2), jnp.float32),
    )(z, *op_arrays)

    return jnp.transpose(out.reshape(3, H2, N, W2), (2, 0, 1, 3))        # (N, 3, H2, W2)


# ------------------------------ pure-JAX reference ------------------------------

def _upsample2_nearest(x):
    return jnp.repeat(jnp.repeat(x, 2, axis=2), 2, axis=3)


def _reflect_pad1(x):
    return jnp.pad(x, ((0, 0), (0, 0), (1, 1), (1, 1)), mode="reflect")


def _ref_conv3x3(x, w, b):
    xp = _reflect_pad1(x)
    y = jax.lax.conv_general_dilated(xp, w, (1, 1), "VALID",
                                     dimension_numbers=("NCHW", "OIHW", "NCHW"))
    return y + b[None, :, None, None]


def _ref_blur(x):
    C = x.shape[1]
    f = jnp.array([1.0, 2.0, 1.0], jnp.float32)
    k = (f[:, None] * f[None, :]) / 16.0
    kern = jnp.tile(k[None, None], (C, 1, 1, 1))
    xp = _reflect_pad1(x)
    return jax.lax.conv_general_dilated(xp, kern, (1, 1), "VALID",
                                        dimension_numbers=("NCHW", "OIHW", "NCHW"),
                                        feature_group_count=C)


def _ref_in_relu(x, g, bt):
    m = x.mean(axis=(2, 3), keepdims=True)
    v = ((x - m) ** 2).mean(axis=(2, 3), keepdims=True)
    y = (x - m) * jax.lax.rsqrt(v + 1e-5)
    y = y * g[None, :, None, None] + bt[None, :, None, None]
    return jnp.maximum(y, 0.0)


def decoder2_reference(x, p):
    x = _upsample2_nearest(x)
    x = _ref_blur(x)
    x = _ref_in_relu(_ref_conv3x3(x, p["w1"], p["b1"]), p["g1"], p["bt1"])
    x = _upsample2_nearest(x)
    x = _ref_blur(x)
    x = _ref_in_relu(_ref_conv3x3(x, p["w2"], p["b2"]), p["g2"], p["bt2"])
    x = _ref_conv3x3(x, p["w3"], p["b3"])
    return x


# ------------------------------------- main -------------------------------------

if __name__ == "__main__":
    # a = 0.125  ->  filter_counts = [int(0.125*64), int(0.125*48), int(0.125*32)]
    C0, C1, C2 = 8, 6, 4
    N, H, W = 2, 8, 8

    key = jax.random.PRNGKey(0)
    ks = jax.random.split(key, 10)
    params = {
        "w1": 0.1 * jax.random.normal(ks[0], (C1, C0, 3, 3), jnp.float32),
        "b1": 0.05 * jax.random.normal(ks[1], (C1,), jnp.float32),
        "g1": 1.0 + 0.1 * jax.random.normal(ks[2], (C1,), jnp.float32),
        "bt1": 0.1 * jax.random.normal(ks[3], (C1,), jnp.float32),
        "w2": 0.1 * jax.random.normal(ks[4], (C2, C1, 3, 3), jnp.float32),
        "b2": 0.05 * jax.random.normal(ks[5], (C2,), jnp.float32),
        "g2": 1.0 + 0.1 * jax.random.normal(ks[6], (C2,), jnp.float32),
        "bt2": 0.1 * jax.random.normal(ks[7], (C2,), jnp.float32),
        "w3": 0.1 * jax.random.normal(ks[8], (3, C2, 3, 3), jnp.float32),
        "b3": 0.05 * jax.random.normal(ks[9], (3,), jnp.float32),
    }

    x = jax.random.normal(jax.random.PRNGKey(0), (N, C0, H, W), jnp.float32)

    ops = precompute_decoder2_ops(params, (H, W), batch=N)   # done once, reused every call
    out = jax.block_until_ready(decoder2_forward(x, ops))
    ref = jax.block_until_ready(decoder2_reference(x, params))

    assert out.shape == (N, 3, 4 * H, 4 * W), out.shape
    # bf16 MXU operands for the conv/upsample operators + the E[y^2]-m^2 variance
    # form introduce small benign drift vs. the f32 XLA conv reference.
    assert jnp.allclose(out, ref, atol=2e-2, rtol=2e-2), float(
        jnp.max(jnp.abs(out - ref)))

    print("KERNEL_OK")
</pallas_src>

<mosaic_0001>
module attributes {stable_mosaic.version = 11 : i64} {
  func.func @_decoder2_kernel(%arg0: memref<64x16xf32, #tpu.memory_space<vmem>>, %arg1: memref<128x64xbf16, #tpu.memory_space<vmem>>, %arg2: memref<16x32xbf16, #tpu.memory_space<vmem>>, %arg3: memref<288x128xbf16, #tpu.memory_space<vmem>>, %arg4: memref<2x32x32xf32, #tpu.memory_space<vmem>>, %arg5: memref<192x192xf32, #tpu.memory_space<vmem>>, %arg6: memref<32x32xf32, #tpu.memory_space<vmem>>, %arg7: memref<96x2xf32, #tpu.memory_space<vmem>>, %arg8: memref<192x96xbf16, #tpu.memory_space<vmem>>, %arg9: memref<32x64xbf16, #tpu.memory_space<vmem>>, %arg10: memref<384x192xbf16, #tpu.memory_space<vmem>>, %arg11: memref<2x64x64xf32, #tpu.memory_space<vmem>>, %arg12: memref<256x256xf32, #tpu.memory_space<vmem>>, %arg13: memref<64x64xf32, #tpu.memory_space<vmem>>, %arg14: memref<128x2xf32, #tpu.memory_space<vmem>>, %arg15: memref<288x128xbf16, #tpu.memory_space<vmem>>, %arg16: memref<96x1xf32, #tpu.memory_space<vmem>>, %arg17: memref<96x64xf32, #tpu.memory_space<vmem>>) attributes {dimension_semantics = [], scalar_prefetch = 0 : i64, scratch_operands = 0 : i64, tpu.core_type = #tpu.core_type<tc>} {
    %c0 = arith.constant 0 : index
    %c0_0 = arith.constant 0 : index
    %0 = vector.load %arg0[%c0, %c0_0] : memref<64x16xf32, #tpu.memory_space<vmem>>, vector<64x16xf32>
    %c0_1 = arith.constant 0 : index
    %c0_2 = arith.constant 0 : index
    %1 = vector.load %arg1[%c0_1, %c0_2] : memref<128x64xbf16, #tpu.memory_space<vmem>>, vector<128x64xbf16>
    %2 = arith.truncf %0 : vector<64x16xf32> to vector<64x16xbf16>
    %c0_3 = arith.constant 0 : index
    %c0_4 = arith.constant 0 : index
    %3 = vector.load %arg2[%c0_3, %c0_4] : memref<16x32xbf16, #tpu.memory_space<vmem>>, vector<16x32xbf16>
    %cst = arith.constant dense<0.000000e+00> : vector<64x32xf32>
    %4 = tpu.matmul %2, %3, %cst {dimension_numbers = #tpu.dot_dimension_numbers<[1], [0], [0], [1], [0, 0, 1, 1], [], []>} : vector<64x16xbf16>, vector<16x32xbf16>, vector<64x32xf32> -> vector<64x32xf32>
    %5 = arith.truncf %4 : vector<64x32xf32> to vector<64x32xbf16>
    %cst_5 = arith.constant dense<0.000000e+00> : vector<128x32xf32>
    %6 = tpu.matmul %1, %5, %cst_5 {dimension_numbers = #tpu.dot_dimension_numbers<[1], [0], [0], [1], [0, 0, 1, 1], [], []>} : vector<128x64xbf16>, vector<64x32xbf16>, vector<128x32xf32> -> vector<128x32xf32>
    %c0_6 = arith.constant 0 : index
    %c0_7 = arith.constant 0 : index
    %7 = vector.load %arg3[%c0_6, %c0_7] : memref<288x128xbf16, #tpu.memory_space<vmem>>, vector<288x128xbf16>
    %8 = arith.truncf %6 : vector<128x32xf32> to vector<128x32xbf16>
    %cst_8 = arith.constant dense<0.000000e+00> : vector<288x32xf32>
    %9 = tpu.matmul %7, %8, %cst_8 {dimension_numbers = #tpu.dot_dimension_numbers<[1], [0], [0], [1], [0, 0, 1, 1], [], []>} : vector<288x128xbf16>, vector<128x32xbf16>, vector<288x32xf32> -> vector<288x32xf32>
    %10 = vector.extract_strided_slice %9 {offsets = [96, 0], sizes = [96, 32], strides = [1, 1]} : vector<288x32xf32> to vector<96x32xf32>
    %11 = vector.extract_strided_slice %9 {offsets = [0, 0], sizes = [96, 32], strides = [1, 1]} : vector<288x32xf32> to vector<96x32xf32>
    %c0_9 = arith.constant 0 : index
    %c0_10 = arith.constant 0 : index
    %c0_11 = arith.constant 0 : index
    %12 = vector.load %arg4[%c0_9, %c0_10, %c0_11] : memref<2x32x32xf32, #tpu.memory_space<vmem>>, vector<1x32x32xf32>
    %13 = vector.shape_cast %12 : vector<1x32x32xf32> to vector<32x32xf32>
    %cst_12 = arith.constant dense<0.000000e+00> : vector<96x32xf32>
    %14 = tpu.matmul %11, %13, %cst_12 {dimension_numbers = #tpu.dot_dimension_numbers<[1], [0], [0], [1], [0, 0, 1, 1], [], []>} : vector<96x32xf32>, vector<32x32xf32>, vector<96x32xf32> -> vector<96x32xf32>
    %15 = arith.addf %10, %14 : vector<96x32xf32>
    %16 = vector.extract_strided_slice %9 {offsets = [192, 0], sizes = [96, 32], strides = [1, 1]} : vector<288x32xf32> to vector<96x32xf32>
    %c1 = arith.constant 1 : index
    %c0_13 = arith.constant 0 : index
    %c0_14 = arith.constant 0 : index
    %17 = vector.load %arg4[%c1, %c0_13, %c0_14] : memref<2x32x32xf32, #tpu.memory_space<vmem>>, vector<1x32x32xf32>
    %18 = vector.shape_cast %17 : vector<1x32x32xf32> to vector<32x32xf32>
    %cst_15 = arith.constant dense<0.000000e+00> : vector<96x32xf32>
    %19 = tpu.matmul %16, %18, %cst_15 {dimension_numbers = #tpu.dot_dimension_numbers<[1], [0], [0], [1], [0, 0, 1, 1], [], []>} : vector<96x32xf32>, vector<32x32xf32>, vector<96x32xf32> -> vector<96x32xf32>
    %20 = arith.addf %15, %19 : vector<96x32xf32>
    %21 = arith.mulf %20, %20 : vector<96x32xf32>
    %22 = tpu.concatenate %20, %21 in 0 : vector<96x32xf32>, vector<96x32xf32> -> vector<192x32xf32>
    %c0_16 = arith.constant 0 : index
    %c0_17 = arith.constant 0 : index
    %23 = vector.load %arg5[%c0_16, %c0_17] : memref<192x192xf32, #tpu.memory_space<vmem>>, vector<192x192xf32>
    %cst_18 = arith.constant dense<0.000000e+00> : vector<192x32xf32>
    %24 = tpu.matmul %23, %22, %cst_18 {dimension_numbers = #tpu.dot_dimension_numbers<[1], [0], [0], [1], [0, 0, 1, 1], [], []>} : vector<192x192xf32>, vector<192x32xf32>, vector<192x32xf32> -> vector<192x32xf32>
    %c0_19 = arith.constant 0 : index
    %c0_20 = arith.constant 0 : index
    %25 = vector.load %arg6[%c0_19, %c0_20] : memref<32x32xf32, #tpu.memory_space<vmem>>, vector<32x32xf32>
    %cst_21 = arith.constant dense<0.000000e+00> : vector<192x32xf32>
    %26 = tpu.matmul %24, %25, %cst_21 {dimension_numbers = #tpu.dot_dimension_numbers<[1], [0], [0], [1], [0, 0, 1, 1], [], []>} : vector<192x32xf32>, vector<32x32xf32>, vector<192x32xf32> -> vector<192x32xf32>
    %27 = vector.extract_strided_slice %26 {offsets = [0, 0], sizes = [96, 32], strides = [1, 1]} : vector<192x32xf32> to vector<96x32xf32>
    %28 = vector.extract_strided_slice %26 {offsets = [96, 0], sizes = [96, 32], strides = [1, 1]} : vector<192x32xf32> to vector<96x32xf32>
    %29 = arith.mulf %27, %27 : vector<96x32xf32>
    %30 = arith.subf %28, %29 : vector<96x32xf32>
    %31 = arith.subf %20, %27 : vector<96x32xf32>
    %cst_22 = arith.constant 9.99999974E-6 : f32
    %32 = vector.broadcast %cst_22 : f32 to vector<96x32xf32>
    %33 = arith.addf %30, %32 : vector<96x32xf32>
    %34 = math.rsqrt %33 : vector<96x32xf32>
    %35 = arith.mulf %31, %34 : vector<96x32xf32>
    %c0_23 = arith.constant 0 : index
    %c0_24 = arith.constant 0 : index
    %36 = vector.load %arg7[%c0_23, %c0_24] : memref<96x2xf32, #tpu.memory_space<vmem>>, vector<96x1xf32>
    %37 = vector.broadcast %36 : vector<96x1xf32> to vector<96x32xf32>
    %38 = arith.mulf %35, %37 : vector<96x32xf32>
    %c0_25 = arith.constant 0 : index
    %c1_26 = arith.constant 1 : index
    %39 = vector.load %arg7[%c0_25, %c1_26] : memref<96x2xf32, #tpu.memory_space<vmem>>, vector<96x1xf32>
    %40 = vector.broadcast %39 : vector<96x1xf32> to vector<96x32xf32>
    %41 = arith.addf %38, %40 : vector<96x32xf32>
    %cst_27 = arith.constant 0.000000e+00 : f32
    %42 = vector.broadcast %cst_27 : f32 to vector<96x32xf32>
    %43 = arith.maximumf %41, %42 : vector<96x32xf32>
    %c0_28 = arith.constant 0 : index
    %c0_29 = arith.constant 0 : index
    %44 = vector.load %arg8[%c0_28, %c0_29] : memref<192x96xbf16, #tpu.memory_space<vmem>>, vector<192x96xbf16>
    %45 = arith.truncf %43 : vector<96x32xf32> to vector<96x32xbf16>
    %c0_30 = arith.constant 0 : index
    %c0_31 = arith.constant 0 : index
    %46 = vector.load %arg9[%c0_30, %c0_31] : memref<32x64xbf16, #tpu.memory_space<vmem>>, vector<32x64xbf16>
    %cst_32 = arith.constant dense<0.000000e+00> : vector<96x64xf32>
    %47 = tpu.matmul %45, %46, %cst_32 {dimension_numbers = #tpu.dot_dimension_numbers<[1], [0], [0], [1], [0, 0, 1, 1], [], []>} : vector<96x32xbf16>, vector<32x64xbf16>, vector<96x64xf32> -> vector<96x64xf32>
    %48 = arith.truncf %47 : vector<96x64xf32> to vector<96x64xbf16>
    %cst_33 = arith.constant dense<0.000000e+00> : vector<192x64xf32>
    %49 = tpu.matmul %44, %48, %cst_33 {dimension_numbers = #tpu.dot_dimension_numbers<[1], [0], [0], [1], [0, 0, 1, 1], [], []>} : vector<192x96xbf16>, vector<96x64xbf16>, vector<192x64xf32> -> vector<192x64xf32>
    %c0_34 = arith.constant 0 : index
    %c0_35 = arith.constant 0 : index
    %50 = vector.load %arg10[%c0_34, %c0_35] : memref<384x192xbf16, #tpu.memory_space<vmem>>, vector<384x192xbf16>
    %51 = arith.truncf %49 : vector<192x64xf32> to vector<192x64xbf16>
    %cst_36 = arith.constant dense<0.000000e+00> : vector<384x64xf32>
    %52 = tpu.matmul %50, %51, %cst_36 {dimension_numbers = #tpu.dot_dimension_numbers<[1], [0], [0], [1], [0, 0, 1, 1], [], []>} : vector<384x192xbf16>, vector<192x64xbf16>, vector<384x64xf32> -> vector<384x64xf32>
    %53 = vector.extract_strided_slice %52 {offsets = [128, 0], sizes = [128, 64], strides = [1, 1]} : vector<384x64xf32> to vector<128x64xf32>
    %54 = vector.extract_strided_slice %52 {offsets = [0, 0], sizes = [128, 64], strides = [1, 1]} : vector<384x64xf32> to vector<128x64xf32>
    %c0_37 = arith.constant 0 : index
    %c0_38 = arith.constant 0 : index
    %c0_39 = arith.constant 0 : index
    %55 = vector.load %arg11[%c0_37, %c0_38, %c0_39] : memref<2x64x64xf32, #tpu.memory_space<vmem>>, vector<1x64x64xf32>
    %56 = vector.shape_cast %55 : vector<1x64x64xf32> to vector<64x64xf32>
    %cst_40 = arith.constant dense<0.000000e+00> : vector<128x64xf32>
    %57 = tpu.matmul %54, %56, %cst_40 {dimension_numbers = #tpu.dot_dimension_numbers<[1], [0], [0], [1], [0, 0, 1, 1], [], []>} : vector<128x64xf32>, vector<64x64xf32>, vector<128x64xf32> -> vector<128x64xf32>
    %58 = arith.addf %53, %57 : vector<128x64xf32>
    %59 = vector.extract_strided_slice %52 {offsets = [256, 0], sizes = [128, 64], strides = [1, 1]} : vector<384x64xf32> to vector<128x64xf32>
    %c1_41 = arith.constant 1 : index
    %c0_42 = arith.constant 0 : index
    %c0_43 = arith.constant 0 : index
    %60 = vector.load %arg11[%c1_41, %c0_42, %c0_43] : memref<2x64x64xf32, #tpu.memory_space<vmem>>, vector<1x64x64xf32>
    %61 = vector.shape_cast %60 : vector<1x64x64xf32> to vector<64x64xf32>
    %cst_44 = arith.constant dense<0.000000e+00> : vector<128x64xf32>
    %62 = tpu.matmul %59, %61, %cst_44 {dimension_numbers = #tpu.dot_dimension_numbers<[1], [0], [0], [1], [0, 0, 1, 1], [], []>} : vector<128x64xf32>, vector<64x64xf32>, vector<128x64xf32> -> vector<128x64xf32>
    %63 = arith.addf %58, %62 : vector<128x64xf32>
    %64 = arith.mulf %63, %63 : vector<128x64xf32>
    %65 = tpu.concatenate %63, %64 in 0 : vector<128x64xf32>, vector<128x64xf32> -> vector<256x64xf32>
    %c0_45 = arith.constant 0 : index
    %c0_46 = arith.constant 0 : index
    %66 = vector.load %arg12[%c0_45, %c0_46] : memref<256x256xf32, #tpu.memory_space<vmem>>, vector<256x256xf32>
    %cst_47 = arith.constant dense<0.000000e+00> : vector<256x64xf32>
    %67 = tpu.matmul %66, %65, %cst_47 {dimension_numbers = #tpu.dot_dimension_numbers<[1], [0], [0], [1], [0, 0, 1, 1], [], []>} : vector<256x256xf32>, vector<256x64xf32>, vector<256x64xf32> -> vector<256x64xf32>
    %c0_48 = arith.constant 0 : index
    %c0_49 = arith.constant 0 : index
    %68 = vector.load %arg13[%c0_48, %c0_49] : memref<64x64xf32, #tpu.memory_space<vmem>>, vector<64x64xf32>
    %cst_50 = arith.constant dense<0.000000e+00> : vector<256x64xf32>
    %69 = tpu.matmul %67, %68, %cst_50 {dimension_numbers = #tpu.dot_dimension_numbers<[1], [0], [0], [1], [0, 0, 1, 1], [], []>} : vector<256x64xf32>, vector<64x64xf32>, vector<256x64xf32> -> vector<256x64xf32>
    %70 = vector.extract_strided_slice %69 {offsets = [0, 0], sizes = [128, 64], strides = [1, 1]} : vector<256x64xf32> to vector<128x64xf32>
    %71 = vector.extract_strided_slice %69 {offsets = [128, 0], sizes = [128, 64], strides = [1, 1]} : vector<256x64xf32> to vector<128x64xf32>
    %72 = arith.mulf %70, %70 : vector<128x64xf32>
    %73 = arith.subf %71, %72 : vector<128x64xf32>
    %74 = arith.subf %63, %70 : vector<128x64xf32>
    %cst_51 = arith.constant 9.99999974E-6 : f32
    %75 = vector.broadcast %cst_51 : f32 to vector<128x64xf32>
    %76 = arith.addf %73, %75 : vector<128x64xf32>
    %77 = math.rsqrt %76 : vector<128x64xf32>
    %78 = arith.mulf %74, %77 : vector<128x64xf32>
    %c0_52 = arith.constant 0 : index
    %c0_53 = arith.constant 0 : index
    %79 = vector.load %arg14[%c0_52, %c0_53] : memref<128x2xf32, #tpu.memory_space<vmem>>, vector<128x1xf32>
    %80 = vector.broadcast %79 : vector<128x1xf32> to vector<128x64xf32>
    %81 = arith.mulf %78, %80 : vector<128x64xf32>
    %c0_54 = arith.constant 0 : index
    %c1_55 = arith.constant 1 : index
    %82 = vector.load %arg14[%c0_54, %c1_55] : memref<128x2xf32, #tpu.memory_space<vmem>>, vector<128x1xf32>
    %83 = vector.broadcast %82 : vector<128x1xf32> to vector<128x64xf32>
    %84 = arith.addf %81, %83 : vector<128x64xf32>
    %cst_56 = arith.constant 0.000000e+00 : f32
    %85 = vector.broadcast %cst_56 : f32 to vector<128x64xf32>
    %86 = arith.maximumf %84, %85 : vector<128x64xf32>
    %c0_57 = arith.constant 0 : index
    %c0_58 = arith.constant 0 : index
    %87 = vector.load %arg15[%c0_57, %c0_58] : memref<288x128xbf16, #tpu.memory_space<vmem>>, vector<288x128xbf16>
    %88 = arith.truncf %86 : vector<128x64xf32> to vector<128x64xbf16>
    %cst_59 = arith.constant dense<0.000000e+00> : vector<288x64xf32>
    %89 = tpu.matmul %87, %88, %cst_59 {dimension_numbers = #tpu.dot_dimension_numbers<[1], [0], [0], [1], [0, 0, 1, 1], [], []>} : vector<288x128xbf16>, vector<128x64xbf16>, vector<288x64xf32> -> vector<288x64xf32>
    %90 = vector.extract_strided_slice %89 {offsets = [96, 0], sizes = [96, 64], strides = [1, 1]} : vector<288x64xf32> to vector<96x64xf32>
    %91 = vector.extract_strided_slice %89 {offsets = [0, 0], sizes = [96, 64], strides = [1, 1]} : vector<288x64xf32> to vector<96x64xf32>
    %c0_60 = arith.constant 0 : index
    %c0_61 = arith.constant 0 : index
    %c0_62 = arith.constant 0 : index
    %92 = vector.load %arg11[%c0_60, %c0_61, %c0_62] : memref<2x64x64xf32, #tpu.memory_space<vmem>>, vector<1x64x64xf32>
    %93 = vector.shape_cast %92 : vector<1x64x64xf32> to vector<64x64xf32>
    %cst_63 = arith.constant dense<0.000000e+00> : vector<96x64xf32>
    %94 = tpu.matmul %91, %93, %cst_63 {dimension_numbers = #tpu.dot_dimension_numbers<[1], [0], [0], [1], [0, 0, 1, 1], [], []>} : vector<96x64xf32>, vector<64x64xf32>, vector<96x64xf32> -> vector<96x64xf32>
    %95 = arith.addf %90, %94 : vector<96x64xf32>
    %96 = vector.extract_strided_slice %89 {offsets = [192, 0], sizes = [96, 64], strides = [1, 1]} : vector<288x64xf32> to vector<96x64xf32>
    %c1_64 = arith.constant 1 : index
    %c0_65 = arith.constant 0 : index
    %c0_66 = arith.constant 0 : index
    %97 = vector.load %arg11[%c1_64, %c0_65, %c0_66] : memref<2x64x64xf32, #tpu.memory_space<vmem>>, vector<1x64x64xf32>
    %98 = vector.shape_cast %97 : vector<1x64x64xf32> to vector<64x64xf32>
    %cst_67 = arith.constant dense<0.000000e+00> : vector<96x64xf32>
    %99 = tpu.matmul %96, %98, %cst_67 {dimension_numbers = #tpu.dot_dimension_numbers<[1], [0], [0], [1], [0, 0, 1, 1], [], []>} : vector<96x64xf32>, vector<64x64xf32>, vector<96x64xf32> -> vector<96x64xf32>
    %100 = arith.addf %95, %99 : vector<96x64xf32>
    %c0_68 = arith.constant 0 : index
    %c0_69 = arith.constant 0 : index
    %101 = vector.load %arg16[%c0_68, %c0_69] : memref<96x1xf32, #tpu.memory_space<vmem>>, vector<96x1xf32>
    %102 = vector.broadcast %101 : vector<96x1xf32> to vector<96x64xf32>
    %103 = arith.addf %100, %102 : vector<96x64xf32>
    %c0_70 = arith.constant 0 : index
    %c0_71 = arith.constant 0 : index
    %104 = vector.load %arg17[%c0_70, %c0_71] : memref<96x64xf32, #tpu.memory_space<vmem>>, vector<96x64xf32>
    tpu.vector_store %arg17[%c0_70, %c0_71], %103 {strides = array<i32>} : memref<96x64xf32, #tpu.memory_space<vmem>>, vector<96x64xf32>,
    return
  }
}

</mosaic_0001>

<llo_original>
// kernel: tpu_custom_call.1
$region0: #{tpu_custom_call.1}
  #allocation0 [shape = 'u32[]', space=smem, size = 0x4, offset = 0x4, fixed_abs, tag = 'smem constant byte address 0x4 - core index']
  #allocation1 [shape = 'u32[144,128]{1,0:T(1,128)}', space=vmem, size = 0x12000, scoped, tag = 'internal scratch']
  %s0 = inlined_call_operand.vmem [shape: f32[64,16], index: 0, kind: input, shape index: {}]
  %s1 = inlined_call_operand.vmem [shape: bf16[128,64], index: 1, kind: input, shape index: {}]
  %s2 = inlined_call_operand.vmem [shape: bf16[16,32], index: 2, kind: input, shape index: {}]
  %s3 = inlined_call_operand.hbm [shape: bf16[288,128], index: 3, kind: input, shape index: {}]
  %s4 = inlined_call_operand.hbm [shape: f32[2,32,32], index: 4, kind: input, shape index: {}]
  %s5 = inlined_call_operand.vmem [shape: f32[192,192], index: 5, kind: input, shape index: {}]
  %s6 = inlined_call_operand.hbm [shape: f32[32,32], index: 6, kind: input, shape index: {}]
  %s7 = inlined_call_operand.vmem [shape: f32[96,2], index: 7, kind: input, shape index: {}]
  %s8 = inlined_call_operand.hbm [shape: bf16[192,96], index: 8, kind: input, shape index: {}]
  %s9 = inlined_call_operand.vmem [shape: bf16[32,64], index: 9, kind: input, shape index: {}]
  %s10 = inlined_call_operand.vmem [shape: bf16[384,192], index: 10, kind: input, shape index: {}]
  %s11 = inlined_call_operand.hbm [shape: f32[2,64,64], index: 11, kind: input, shape index: {}]
  %s12 = inlined_call_operand.vmem [shape: f32[256,256], index: 12, kind: input, shape index: {}]
  %s13 = inlined_call_operand.hbm [shape: f32[64,64], index: 13, kind: input, shape index: {}]
  %s14 = inlined_call_operand.vmem [shape: f32[128,2], index: 14, kind: input, shape index: {}]
  %s15 = inlined_call_operand.hbm [shape: bf16[288,128], index: 15, kind: input, shape index: {}]
  %s16 = inlined_call_operand.vmem [shape: f32[96,1], index: 16, kind: input, shape index: {}]
  %s17 = inlined_call_operand.vmem [shape: f32[96,64], index: 17, kind: output, shape index: {}]
  %s18 = sld [smem:[#allocation0]]
  $region106: #{tpu_custom_call.1} parent=0
    _
  %s20 = ssub.s32 1, %s18
  %s21 = scalar_select 0, %s20, %s18
  $region1: #{tpu_custom_call.1} parent=0
    #allocation2 [shape = 'u8[73728]{0}', space=vmem, size = 0x12000, scoped, tag = 'input window, operand 3, single buffered']
    #allocation3 [shape = 's32[1]{0}', space=sflag, size = 0x4, scoped, tag = 'scoped memory for tpu_custom_call.1']
    #allocation4 [shape = 'u8[32768]{0}', space=vmem, size = 0x8000, scoped, tag = 'input window, operand 4, single buffered']
    #allocation5 [shape = 's32[1]{0}', space=sflag, size = 0x4, scoped, tag = 'scoped memory for tpu_custom_call.1']
    #allocation6 [shape = 'u8[16384]{0}', space=vmem, size = 0x4000, scoped, tag = 'input window, operand 6, single buffered']
    #allocation7 [shape = 'u8[49152]{0}', space=vmem, size = 0xc000, scoped, tag = 'input window, operand 8, single buffered']
    #allocation8 [shape = 's32[1]{0}', space=sflag, size = 0x4, scoped, tag = 'scoped memory for tpu_custom_call.1']
    #allocation9 [shape = 'u8[65536]{0}', space=vmem, size = 0x10000, scoped, tag = 'input window, operand 11, single buffered']
    #allocation10 [shape = 'u8[32768]{0}', space=vmem, size = 0x8000, scoped, tag = 'input window, operand 13, single buffered']
    #allocation11 [shape = 's32[1]{0}', space=sflag, size = 0x4, scoped, tag = 'scoped memory for tpu_custom_call.1']
    #allocation12 [shape = 'u8[73728]{0}', space=vmem, size = 0x12000, scoped, tag = 'input window, operand 15, single buffered']
    %22 = vsyncpa [#allocation3], 0
    %23 = vsyncpa [#allocation5], 0
    %24 = vsyncpa [#allocation8], 0
    %25 = vsyncpa [#allocation11], 0
    // Predicated region
    $region2: #{tpu_custom_call.1} parent=1 // pred_check
      _
    $region3: #{tpu_custom_call.1} parent=1 // pred_check_branch
      %27 = sbr.rel (0) target = $region5
    $region4: #{tpu_custom_call.1} parent=1 // pred_region
      _
    $region5: #{tpu_custom_call.1} parent=1 // pred_fallthru
      _
    // Predicated region
    $region6: #{tpu_custom_call.1} parent=1 // pred_check
      _
    $region7: #{tpu_custom_call.1} parent=1 // pred_check_branch
      %29 = sbr.rel (0) target = $region9
    $region8: #{tpu_custom_call.1} parent=1 // pred_region
      _
    $region9: #{tpu_custom_call.1} parent=1 // pred_fallthru
      _
    // Predicated region
    $region10: #{tpu_custom_call.1} parent=1 // pred_check
      _
    $region11: #{tpu_custom_call.1} parent=1 // pred_check_branch
      %31 = sbr.rel (0) target = $region13
    $region12: #{tpu_custom_call.1} parent=1 // pred_region
      _
    $region13: #{tpu_custom_call.1} parent=1 // pred_fallthru
      _
    // Predicated region
    $region14: #{tpu_custom_call.1} parent=1 // pred_check
      _
    $region15: #{tpu_custom_call.1} parent=1 // pred_check_branch
      %33 = sbr.rel (0) target = $region17
    $region16: #{tpu_custom_call.1} parent=1 // pred_region
      %s35 = ssub.s32 2304, 2304
      %36 = vsyncadd [#allocation3], %s35
      %s37 = sshll.u32 [#allocation2], 4
      %s38 = int_to_ptr.vmem [resolvable:$true] %s37
      %43 = dma.hbm_to_vmem [thread:$0]  %s3, 2304, %s38, [#allocation3], 64, 64, 4
    $region17: #{tpu_custom_call.1} parent=1 // pred_fallthru
      _
    // Predicated region
    $region18: #{tpu_custom_call.1} parent=1 // pred_check
      _
    $region19: #{tpu_custom_call.1} parent=1 // pred_check_branch
      %45 = sbr.rel (0) target = $region21
    $region20: #{tpu_custom_call.1} parent=1 // pred_region
      %s47 = ssub.s32 1024, 1024
      %48 = vsyncadd [#allocation5], %s47
      %s49 = sshll.u32 [#allocation4], 4
      %s50 = int_to_ptr.vmem [resolvable:$true] %s49
      %55 = dma.hbm_to_vmem [thread:$0]  %s4, 1024, %s50, [#allocation5], 128, 128, 8
    $region21: #{tpu_custom_call.1} parent=1 // pred_fallthru
      _
    // Predicated region
    $region22: #{tpu_custom_call.1} parent=1 // pred_check
      _
    $region23: #{tpu_custom_call.1} parent=1 // pred_check_branch
      %57 = sbr.rel (0) target = $region25
    $region24: #{tpu_custom_call.1} parent=1 // pred_region
      _
    $region25: #{tpu_custom_call.1} parent=1 // pred_fallthru
      _
    // Predicated region
    $region26: #{tpu_custom_call.1} parent=1 // pred_check
      _
    $region27: #{tpu_custom_call.1} parent=1 // pred_check_branch
      %59 = sbr.rel (0) target = $region29
    $region28: #{tpu_custom_call.1} parent=1 // pred_region
      %s61 = ssub.s32 512, 512
      %62 = vsyncadd [#allocation5], %s61
      %s63 = sshll.u32 [#allocation6], 4
      %s64 = int_to_ptr.vmem [resolvable:$true] %s63
      %69 = dma.hbm_to_vmem [thread:$0]  %s6, 512, %s64, [#allocation5], 128, 128, 8
    $region29: #{tpu_custom_call.1} parent=1 // pred_fallthru
      _
    // Predicated region
    $region30: #{tpu_custom_call.1} parent=1 // pred_check
      _
    $region31: #{tpu_custom_call.1} parent=1 // pred_check_branch
      %71 = sbr.rel (0) target = $region33
    $region32: #{tpu_custom_call.1} parent=1 // pred_region
      _
    $region33: #{tpu_custom_call.1} parent=1 // pred_fallthru
      _
    // Predicated region
    $region34: #{tpu_custom_call.1} parent=1 // pred_check
      _
    $region35: #{tpu_custom_call.1} parent=1 // pred_check_branch
      %73 = sbr.rel (0) target = $region37
    $region36: #{tpu_custom_call.1} parent=1 // pred_region
      %s75 = ssub.s32 1536, 1536
      %76 = vsyncadd [#allocation8], %s75
      %s77 = sshll.u32 [#allocation7], 4
      %s78 = int_to_ptr.vmem [resolvable:$true] %s77
      %83 = dma.hbm_to_vmem [thread:$0]  %s8, 1536, %s78, [#allocation8], 64, 64, 4
    $region37: #{tpu_custom_call.1} parent=1 // pred_fallthru
      _
    // Predicated region
    $region38: #{tpu_custom_call.1} parent=1 // pred_check
      _
    $region39: #{tpu_custom_call.1} parent=1 // pred_check_branch
      %85 = sbr.rel (0) target = $region41
    $region40: #{tpu_custom_call.1} parent=1 // pred_region
      _
    $region41: #{tpu_custom_call.1} parent=1 // pred_fallthru
      _
    // Predicated region
    $region42: #{tpu_custom_call.1} parent=1 // pred_check
      _
    $region43: #{tpu_custom_call.1} parent=1 // pred_check_branch
      %87 = sbr.rel (0) target = $region45
    $region44: #{tpu_custom_call.1} parent=1 // pred_region
      _
    $region45: #{tpu_custom_call.1} parent=1 // pred_fallthru
      _
    // Predicated region
    $region46: #{tpu_custom_call.1} parent=1 // pred_check
      _
    $region47: #{tpu_custom_call.1} parent=1 // pred_check_branch
      %89 = sbr.rel (0) target = $region49
    $region48: #{tpu_custom_call.1} parent=1 // pred_region
      %s91 = ssub.s32 2048, 2048
      %92 = vsyncadd [#allocation8], %s91
      %s93 = sshll.u32 [#allocation9], 4
      %s94 = int_to_ptr.vmem [resolvable:$true] %s93
      %99 = dma.hbm_to_vmem [thread:$0]  %s11, 2048, %s94, [#allocation8], 128, 128, 8
    $region49: #{tpu_custom_call.1} parent=1 // pred_fallthru
      _
    // Predicated region
    $region50: #{tpu_custom_call.1} parent=1 // pred_check
      _
    $region51: #{tpu_custom_call.1} parent=1 // pred_check_branch
      %101 = sbr.rel (0) target = $region53
    $region52: #{tpu_custom_call.1} parent=1 // pred_region
      _
    $region53: #{tpu_custom_call.1} parent=1 // pred_fallthru
      _
    // Predicated region
    $region54: #{tpu_custom_call.1} parent=1 // pred_check
      _
    $region55: #{tpu_custom_call.1} parent=1 // pred_check_branch
      %103 = sbr.rel (0) target = $region57
    $region56: #{tpu_custom_call.1} parent=1 // pred_region
      %s105 = ssub.s32 1024, 1024
      %106 = vsyncadd [#allocation11], %s105
      %s107 = sshll.u32 [#allocation10], 4
      %s108 = int_to_ptr.vmem [resolvable:$true] %s107
      %113 = dma.hbm_to_vmem [thread:$0]  %s13, 1024, %s108, [#allocation11], 128, 128, 8
    $region57: #{tpu_custom_call.1} parent=1 // pred_fallthru
      _
    // Predicated region
    $region58: #{tpu_custom_call.1} parent=1 // pred_check
      _
    $region59: #{tpu_custom_call.1} parent=1 // pred_check_branch
      %115 = sbr.rel (0) target = $region61
    $region60: #{tpu_custom_call.1} parent=1 // pred_region
      _
    $region61: #{tpu_custom_call.1} parent=1 // pred_fallthru
      _
    // Predicated region
    $region62: #{tpu_custom_call.1} parent=1 // pred_check
      _
    $region63: #{tpu_custom_call.1} parent=1 // pred_check_branch
      %117 = sbr.rel (0) target = $region65
    $region64: #{tpu_custom_call.1} parent=1 // pred_region
      %s119 = ssub.s32 2304, 2304
      %120 = vsyncadd [#allocation11], %s119
      %s121 = sshll.u32 [#allocation12], 4
      %s122 = int_to_ptr.vmem [resolvable:$true] %s121
      %127 = dma.hbm_to_vmem [thread:$0]  %s15, 2304, %s122, [#allocation11], 64, 64, 4
    $region65: #{tpu_custom_call.1} parent=1 // pred_fallthru
      _
    // Predicated region
    $region66: #{tpu_custom_call.1} parent=1 // pred_check
      _
    $region67: #{tpu_custom_call.1} parent=1 // pred_check_branch
      %129 = sbr.rel (0) target = $region69
    $region68: #{tpu_custom_call.1} parent=1 // pred_region
      _
    $region69: #{tpu_custom_call.1} parent=1 // pred_fallthru
      _
    // Predicated region
    $region70: #{tpu_custom_call.1} parent=1 // pred_check
      _
    $region71: #{tpu_custom_call.1} parent=1 // pred_check_branch
      %131 = sbr.rel (0) target = $region73
    $region72: #{tpu_custom_call.1} parent=1 // pred_region
      %132 = dma.done [#allocation3], 2304
    $region73: #{tpu_custom_call.1} parent=1 // pred_fallthru
      _
    // Predicated region
    $region74: #{tpu_custom_call.1} parent=1 // pred_check
      _
    $region75: #{tpu_custom_call.1} parent=1 // pred_check_branch
      %134 = sbr.rel (0) target = $region77
    $region76: #{tpu_custom_call.1} parent=1 // pred_region
      %135 = dma.done [#allocation5], 1024
    $region77: #{tpu_custom_call.1} parent=1 // pred_fallthru
      _
    // Predicated region
    $region78: #{tpu_custom_call.1} parent=1 // pred_check
      _
    $region79: #{tpu_custom_call.1} parent=1 // pred_check_branch
      %137 = sbr.rel (0) target = $region81
    $region80: #{tpu_custom_call.1} parent=1 // pred_region
      %138 = dma.done [#allocation5], 512
    $region81: #{tpu_custom_call.1} parent=1 // pred_fallthru
      _
    // Predicated region
    $region82: #{tpu_custom_call.1} parent=1 // pred_check
      _
    $region83: #{tpu_custom_call.1} parent=1 // pred_check_branch
      %140 = sbr.rel (0) target = $region85
    $region84: #{tpu_custom_call.1} parent=1 // pred_region
      %141 = dma.done [#allocation8], 1536
    $region85: #{tpu_custom_call.1} parent=1 // pred_fallthru
      _
    // Predicated region
    $region86: #{tpu_custom_call.1} parent=1 // pred_check
      _
    $region87: #{tpu_custom_call.1} parent=1 // pred_check_branch
      %143 = sbr.rel (0) target = $region89
    $region88: #{tpu_custom_call.1} parent=1 // pred_region
      %144 = dma.done [#allocation8], 2048
    $region89: #{tpu_custom_call.1} parent=1 // pred_fallthru
      _
    // Predicated region
    $region90: #{tpu_custom_call.1} parent=1 // pred_check
      _
    $region91: #{tpu_custom_call.1} parent=1 // pred_check_branch
      %146 = sbr.rel (0) target = $region93
    $region92: #{tpu_custom_call.1} parent=1 // pred_region
      %147 = dma.done [#allocation11], 1024
    $region93: #{tpu_custom_call.1} parent=1 // pred_fallthru
      _
    // Predicated region
    $region94: #{tpu_custom_call.1} parent=1 // pred_check
      _
    $region95: #{tpu_custom_call.1} parent=1 // pred_check_branch
      %149 = sbr.rel (0) target = $region97
    $region96: #{tpu_custom_call.1} parent=1 // pred_region
      %150 = dma.done [#allocation11], 2304
    $region97: #{tpu_custom_call.1} parent=1 // pred_fallthru
      _
    %v152 = vld [vmem:[%s0] sm:$0xff]
    %v153 = vld [vmem:[%s0 + $0x8] sm:$0xff]
    %v154 = vld [vmem:[%s0 + $0x10] sm:$0xff]
    %v155 = vld [vmem:[%s0 + $0x18] sm:$0xff]
    %v156 = vld [vmem:[%s0 + $0x20] sm:$0xff]
    %v157 = vld [vmem:[%s0 + $0x28] sm:$0xff]
    %v158 = vld [vmem:[%s0 + $0x30] sm:$0xff]
    %v159 = vld [vmem:[%s0 + $0x38] sm:$0xff]
    %v160 = vld [vmem:[%s1] sm:$0xf]
    %v161 = vld [vmem:[%s1 + $0x4] sm:$0xf]
    %v162 = vld [vmem:[%s1 + $0x8] sm:$0xf]
    %v163 = vld [vmem:[%s1 + $0xc] sm:$0xf]
    %v164 = vld [vmem:[%s1 + $0x10] sm:$0xf]
    %v165 = vld [vmem:[%s1 + $0x14] sm:$0xf]
    %v166 = vld [vmem:[%s1 + $0x18] sm:$0xf]
    %v167 = vld [vmem:[%s1 + $0x1c] sm:$0xf]
    %v168 = vld [vmem:[%s1 + $0x20] sm:$0xf]
    %v169 = vld [vmem:[%s1 + $0x24] sm:$0xf]
    %v170 = vld [vmem:[%s1 + $0x28] sm:$0xf]
    %v171 = vld [vmem:[%s1 + $0x2c] sm:$0xf]
    %v172 = vld [vmem:[%s1 + $0x30] sm:$0xf]
    %v173 = vld [vmem:[%s1 + $0x34] sm:$0xf]
    %v174 = vld [vmem:[%s1 + $0x38] sm:$0xf]
    %v175 = vld [vmem:[%s1 + $0x3c] sm:$0xf]
    %v176 = vpack.c.bf16 %v153, %v152
    %v177 = vpack.c.bf16 %v155, %v154
    %v178 = vpack.c.bf16 %v157, %v156
    %v179 = vpack.c.bf16 %v159, %v158
    %v180 = vld [vmem:[%s2] sm:$0xf]
    %v181 = vld [vmem:[%s2 + $0x4] sm:$0xf]
    %v184 = vunpack.c.l.b16 %v180
    %v185 = vunpack.c.l.b16 %v181
    %v186 = vpack.c.b16 %v185, %v184
    %vm188 = vcmask 130048
    %v190 = vsel %vm188, %v176, 0
    %v193 = vsel %vm188, %v177, 0
    %v196 = vsel %vm188, %v178, 0
    %v199 = vsel %vm188, %v179, 0
    %201 = vmatprep.subr.bf16.mxu0 0
    %202 = vmatpush1.bf16.msra.mxu0 %v186
    %203 = vmatprep.subr.bf16.mxu0 0
    %204 = vmatpush1.bf16.msra.mxu0 0
    %205 = vmatprep.subr.bf16.mxu0 0
    %206 = vmatpush1.bf16.msra.mxu0 0
    %207 = vmatprep.subr.bf16.mxu0 0
    %208 = vmatpush1.bf16.msra.mxu0 0
    %209 = vmatprep.subr.bf16.mxu0 0
    %210 = vmatpush1.bf16.msra.mxu0 0
    %211 = vmatprep.subr.bf16.mxu0 0
    %212 = vmatpush1.bf16.msra.mxu0 0
    %213 = vmatprep.subr.bf16.mxu0 0
    %214 = vmatpush1.bf16.msra.mxu0 0
    %215 = vmatprep.subr.bf16.mxu0 0
    %216 = vmatpush1.bf16.msra.mxu0 0
    %217 = vmatprep.subr.bf16.mxu0 0
    %218 = vmatpush1.bf16.msra.mxu0 0
    %219 = vmatprep.subr.bf16.mxu0 0
    %220 = vmatpush1.bf16.msra.mxu0 0
    %221 = vmatprep.subr.bf16.mxu0 0
    %222 = vmatpush1.bf16.msra.mxu0 0
    %223 = vmatprep.subr.bf16.mxu0 0
    %224 = vmatpush1.bf16.msra.mxu0 0
    %225 = vmatprep.subr.bf16.mxu0 0
    %226 = vmatpush1.bf16.msra.mxu0 0
    %227 = vmatprep.subr.bf16.mxu0 0
    %228 = vmatpush1.bf16.msra.mxu0 0
    %229 = vmatprep.subr.bf16.mxu0 0
    %230 = vmatpush1.bf16.msra.mxu0 0
    %231 = vmatprep.subr.bf16.mxu0 0
    %232 = vmatpush1.bf16.msra.mxu0 0
    %233 = vmatprep.mubr.bf16.mxu0 0
    %234 = vmatmul.mubr.bf16.gmra.mrb[0].mxu0 %v190
    %v235 = vpop.f32.mrb[0].mxu0
    %v236 = vadd.f32 0.0, %v235
    %v237 = vpop.f32.mrb[0].mxu0
    %v238 = vpop.f32.mrb[0].mxu0
    %v239 = vadd.f32 0.0, %v238
    %v240 = vpop.f32.mrb[0].mxu0
    %241 = vmatprep.mubr.bf16.mxu0 0
    %242 = vmatmul.mubr.bf16.gmra.mrb[0].mxu0 %v193
    %v243 = vpop.f32.mrb[0].mxu0
    %v244 = vadd.f32 0.0, %v243
    %v245 = vpop.f32.mrb[0].mxu0
    %v246 = vpop.f32.mrb[0].mxu0
    %v247 = vadd.f32 0.0, %v246
    %v248 = vpop.f32.mrb[0].mxu0
    %249 = vmatprep.mubr.bf16.mxu0 0
    %250 = vmatmul.mubr.bf16.gmra.mrb[0].mxu0 %v196
    %v251 = vpop.f32.mrb[0].mxu0
    %v252 = vadd.f32 0.0, %v251
    %v253 = vpop.f32.mrb[0].mxu0
    %v254 = vpop.f32.mrb[0].mxu0
    %v255 = vadd.f32 0.0, %v254
    %v256 = vpop.f32.mrb[0].mxu0
    %257 = vmatprep.mubr.bf16.mxu0 0
    %258 = vmatmul.mubr.bf16.gmra.mrb[0].mxu0 %v199
    %v259 = vpop.f32.mrb[0].mxu0
    %v260 = vadd.f32 0.0, %v259
    %v261 = vpop.f32.mrb[0].mxu0
    %v262 = vpop.f32.mrb[0].mxu0
    %v263 = vadd.f32 0.0, %v262
    %v264 = vpop.f32.mrb[0].mxu0
    %265 = vdwg.mxu0
    %v266 = vpack.c.bf16 %v239, %v236
    %v267 = vpack.c.bf16 %v247, %v244
    %v268 = vpack.c.bf16 %v255, %v252
    %v269 = vpack.c.bf16 %v263, %v260
    %v286 = vunpack.c.l.b16 %v160
    %v287 = vunpack.c.l.b16 %v161
    %v288 = vunpack.c.l.b16 %v162
    %v289 = vunpack.c.l.b16 %v163
    %v290 = vunpack.c.l.b16 %v164
    %v291 = vunpack.c.l.b16 %v165
    %v292 = vunpack.c.l.b16 %v166
    %v293 = vunpack.c.l.b16 %v167
    %v294 = vunpack.c.l.b16 %v168
    %v295 = vunpack.c.l.b16 %v169
    %v296 = vunpack.c.l.b16 %v170
    %v297 = vunpack.c.l.b16 %v171
    %v298 = vunpack.c.l.b16 %v172
    %v299 = vunpack.c.l.b16 %v173
    %v300 = vunpack.c.l.b16 %v174
    %v301 = vunpack.c.l.b16 %v175
    %v302 = vpack.c.b16 %v287, %v286
    %v303 = vpack.c.b16 %v289, %v288
    %v304 = vpack.c.b16 %v291, %v290
    %v305 = vpack.c.b16 %v293, %v292
    %v306 = vpack.c.b16 %v295, %v294
    %v307 = vpack.c.b16 %v297, %v296
    %v308 = vpack.c.b16 %v299, %v298
    %v309 = vpack.c.b16 %v301, %v300
    %vm310 = vcmask 523264
    %v312 = vsel %vm310, %v302, 0
    %v315 = vsel %vm310, %v303, 0
    %v318 = vsel %vm310, %v304, 0
    %v321 = vsel %vm310, %v305, 0
    %v324 = vsel %vm310, %v306, 0
    %v327 = vsel %vm310, %v307, 0
    %v330 = vsel %vm310, %v308, 0
    %v333 = vsel %vm310, %v309, 0
    %335 = vmatprep.subr.bf16.mxu0 0
    %336 = vmatpush1.bf16.msra.mxu0 %v266
    %337 = vmatprep.subr.bf16.mxu0 0
    %338 = vmatpush1.bf16.msra.mxu0 %v267
    %339 = vmatprep.subr.bf16.mxu0 0
    %340 = vmatpush1.bf16.msra.mxu0 %v268
    %341 = vmatprep.subr.bf16.mxu0 0
    %342 = vmatpush1.bf16.msra.mxu0 %v269
    %343 = vmatprep.subr.bf16.mxu0 0
    %344 = vmatpush1.bf16.msra.mxu0 0
    %345 = vmatprep.subr.bf16.mxu0 0
    %346 = vmatpush1.bf16.msra.mxu0 0
    %347 = vmatprep.subr.bf16.mxu0 0
    %348 = vmatpush1.bf16.msra.mxu0 0
    %349 = vmatprep.subr.bf16.mxu0 0
    %350 = vmatpush1.bf16.msra.mxu0 0
    %351 = vmatprep.subr.bf16.mxu0 0
    %352 = vmatpush1.bf16.msra.mxu0 0
    %353 = vmatprep.subr.bf16.mxu0 0
    %354 = vmatpush1.bf16.msra.mxu0 0
    %355 = vmatprep.subr.bf16.mxu0 0
    %356 = vmatpush1.bf16.msra.mxu0 0
    %357 = vmatprep.subr.bf16.mxu0 0
    %358 = vmatpush1.bf16.msra.mxu0 0
    %359 = vmatprep.subr.bf16.mxu0 0
    %360 = vmatpush1.bf16.msra.mxu0 0
    %361 = vmatprep.subr.bf16.mxu0 0
    %362 = vmatpush1.bf16.msra.mxu0 0
    %363 = vmatprep.subr.bf16.mxu0 0
    %364 = vmatpush1.bf16.msra.mxu0 0
    %365 = vmatprep.subr.bf16.mxu0 0
    %366 = vmatpush1.bf16.msra.mxu0 0
    %367 = vmatprep.mubr.bf16.mxu0 0
    %368 = vmatmul.mubr.bf16.gmra.mrb[0].mxu0 %v312
    %v369 = vpop.f32.mrb[0].mxu0
    %v370 = vadd.f32 0.0, %v369
    %v371 = vpop.f32.mrb[0].mxu0
    %v372 = vpop.f32.mrb[0].mxu0
    %v373 = vadd.f32 0.0, %v372
    %v374 = vpop.f32.mrb[0].mxu0
    %375 = vmatprep.mubr.bf16.mxu0 0
    %376 = vmatmul.mubr.bf16.gmra.mrb[0].mxu0 %v315
    %v377 = vpop.f32.mrb[0].mxu0
    %v378 = vadd.f32 0.0, %v377
    %v379 = vpop.f32.mrb[0].mxu0
    %v380 = vpop.f32.mrb[0].mxu0
    %v381 = vadd.f32 0.0, %v380
    %v382 = vpop.f32.mrb[0].mxu0
    %383 = vmatprep.mubr.bf16.mxu0 0
    %384 = vmatmul.mubr.bf16.gmra.mrb[0].mxu0 %v318
    %v385 = vpop.f32.mrb[0].mxu0
    %v386 = vadd.f32 0.0, %v385
    %v387 = vpop.f32.mrb[0].mxu0
    %v388 = vpop.f32.mrb[0].mxu0
    %v389 = vadd.f32 0.0, %v388
    %v390 = vpop.f32.mrb[0].mxu0
    %391 = vmatprep.mubr.bf16.mxu0 0
    %392 = vmatmul.mubr.bf16.gmra.mrb[0].mxu0 %v321
    %v393 = vpop.f32.mrb[0].mxu0
    %v394 = vadd.f32 0.0, %v393
    %v395 = vpop.f32.mrb[0].mxu0
    %v396 = vpop.f32.mrb[0].mxu0
    %v397 = vadd.f32 0.0, %v396
    %v398 = vpop.f32.mrb[0].mxu0
    %399 = vmatprep.mubr.bf16.mxu0 0
    %400 = vmatmul.mubr.bf16.gmra.mrb[0].mxu0 %v324
    %v401 = vpop.f32.mrb[0].mxu0
    %v402 = vadd.f32 0.0, %v401
    %v403 = vpop.f32.mrb[0].mxu0
    %v404 = vpop.f32.mrb[0].mxu0
    %v405 = vadd.f32 0.0, %v404
    %v406 = vpop.f32.mrb[0].mxu0
    %407 = vmatprep.mubr.bf16.mxu0 0
    %408 = vmatmul.mubr.bf16.gmra.mrb[0].mxu0 %v327
    %v409 = vpop.f32.mrb[0].mxu0
    %v410 = vadd.f32 0.0, %v409
    %v411 = vpop.f32.mrb[0].mxu0
    %v412 = vpop.f32.mrb[0].mxu0
    %v413 = vadd.f32 0.0, %v412
    %v414 = vpop.f32.mrb[0].mxu0
    %415 = vmatprep.mubr.bf16.mxu0 0
    %416 = vmatmul.mubr.bf16.gmra.mrb[0].mxu0 %v330
    %v417 = vpop.f32.mrb[0].mxu0
    %v418 = vadd.f32 0.0, %v417
    %v419 = vpop.f32.mrb[0].mxu0
    %v420 = vpop.f32.mrb[0].mxu0
    %v421 = vadd.f32 0.0, %v420
    %v422 = vpop.f32.mrb[0].mxu0
    %423 = vmatprep.mubr.bf16.mxu0 0
    %424 = vmatmul.mubr.bf16.gmra.mrb[0].mxu0 %v333
    %v425 = vpop.f32.mrb[0].mxu0
    %v426 = vadd.f32 0.0, %v425
    %v427 = vpop.f32.mrb[0].mxu0
    %v428 = vpop.f32.mrb[0].mxu0
    %v429 = vadd.f32 0.0, %v428
    %v430 = vpop.f32.mrb[0].mxu0
    %431 = vdwg.mxu0
    %v432 = vld [vmem:[#allocation2] sm:$0xf]
    %v433 = vld [vmem:[#allocation2 + $0x4] sm:$0xf]
    %v434 = vld [vmem:[#allocation2 + $0x8] sm:$0xf]
    %v435 = vld [vmem:[#allocation2 + $0xc] sm:$0xf]
    %v436 = vld [vmem:[#allocation2 + $0x10] sm:$0xf]
    %v437 = vld [vmem:[#allocation2 + $0x14] sm:$0xf]
    %v438 = vld [vmem:[#allocation2 + $0x18] sm:$0xf]
    %v439 = vld [vmem:[#allocation2 + $0x1c] sm:$0xf]
    %v440 = vld [vmem:[#allocation2 + $0x20] sm:$0xf]
    %v441 = vld [vmem:[#allocation2 + $0x24] sm:$0xf]
    %v442 = vld [vmem:[#allocation2 + $0x28] sm:$0xf]
    %v443 = vld [vmem:[#allocation2 + $0x2c] sm:$0xf]
    %v444 = vld [vmem:[#allocation2 + $0x30] sm:$0xf]
    %v445 = vld [vmem:[#allocation2 + $0x34] sm:$0xf]
    %v446 = vld [vmem:[#allocation2 + $0x38] sm:$0xf]
    %v447 = vld [vmem:[#allocation2 + $0x3c] sm:$0xf]
    %v448 = vld [vmem:[#allocation2 + $0x40] sm:$0xf]
    %v449 = vld [vmem:[#allocation2 + $0x44] sm:$0xf]
    %v450 = vld [vmem:[#allocation2 + $0x48] sm:$0xf]
    %v451 = vld [vmem:[#allocation2 + $0x4c] sm:$0xf]
    %v452 = vld [vmem:[#allocation2 + $0x50] sm:$0xf]
    %v453 = vld [vmem:[#allocation2 + $0x54] sm:$0xf]
    %v454 = vld [vmem:[#allocation2 + $0x58] sm:$0xf]
    %v455 = vld [vmem:[#allocation2 + $0x5c] sm:$0xf]
    %v456 = vld [vmem:[#allocation2 + $0x60] sm:$0xf]
    %v457 = vld [vmem:[#allocation2 + $0x64] sm:$0xf]
    %v458 = vld [vmem:[#allocation2 + $0x68] sm:$0xf]
    %v459 = vld [vmem:[#allocation2 + $0x6c] sm:$0xf]
    %v460 = vld [vmem:[#allocation2 + $0x70] sm:$0xf]
    %v461 = vld [vmem:[#allocation2 + $0x74] sm:$0xf]
    %v462 = vld [vmem:[#allocation2 + $0x78] sm:$0xf]
    %v463 = vld [vmem:[#allocation2 + $0x7c] sm:$0xf]
    %v464 = vld [vmem:[#allocation2 + $0x80] sm:$0xf]
    %v465 = vld [vmem:[#allocation2 + $0x84] sm:$0xf]
    %v466 = vld [vmem:[#allocation2 + $0x88] sm:$0xf]
    %v467 = vld [vmem:[#allocation2 + $0x8c] sm:$0xf]
    %v468 = vpack.c.bf16 %v373, %v370
    %v469 = vpack.c.bf16 %v381, %v378
    %v470 = vpack.c.bf16 %v389, %v386
    %v471 = vpack.c.bf16 %v397, %v394
    %v472 = vpack.c.bf16 %v405, %v402
    %v473 = vpack.c.bf16 %v413, %v410
    %v474 = vpack.c.bf16 %v421, %v418
    %v475 = vpack.c.bf16 %v429, %v426
    %v512 = vunpack.c.l.b16 %v432
    %v513 = vunpack.c.l.b16 %v433
    %v514 = vunpack.c.l.b16 %v434
    %v515 = vunpack.c.l.b16 %v435
    %v516 = vunpack.c.l.b16 %v436
    %v517 = vunpack.c.l.b16 %v437
    %v518 = vunpack.c.l.b16 %v438
    %v519 = vunpack.c.l.b16 %v439
    %v520 = vunpack.c.l.b16 %v440
    %v521 = vunpack.c.l.b16 %v441
    %v522 = vunpack.c.l.b16 %v442
    %v523 = vunpack.c.l.b16 %v443
    %v524 = vunpack.c.l.b16 %v444
    %v525 = vunpack.c.l.b16 %v445
    %v526 = vunpack.c.l.b16 %v446
    %v527 = vunpack.c.l.b16 %v447
    %v528 = vunpack.c.l.b16 %v448
    %v529 = vunpack.c.l.b16 %v449
    %v530 = vunpack.c.l.b16 %v450
    %v531 = vunpack.c.l.b16 %v451
    %v532 = vunpack.c.l.b16 %v452
    %v533 = vunpack.c.l.b16 %v453
    %v534 = vunpack.c.l.b16 %v454
    %v535 = vunpack.c.l.b16 %v455
    %v536 = vunpack.c.l.b16 %v456
    %v537 = vunpack.c.l.b16 %v457
    %v538 = vunpack.c.l.b16 %v458
    %v539 = vunpack.c.l.b16 %v459
    %v540 = vunpack.c.l.b16 %v460
    %v541 = vunpack.c.l.b16 %v461
    %v542 = vunpack.c.l.b16 %v462
    %v543 = vunpack.c.l.b16 %v463
    %v544 = vunpack.c.l.b16 %v464
    %v545 = vunpack.c.l.b16 %v465
    %v546 = vunpack.c.l.b16 %v466
    %v547 = vunpack.c.l.b16 %v467
    %v548 = vpack.c.b16 %v513, %v512
    %v549 = vpack.c.b16 %v515, %v514
    %v550 = vpack.c.b16 %v517, %v516
    %v551 = vpack.c.b16 %v519, %v518
    %v552 = vpack.c.b16 %v521, %v520
    %v553 = vpack.c.b16 %v523, %v522
    %v554 = vpack.c.b16 %v525, %v524
    %v555 = vpack.c.b16 %v527, %v526
    %v556 = vpack.c.b16 %v529, %v528
    %v557 = vpack.c.b16 %v531, %v530
    %v558 = vpack.c.b16 %v533, %v532
    %v559 = vpack.c.b16 %v535, %v534
    %v560 = vpack.c.b16 %v537, %v536
    %v561 = vpack.c.b16 %v539, %v538
    %v562 = vpack.c.b16 %v541, %v540
    %v563 = vpack.c.b16 %v543, %v542
    %v564 = vpack.c.b16 %v545, %v544
    %v565 = vpack.c.b16 %v547, %v546
    %584 = vmatprep.subr.bf16.mxu0 0
    %585 = vmatpush1.bf16.msra.mxu0 %v468
    %586 = vmatprep.subr.bf16.mxu0 0
    %587 = vmatpush1.bf16.msra.mxu0 %v469
    %588 = vmatprep.subr.bf16.mxu0 0
    %589 = vmatpush1.bf16.msra.mxu0 %v470
    %590 = vmatprep.subr.bf16.mxu0 0
    %591 = vmatpush1.bf16.msra.mxu0 %v471
    %592 = vmatprep.subr.bf16.mxu0 0
    %593 = vmatpush1.bf16.msra.mxu0 %v472
    %594 = vmatprep.subr.bf16.mxu0 0
    %595 = vmatpush1.bf16.msra.mxu0 %v473
    %596 = vmatprep.subr.bf16.mxu0 0
    %597 = vmatpush1.bf16.msra.mxu0 %v474
    %598 = vmatprep.subr.bf16.mxu0 0
    %599 = vmatpush1.bf16.msra.mxu0 %v475
    %600 = vmatprep.subr.bf16.mxu0 0
    %601 = vmatpush1.bf16.msra.mxu0 0
    %602 = vmatprep.subr.bf16.mxu0 0
    %603 = vmatpush1.bf16.msra.mxu0 0
    %604 = vmatprep.subr.bf16.mxu0 0
    %605 = vmatpush1.bf16.msra.mxu0 0
    %606 = vmatprep.subr.bf16.mxu0 0
    %607 = vmatpush1.bf16.msra.mxu0 0
    %608 = vmatprep.subr.bf16.mxu0 0
    %609 = vmatpush1.bf16.msra.mxu0 0
    %610 = vmatprep.subr.bf16.mxu0 0
    %611 = vmatpush1.bf16.msra.mxu0 0
    %612 = vmatprep.subr.bf16.mxu0 0
    %613 = vmatpush1.bf16.msra.mxu0 0
    %614 = vmatprep.subr.bf16.mxu0 0
    %615 = vmatpush1.bf16.msra.mxu0 0
    %616 = vmatprep.mubr.bf16.mxu0 0
    %617 = vmatmul.mubr.bf16.gmra.mrb[0].mxu0 %v548
    %v618 = vpop.f32.mrb[0].mxu0
    %v619 = vadd.f32 0.0, %v618
    %v620 = vpop.f32.mrb[0].mxu0
    %v621 = vpop.f32.mrb[0].mxu0
    %v622 = vadd.f32 0.0, %v621
    %v623 = vpop.f32.mrb[0].mxu0
    %624 = vmatprep.mubr.bf16.mxu0 0
    %625 = vmatmul.mubr.bf16.gmra.mrb[0].mxu0 %v549
    %v626 = vpop.f32.mrb[0].mxu0
    %v627 = vadd.f32 0.0, %v626
    %v628 = vpop.f32.mrb[0].mxu0
    %v629 = vpop.f32.mrb[0].mxu0
    %v630 = vadd.f32 0.0, %v629
    %v631 = vpop.f32.mrb[0].mxu0
    %632 = vmatprep.mubr.bf16.mxu0 0
    %633 = vmatmul.mubr.bf16.gmra.mrb[0].mxu0 %v550
    %v634 = vpop.f32.mrb[0].mxu0
    %v635 = vadd.f32 0.0, %v634
    %v636 = vpop.f32.mrb[0].mxu0
    %v637 = vpop.f32.mrb[0].mxu0
    %v638 = vadd.f32 0.0, %v637
    %v639 = vpop.f32.mrb[0].mxu0
    %640 = vmatprep.mubr.bf16.mxu0 0
    %641 = vmatmul.mubr.bf16.gmra.mrb[0].mxu0 %v551
    %v642 = vpop.f32.mrb[0].mxu0
    %v643 = vadd.f32 0.0, %v642
    %v644 = vpop.f32.mrb[0].mxu0
    %v645 = vpop.f32.mrb[0].mxu0
    %v646 = vadd.f32 0.0, %v645
    %v647 = vpop.f32.mrb[0].mxu0
    %648 = vmatprep.mubr.bf16.mxu0 0
    %649 = vmatmul.mubr.bf16.gmra.mrb[0].mxu0 %v552
    %v650 = vpop.f32.mrb[0].mxu0
    %v651 = vadd.f32 0.0, %v650
    %v652 = vpop.f32.mrb[0].mxu0
    %v653 = vpop.f32.mrb[0].mxu0
    %v654 = vadd.f32 0.0, %v653
    %v655 = vpop.f32.mrb[0].mxu0
    %656 = vmatprep.mubr.bf16.mxu0 0
    %657 = vmatmul.mubr.bf16.gmra.mrb[0].mxu0 %v553
    %v658 = vpop.f32.mrb[0].mxu0
    %v659 = vadd.f32 0.0, %v658
    %v660 = vpop.f32.mrb[0].mxu0
    %v661 = vpop.f32.mrb[0].mxu0
    %v662 = vadd.f32 0.0, %v661
    %v663 = vpop.f32.mrb[0].mxu0
    %664 = vmatprep.mubr.bf16.mxu0 0
    %665 = vmatmul.mubr.bf16.gmra.mrb[0].mxu0 %v554
    %v666 = vpop.f32.mrb[0].mxu0
    %v667 = vadd.f32 0.0, %v666
    %v668 = vpop.f32.mrb[0].mxu0
    %v669 = vpop.f32.mrb[0].mxu0
    %v670 = vadd.f32 0.0, %v669
    %v671 = vpop.f32.mrb[0].mxu0
    %672 = vmatprep.mubr.bf16.mxu0 0
    %673 = vmatmul.mubr.bf16.gmra.mrb[0].mxu0 %v555
    %v674 = vpop.f32.mrb[0].mxu0
    %v675 = vadd.f32 0.0, %v674
    %v676 = vpop.f32.mrb[0].mxu0
    %v677 = vpop.f32.mrb[0].mxu0
    %v678 = vadd.f32 0.0, %v677
    %v679 = vpop.f32.mrb[0].mxu0
    %680 = vmatprep.mubr.bf16.mxu0 0
    %681 = vmatmul.mubr.bf16.gmra.mrb[0].mxu0 %v556
    %v682 = vpop.f32.mrb[0].mxu0
    %v683 = vadd.f32 0.0, %v682
    %v684 = vpop.f32.mrb[0].mxu0
    %v685 = vpop.f32.mrb[0].mxu0
    %v686 = vadd.f32 0.0, %v685
    %v687 = vpop.f32.mrb[0].mxu0
    %688 = vmatprep.mubr.bf16.mxu0 0
    %689 = vmatmul.mubr.bf16.gmra.mrb[0].mxu0 %v557
    %v690 = vpop.f32.mrb[0].mxu0
    %v691 = vadd.f32 0.0, %v690
    %v692 = vpop.f32.mrb[0].mxu0
    %v693 = vpop.f32.mrb[0].mxu0
    %v694 = vadd.f32 0.0, %v693
    %v695 = vpop.f32.mrb[0].mxu0
    %696 = vmatprep.mubr.bf16.mxu0 0
    %697 = vmatmul.mubr.bf16.gmra.mrb[0].mxu0 %v558
    %v698 = vpop.f32.mrb[0].mxu0
    %v699 = vadd.f32 0.0, %v698
    %v700 = vpop.f32.mrb[0].mxu0
    %v701 = vpop.f32.mrb[0].mxu0
    %v702 = vadd.f32 0.0, %v701
    %v703 = vpop.f32.mrb[0].mxu0
    %704 = vmatprep.mubr.bf16.mxu0 0
    %705 = vmatmul.mubr.bf16.gmra.mrb[0].mxu0 %v559
    %v706 = vpop.f32.mrb[0].mxu0
    %v707 = vadd.f32 0.0, %v706
    %v708 = vpop.f32.mrb[0].mxu0
    %v709 = vpop.f32.mrb[0].mxu0
    %v710 = vadd.f32 0.0, %v709
    %v711 = vpop.f32.mrb[0].mxu0
    %712 = vmatprep.mubr.bf16.mxu0 0
    %713 = vmatmul.mubr.bf16.gmra.mrb[0].mxu0 %v560
    %v714 = vpop.f32.mrb[0].mxu0
    %v715 = vadd.f32 0.0, %v714
    %v716 = vpop.f32.mrb[0].mxu0
    %v717 = vpop.f32.mrb[0].mxu0
    %v718 = vadd.f32 0.0, %v717
    %v719 = vpop.f32.mrb[0].mxu0
    %720 = vmatprep.mubr.bf16.mxu0 0
    %721 = vmatmul.mubr.bf16.gmra.mrb[0].mxu0 %v561
    %v722 = vpop.f32.mrb[0].mxu0
    %v723 = vadd.f32 0.0, %v722
    %v724 = vpop.f32.mrb[0].mxu0
    %v725 = vpop.f32.mrb[0].mxu0
    %v726 = vadd.f32 0.0, %v725
    %v727 = vpop.f32.mrb[0].mxu0
    %728 = vmatprep.mubr.bf16.mxu0 0
    %729 = vmatmul.mubr.bf16.gmra.mrb[0].mxu0 %v562
    %v730 = vpop.f32.mrb[0].mxu0
    %v731 = vadd.f32 0.0, %v730
    %v732 = vpop.f32.mrb[0].mxu0
    %v733 = vpop.f32.mrb[0].mxu0
    %v734 = vadd.f32 0.0, %v733
    %v735 = vpop.f32.mrb[0].mxu0
    %736 = vmatprep.mubr.bf16.mxu0 0
    %737 = vmatmul.mubr.bf16.gmra.mrb[0].mxu0 %v563
    %v738 = vpop.f32.mrb[0].mxu0
    %v739 = vadd.f32 0.0, %v738
    %v740 = vpop.f32.mrb[0].mxu0
    %v741 = vpop.f32.mrb[0].mxu0
    %v742 = vadd.f32 0.0, %v741
    %v743 = vpop.f32.mrb[0].mxu0
    %744 = vmatprep.mubr.bf16.mxu0 0
    %745 = vmatmul.mubr.bf16.gmra.mrb[0].mxu0 %v564
    %v746 = vpop.f32.mrb[0].mxu0
    %v747 = vadd.f32 0.0, %v746
    %v748 = vpop.f32.mrb[0].mxu0
    %v749 = vpop.f32.mrb[0].mxu0
    %v750 = vadd.f32 0.0, %v749
    %v751 = vpop.f32.mrb[0].mxu0
    %752 = vmatprep.mubr.bf16.mxu0 0
    %753 = vmatmul.mubr.bf16.gmra.mrb[0].mxu0 %v565
    %v754 = vpop.f32.mrb[0].mxu0
    %v755 = vadd.f32 0.0, %v754
    %v756 = vpop.f32.mrb[0].mxu0
    %v757 = vpop.f32.mrb[0].mxu0
    %v758 = vadd.f32 0.0, %v757
    %v759 = vpop.f32.mrb[0].mxu0
    %760 = vdwg.mxu0
    %v761 = vld [vmem:[#allocation4] sm:$0xff]
    %v762 = vld [vmem:[#allocation4 + $0x8] sm:$0xff]
    %v763 = vld [vmem:[#allocation4 + $0x10] sm:$0xff]
    %v764 = vld [vmem:[#allocation4 + $0x18] sm:$0xff]
    %vm765 = vcmask 261120
    %v767 = vsel %vm765, %v619, 0
    %v770 = vsel %vm765, %v622, 0
    %v773 = vsel %vm765, %v627, 0
    %v776 = vsel %vm765, %v630, 0
    %v779 = vsel %vm765, %v635, 0
    %v782 = vsel %vm765, %v638, 0
    %v785 = vsel %vm765, %v643, 0
    %v788 = vsel %vm765, %v646, 0
    %v791 = vsel %vm765, %v651, 0
    %v794 = vsel %vm765, %v654, 0
    %v797 = vsel %vm765, %v659, 0
    %v800 = vsel %vm765, %v662, 0
    %802 = vmatprep.subr.mxu0 0.0
    %803 = vmatpush1.msra.mxu0 %v761
    %804 = vmatprep.subr.mxu0 0.0
    %805 = vmatpush1.msra.mxu0 %v762
    %806 = vmatprep.subr.mxu0 0.0
    %807 = vmatpush1.msra.mxu0 %v763
    %808 = vmatprep.subr.mxu0 0.0
    %809 = vmatpush1.msra.mxu0 %v764
    %810 = vmatprep.subr.mxu0 0.0
    %811 = vmatpush1.msra.mxu0 0.0
    %812 = vmatprep.subr.mxu0 0.0
    %813 = vmatpush1.msra.mxu0 0.0
    %814 = vmatprep.subr.mxu0 0.0
    %815 = vmatpush1.msra.mxu0 0.0
    %816 = vmatprep.subr.mxu0 0.0
    %817 = vmatpush1.msra.mxu0 0.0
    %818 = vmatprep.subr.mxu0 0.0
    %819 = vmatpush1.msra.mxu0 0.0
    %820 = vmatprep.subr.mxu0 0.0
    %821 = vmatpush1.msra.mxu0 0.0
    %822 = vmatprep.subr.mxu0 0.0
    %823 = vmatpush1.msra.mxu0 0.0
    %824 = vmatprep.subr.mxu0 0.0
    %825 = vmatpush1.msra.mxu0 0.0
    %826 = vmatprep.subr.mxu0 0.0
    %827 = vmatpush1.msra.mxu0 0.0
    %828 = vmatprep.subr.mxu0 0.0
    %829 = vmatpush1.msra.mxu0 0.0
    %830 = vmatprep.subr.mxu0 0.0
    %831 = vmatpush1.msra.mxu0 0.0
    %832 = vmatprep.subr.mxu0 0.0
    %833 = vmatpush1.msra.mxu0 0.0
    %834 = vmatprep.subr.mxu0 0.0
    %835 = vmatpush1.msra.mxu0 0.0
    %836 = vmatprep.subr.mxu0 0.0
    %837 = vmatpush1.msra.mxu0 0.0
    %838 = vmatprep.subr.mxu0 0.0
    %839 = vmatpush1.msra.mxu0 0.0
    %840 = vmatprep.subr.mxu0 0.0
    %841 = vmatpush1.msra.mxu0 0.0
    %842 = vmatprep.subr.mxu0 0.0
    %843 = vmatpush1.msra.mxu0 0.0
    %844 = vmatprep.subr.mxu0 0.0
    %845 = vmatpush1.msra.mxu0 0.0
    %846 = vmatprep.subr.mxu0 0.0
    %847 = vmatpush1.msra.mxu0 0.0
    %848 = vmatprep.subr.mxu0 0.0
    %849 = vmatpush1.msra.mxu0 0.0
    %850 = vmatprep.subr.mxu0 0.0
    %851 = vmatpush1.msra.mxu0 0.0
    %852 = vmatprep.subr.mxu0 0.0
    %853 = vmatpush1.msra.mxu0 0.0
    %854 = vmatprep.subr.mxu0 0.0
    %855 = vmatpush1.msra.mxu0 0.0
    %856 = vmatprep.subr.mxu0 0.0
    %857 = vmatpush1.msra.mxu0 0.0
    %858 = vmatprep.subr.mxu0 0.0
    %859 = vmatpush1.msra.mxu0 0.0
    %860 = vmatprep.subr.mxu0 0.0
    %861 = vmatpush1.msra.mxu0 0.0
    %862 = vmatprep.subr.mxu0 0.0
    %863 = vmatpush1.msra.mxu0 0.0
    %864 = vmatprep.subr.mxu0 0.0
    %865 = vmatpush1.msra.mxu0 0.0
    %866 = vmatprep.mubr.f32.mxu0 0.0
    %867 = vmatmul.mubr.f32.gmra.mrb[0].mxu0 %v767
    %v868 = vpop.f32.mrb[0].mxu0
    %v869 = vadd.f32 0.0, %v868
    %v870 = vpop.f32.mrb[0].mxu0
    %871 = vmatprep.mubr.f32.mxu0 0.0
    %872 = vmatmul.mubr.f32.gmra.mrb[0].mxu0 %v770
    %v873 = vpop.f32.mrb[0].mxu0
    %v874 = vadd.f32 0.0, %v873
    %v875 = vpop.f32.mrb[0].mxu0
    %876 = vmatprep.mubr.f32.mxu0 0.0
    %877 = vmatmul.mubr.f32.gmra.mrb[0].mxu0 %v773
    %v878 = vpop.f32.mrb[0].mxu0
    %v879 = vadd.f32 0.0, %v878
    %v880 = vpop.f32.mrb[0].mxu0
    %881 = vmatprep.mubr.f32.mxu0 0.0
    %882 = vmatmul.mubr.f32.gmra.mrb[0].mxu0 %v776
    %v883 = vpop.f32.mrb[0].mxu0
    %v884 = vadd.f32 0.0, %v883
    %v885 = vpop.f32.mrb[0].mxu0
    %886 = vmatprep.mubr.f32.mxu0 0.0
    %887 = vmatmul.mubr.f32.gmra.mrb[0].mxu0 %v779
    %v888 = vpop.f32.mrb[0].mxu0
    %v889 = vadd.f32 0.0, %v888
    %v890 = vpop.f32.mrb[0].mxu0
    %891 = vmatprep.mubr.f32.mxu0 0.0
    %892 = vmatmul.mubr.f32.gmra.mrb[0].mxu0 %v782
    %v893 = vpop.f32.mrb[0].mxu0
    %v894 = vadd.f32 0.0, %v893
    %v895 = vpop.f32.mrb[0].mxu0
    %896 = vmatprep.mubr.f32.mxu0 0.0
    %897 = vmatmul.mubr.f32.gmra.mrb[0].mxu0 %v785
    %v898 = vpop.f32.mrb[0].mxu0
    %v899 = vadd.f32 0.0, %v898
    %v900 = vpop.f32.mrb[0].mxu0
    %901 = vmatprep.mubr.f32.mxu0 0.0
    %902 = vmatmul.mubr.f32.gmra.mrb[0].mxu0 %v788
    %v903 = vpop.f32.mrb[0].mxu0
    %v904 = vadd.f32 0.0, %v903
    %v905 = vpop.f32.mrb[0].mxu0
    %906 = vmatprep.mubr.f32.mxu0 0.0
    %907 = vmatmul.mubr.f32.gmra.mrb[0].mxu0 %v791
    %v908 = vpop.f32.mrb[0].mxu0
    %v909 = vadd.f32 0.0, %v908
    %v910 = vpop.f32.mrb[0].mxu0
    %911 = vmatprep.mubr.f32.mxu0 0.0
    %912 = vmatmul.mubr.f32.gmra.mrb[0].mxu0 %v794
    %v913 = vpop.f32.mrb[0].mxu0
    %v914 = vadd.f32 0.0, %v913
    %v915 = vpop.f32.mrb[0].mxu0
    %916 = vmatprep.mubr.f32.mxu0 0.0
    %917 = vmatmul.mubr.f32.gmra.mrb[0].mxu0 %v797
    %v918 = vpop.f32.mrb[0].mxu0
    %v919 = vadd.f32 0.0, %v918
    %v920 = vpop.f32.mrb[0].mxu0
    %921 = vmatprep.mubr.f32.mxu0 0.0
    %922 = vmatmul.mubr.f32.gmra.mrb[0].mxu0 %v800
    %v923 = vpop.f32.mrb[0].mxu0
    %v924 = vadd.f32 0.0, %v923
    %v925 = vpop.f32.mrb[0].mxu0
    %926 = vdwg.mxu0
    %v927 = vadd.f32 %v667, %v869
    %v928 = vadd.f32 %v670, %v874
    %v929 = vadd.f32 %v675, %v879
    %v930 = vadd.f32 %v678, %v884
    %v931 = vadd.f32 %v683, %v889
    %v932 = vadd.f32 %v686, %v894
    %v933 = vadd.f32 %v691, %v899
    %v934 = vadd.f32 %v694, %v904
    %v935 = vadd.f32 %v699, %v909
    %v936 = vadd.f32 %v702, %v914
    %v937 = vadd.f32 %v707, %v919
    %v938 = vadd.f32 %v710, %v924
    %s939 = scalar_lea.vmem [#allocation4], 32
    %v940 = vld [vmem:[%s939] sm:$0xff]
    %v941 = vld [vmem:[%s939 + $0x8] sm:$0xff]
    %v942 = vld [vmem:[%s939 + $0x10] sm:$0xff]
    %v943 = vld [vmem:[%s939 + $0x18] sm:$0xff]
    %v945 = vsel %vm765, %v715, 0
    %v948 = vsel %vm765, %v718, 0
    %v951 = vsel %vm765, %v723, 0
    %v954 = vsel %vm765, %v726, 0
    %v957 = vsel %vm765, %v731, 0
    %v960 = vsel %vm765, %v734, 0
    %v963 = vsel %vm765, %v739, 0
    %v966 = vsel %vm765, %v742, 0
    %v969 = vsel %vm765, %v747, 0
    %v972 = vsel %vm765, %v750, 0
    %v975 = vsel %vm765, %v755, 0
    %v978 = vsel %vm765, %v758, 0
    %980 = vmatprep.subr.mxu0 0.0
    %981 = vmatpush1.msra.mxu0 %v940
    %982 = vmatprep.subr.mxu0 0.0
    %983 = vmatpush1.msra.mxu0 %v941
    %984 = vmatprep.subr.mxu0 0.0
    %985 = vmatpush1.msra.mxu0 %v942
    %986 = vmatprep.subr.mxu0 0.0
    %987 = vmatpush1.msra.mxu0 %v943
    %988 = vmatprep.subr.mxu0 0.0
    %989 = vmatpush1.msra.mxu0 0.0
    %990 = vmatprep.subr.mxu0 0.0
    %991 = vmatpush1.msra.mxu0 0.0
    %992 = vmatprep.subr.mxu0 0.0
    %993 = vmatpush1.msra.mxu0 0.0
    %994 = vmatprep.subr.mxu0 0.0
    %995 = vmatpush1.msra.mxu0 0.0
    %996 = vmatprep.subr.mxu0 0.0
    %997 = vmatpush1.msra.mxu0 0.0
    %998 = vmatprep.subr.mxu0 0.0
    %999 = vmatpush1.msra.mxu0 0.0
    %1000 = vmatprep.subr.mxu0 0.0
    %1001 = vmatpush1.msra.mxu0 0.0
    %1002 = vmatprep.subr.mxu0 0.0
    %1003 = vmatpush1.msra.mxu0 0.0
    %1004 = vmatprep.subr.mxu0 0.0
    %1005 = vmatpush1.msra.mxu0 0.0
    %1006 = vmatprep.subr.mxu0 0.0
    %1007 = vmatpush1.msra.mxu0 0.0
    %1008 = vmatprep.subr.mxu0 0.0
    %1009 = vmatpush1.msra.mxu0 0.0
    %1010 = vmatprep.subr.mxu0 0.0
    %1011 = vmatpush1.msra.mxu0 0.0
    %1012 = vmatprep.subr.mxu0 0.0
    %1013 = vmatpush1.msra.mxu0 0.0
    %1014 = vmatprep.subr.mxu0 0.0
    %1015 = vmatpush1.msra.mxu0 0.0
    %1016 = vmatprep.subr.mxu0 0.0
    %1017 = vmatpush1.msra.mxu0 0.0
    %1018 = vmatprep.subr.mxu0 0.0
    %1019 = vmatpush1.msra.mxu0 0.0
    %1020 = vmatprep.subr.mxu0 0.0
    %1021 = vmatpush1.msra.mxu0 0.0
    %1022 = vmatprep.subr.mxu0 0.0
    %1023 = vmatpush1.msra.mxu0 0.0
    %1024 = vmatprep.subr.mxu0 0.0
    %1025 = vmatpush1.msra.mxu0 0.0
    %1026 = vmatprep.subr.mxu0 0.0
    %1027 = vmatpush1.msra.mxu0 0.0
    %1028 = vmatprep.subr.mxu0 0.0
    %1029 = vmatpush1.msra.mxu0 0.0
    %1030 = vmatprep.subr.mxu0 0.0
    %1031 = vmatpush1.msra.mxu0 0.0
    %1032 = vmatprep.subr.mxu0 0.0
    %1033 = vmatpush1.msra.mxu0 0.0
    %1034 = vmatprep.subr.mxu0 0.0
    %1035 = vmatpush1.msra.mxu0 0.0
    %1036 = vmatprep.subr.mxu0 0.0
    %1037 = vmatpush1.msra.mxu0 0.0
    %1038 = vmatprep.subr.mxu0 0.0
    %1039 = vmatpush1.msra.mxu0 0.0
    %1040 = vmatprep.subr.mxu0 0.0
    %1041 = vmatpush1.msra.mxu0 0.0
    %1042 = vmatprep.subr.mxu0 0.0
    %1043 = vmatpush1.msra.mxu0 0.0
    %1044 = vmatprep.mubr.f32.mxu0 0.0
    %1045 = vmatmul.mubr.f32.gmra.mrb[0].mxu0 %v945
    %v1046 = vpop.f32.mrb[0].mxu0
    %v1047 = vadd.f32 0.0, %v1046
    %v1048 = vpop.f32.mrb[0].mxu0
    %1049 = vmatprep.mubr.f32.mxu0 0.0
    %1050 = vmatmul.mubr.f32.gmra.mrb[0].mxu0 %v948
    %v1051 = vpop.f32.mrb[0].mxu0
    %v1052 = vadd.f32 0.0, %v1051
    %v1053 = vpop.f32.mrb[0].mxu0
    %1054 = vmatprep.mubr.f32.mxu0 0.0
    %1055 = vmatmul.mubr.f32.gmra.mrb[0].mxu0 %v951
    %v1056 = vpop.f32.mrb[0].mxu0
    %v1057 = vadd.f32 0.0, %v1056
    %v1058 = vpop.f32.mrb[0].mxu0
    %1059 = vmatprep.mubr.f32.mxu0 0.0
    %1060 = vmatmul.mubr.f32.gmra.mrb[0].mxu0 %v954
    %v1061 = vpop.f32.mrb[0].mxu0
    %v1062 = vadd.f32 0.0, %v1061
    %v1063 = vpop.f32.mrb[0].mxu0
    %1064 = vmatprep.mubr.f32.mxu0 0.0
    %1065 = vmatmul.mubr.f32.gmra.mrb[0].mxu0 %v957
    %v1066 = vpop.f32.mrb[0].mxu0
    %v1067 = vadd.f32 0.0, %v1066
    %v1068 = vpop.f32.mrb[0].mxu0
    %1069 = vmatprep.mubr.f32.mxu0 0.0
    %1070 = vmatmul.mubr.f32.gmra.mrb[0].mxu0 %v960
    %v1071 = vpop.f32.mrb[0].mxu0
    %v1072 = vadd.f32 0.0, %v1071
    %v1073 = vpop.f32.mrb[0].mxu0
    %1074 = vmatprep.mubr.f32.mxu0 0.0
    %1075 = vmatmul.mubr.f32.gmra.mrb[0].mxu0 %v963
    %v1076 = vpop.f32.mrb[0].mxu0
    %v1077 = vadd.f32 0.0, %v1076
    %v1078 = vpop.f32.mrb[0].mxu0
    %1079 = vmatprep.mubr.f32.mxu0 0.0
    %1080 = vmatmul.mubr.f32.gmra.mrb[0].mxu0 %v966
    %v1081 = vpop.f32.mrb[0].mxu0
    %v1082 = vadd.f32 0.0, %v1081
    %v1083 = vpop.f32.mrb[0].mxu0
    %1084 = vmatprep.mubr.f32.mxu0 0.0
    %1085 = vmatmul.mubr.f32.gmra.mrb[0].mxu0 %v969
    %v1086 = vpop.f32.mrb[0].mxu0
    %v1087 = vadd.f32 0.0, %v1086
    %v1088 = vpop.f32.mrb[0].mxu0
    %1089 = vmatprep.mubr.f32.mxu0 0.0
    %1090 = vmatmul.mubr.f32.gmra.mrb[0].mxu0 %v972
    %v1091 = vpop.f32.mrb[0].mxu0
    %v1092 = vadd.f32 0.0, %v1091
    %v1093 = vpop.f32.mrb[0].mxu0
    %1094 = vmatprep.mubr.f32.mxu0 0.0
    %1095 = vmatmul.mubr.f32.gmra.mrb[0].mxu0 %v975
    %v1096 = vpop.f32.mrb[0].mxu0
    %v1097 = vadd.f32 0.0, %v1096
    %v1098 = vpop.f32.mrb[0].mxu0
    %1099 = vmatprep.mubr.f32.mxu0 0.0
    %1100 = vmatmul.mubr.f32.gmra.mrb[0].mxu0 %v978
    %v1101 = vpop.f32.mrb[0].mxu0
    %v1102 = vadd.f32 0.0, %v1101
    %v1103 = vpop.f32.mrb[0].mxu0
    %1104 = vdwg.mxu0
    %v1105 = vadd.f32 %v927, %v1047
    %v1106 = vadd.f32 %v928, %v1052
    %v1107 = vadd.f32 %v929, %v1057
    %v1108 = vadd.f32 %v930, %v1062
    %v1109 = vadd.f32 %v931, %v1067
    %v1110 = vadd.f32 %v932, %v1072
    %v1111 = vadd.f32 %v933, %v1077
    %v1112 = vadd.f32 %v934, %v1082
    %v1113 = vadd.f32 %v935, %v1087
    %v1114 = vadd.f32 %v936, %v1092
    %v1115 = vadd.f32 %v937, %v1097
    %v1116 = vadd.f32 %v938, %v1102
    %v1117 = vmul.f32 %v1105, %v1105
    %v1118 = vmul.f32 %v1106, %v1106
    %v1119 = vmul.f32 %v1107, %v1107
    %v1120 = vmul.f32 %v1108, %v1108
    %v1121 = vmul.f32 %v1109, %v1109
    %v1122 = vmul.f32 %v1110, %v1110
    %v1123 = vmul.f32 %v1111, %v1111
    %v1124 = vmul.f32 %v1112, %v1112
    %v1125 = vmul.f32 %v1113, %v1113
    %v1126 = vmul.f32 %v1114, %v1114
    %v1127 = vmul.f32 %v1115, %v1115
    %v1128 = vmul.f32 %v1116, %v1116
    %v1129 = vld [vmem:[%s5] sm:$0xff]
    %v1130 = vld [vmem:[%s5 + $0x8] sm:$0xff]
    %v1131 = vld [vmem:[%s5 + $0x10] sm:$0xff]
    %v1132 = vld [vmem:[%s5 + $0x18] sm:$0xff]
    %v1133 = vld [vmem:[%s5 + $0x20] sm:$0xff]
    %v1134 = vld [vmem:[%s5 + $0x28] sm:$0xff]
    %v1135 = vld [vmem:[%s5 + $0x30] sm:$0xff]
    %v1136 = vld [vmem:[%s5 + $0x38] sm:$0xff]
    %v1137 = vld [vmem:[%s5 + $0x40] sm:$0xff]
    %v1138 = vld [vmem:[%s5 + $0x48] sm:$0xff]
    %v1139 = vld [vmem:[%s5 + $0x50] sm:$0xff]
    %v1140 = vld [vmem:[%s5 + $0x58] sm:$0xff]
    %v1141 = vld [vmem:[%s5 + $0x60] sm:$0xff]
    %v1142 = vld [vmem:[%s5 + $0x68] sm:$0xff]
    %v1143 = vld [vmem:[%s5 + $0x70] sm:$0xff]
    %v1144 = vld [vmem:[%s5 + $0x78] sm:$0xff]
    %v1145 = vld [vmem:[%s5 + $0x80] sm:$0xff]
    %v1146 = vld [vmem:[%s5 + $0x88] sm:$0xff]
    %v1147 = vld [vmem:[%s5 + $0x90] sm:$0xff]
    %v1148 = vld [vmem:[%s5 + $0x98] sm:$0xff]
    %v1149 = vld [vmem:[%s5 + $0xa0] sm:$0xff]
    %v1150 = vld [vmem:[%s5 + $0xa8] sm:$0xff]
    %v1151 = vld [vmem:[%s5 + $0xb0] sm:$0xff]
    %v1152 = vld [vmem:[%s5 + $0xb8] sm:$0xff]
    %v1153 = vld [vmem:[%s5 + $0xc0] sm:$0xff]
    %v1154 = vld [vmem:[%s5 + $0xc8] sm:$0xff]
    %v1155 = vld [vmem:[%s5 + $0xd0] sm:$0xff]
    %v1156 = vld [vmem:[%s5 + $0xd8] sm:$0xff]
    %v1157 = vld [vmem:[%s5 + $0xe0] sm:$0xff]
    %v1158 = vld [vmem:[%s5 + $0xe8] sm:$0xff]
    %v1159 = vld [vmem:[%s5 + $0xf0] sm:$0xff]
    %v1160 = vld [vmem:[%s5 + $0xf8] sm:$0xff]
    %v1161 = vld [vmem:[%s5 + $0x100] sm:$0xff]
    %v1162 = vld [vmem:[%s5 + $0x108] sm:$0xff]
    %v1163 = vld [vmem:[%s5 + $0x110] sm:$0xff]
    %v1164 = vld [vmem:[%s5 + $0x118] sm:$0xff]
    %v1165 = vld [vmem:[%s5 + $0x120] sm:$0xff]
    %v1166 = vld [vmem:[%s5 + $0x128] sm:$0xff]
    %v1167 = vld [vmem:[%s5 + $0x130] sm:$0xff]
    %v1168 = vld [vmem:[%s5 + $0x138] sm:$0xff]
    %v1169 = vld [vmem:[%s5 + $0x140] sm:$0xff]
    %v1170 = vld [vmem:[%s5 + $0x148] sm:$0xff]
    %v1171 = vld [vmem:[%s5 + $0x150] sm:$0xff]
    %v1172 = vld [vmem:[%s5 + $0x158] sm:$0xff]
    %v1173 = vld [vmem:[%s5 + $0x160] sm:$0xff]
    %v1174 = vld [vmem:[%s5 + $0x168] sm:$0xff]
    %v1175 = vld [vmem:[%s5 + $0x170] sm:$0xff]
    %v1176 = vld [vmem:[%s5 + $0x178] sm:$0xff]
    %v1178 = vsel %vm310, %v1130, 0
    %v1181 = vsel %vm310, %v1132, 0
    %v1184 = vsel %vm310, %v1134, 0
    %v1187 = vsel %vm310, %v1136, 0
    %v1190 = vsel %vm310, %v1138, 0
    %v1193 = vsel %vm310, %v1140, 0
    %v1196 = vsel %vm310, %v1142, 0
    %v1199 = vsel %vm310, %v1144, 0
    %v1202 = vsel %vm310, %v1146, 0
    %v1205 = vsel %vm310, %v1148, 0
    %v1208 = vsel %vm310, %v1150, 0
    %v1211 = vsel %vm310, %v1152, 0
    %v1214 = vsel %vm310, %v1154, 0
    %v1217 = vsel %vm310, %v1156, 0
    %v1220 = vsel %vm310, %v1158, 0
    %v1223 = vsel %vm310, %v1160, 0
    %v1226 = vsel %vm310, %v1162, 0
    %v1229 = vsel %vm310, %v1164, 0
    %v1232 = vsel %vm310, %v1166, 0
    %v1235 = vsel %vm310, %v1168, 0
    %v1238 = vsel %vm310, %v1170, 0
    %v1241 = vsel %vm310, %v1172, 0
    %v1244 = vsel %vm310, %v1174, 0
    %v1247 = vsel %vm310, %v1176, 0
    %1249 = vmatprep.subr.mxu0 0.0
    %1250 = vmatpush1.msra.mxu0 %v1105
    %1251 = vmatprep.subr.mxu0 0.0
    %1252 = vmatpush1.msra.mxu0 %v1106
    %1253 = vmatprep.subr.mxu0 0.0
    %1254 = vmatpush1.msra.mxu0 %v1107
    %1255 = vmatprep.subr.mxu0 0.0
    %1256 = vmatpush1.msra.mxu0 %v1108
    %1257 = vmatprep.subr.mxu0 0.0
    %1258 = vmatpush1.msra.mxu0 %v1109
    %1259 = vmatprep.subr.mxu0 0.0
    %1260 = vmatpush1.msra.mxu0 %v1110
    %1261 = vmatprep.subr.mxu0 0.0
    %1262 = vmatpush1.msra.mxu0 %v1111
    %1263 = vmatprep.subr.mxu0 0.0
    %1264 = vmatpush1.msra.mxu0 %v1112
    %1265 = vmatprep.subr.mxu0 0.0
    %1266 = vmatpush1.msra.mxu0 %v1113
    %1267 = vmatprep.subr.mxu0 0.0
    %1268 = vmatpush1.msra.mxu0 %v1114
    %1269 = vmatprep.subr.mxu0 0.0
    %1270 = vmatpush1.msra.mxu0 %v1115
    %1271 = vmatprep.subr.mxu0 0.0
    %1272 = vmatpush1.msra.mxu0 %v1116
    %1273 = vmatprep.subr.mxu0 0.0
    %1274 = vmatpush1.msra.mxu0 %v1117
    %1275 = vmatprep.subr.mxu0 0.0
    %1276 = vmatpush1.msra.mxu0 %v1118
    %1277 = vmatprep.subr.mxu0 0.0
    %1278 = vmatpush1.msra.mxu0 %v1119
    %1279 = vmatprep.subr.mxu0 0.0
    %1280 = vmatpush1.msra.mxu0 %v1120
    %1281 = vmatprep.subr.mxu0 0.0
    %1282 = vmatpush1.msra.mxu0 %v1121
    %1283 = vmatprep.subr.mxu0 0.0
    %1284 = vmatpush1.msra.mxu0 %v1122
    %1285 = vmatprep.subr.mxu0 0.0
    %1286 = vmatpush1.msra.mxu0 %v1123
    %1287 = vmatprep.subr.mxu0 0.0
    %1288 = vmatpush1.msra.mxu0 %v1124
    %1289 = vmatprep.subr.mxu0 0.0
    %1290 = vmatpush1.msra.mxu0 %v1125
    %1291 = vmatprep.subr.mxu0 0.0
    %1292 = vmatpush1.msra.mxu0 %v1126
    %1293 = vmatprep.subr.mxu0 0.0
    %1294 = vmatpush1.msra.mxu0 %v1127
    %1295 = vmatprep.subr.mxu0 0.0
    %1296 = vmatpush1.msra.mxu0 %v1128
    %1297 = vmatprep.subr.mxu0 0.0
    %1298 = vmatpush1.msra.mxu0 0.0
    %1299 = vmatprep.subr.mxu0 0.0
    %1300 = vmatpush1.msra.mxu0 0.0
    %1301 = vmatprep.subr.mxu0 0.0
    %1302 = vmatpush1.msra.mxu0 0.0
    %1303 = vmatprep.subr.mxu0 0.0
    %1304 = vmatpush1.msra.mxu0 0.0
    %1305 = vmatprep.subr.mxu0 0.0
    %1306 = vmatpush1.msra.mxu0 0.0
    %1307 = vmatprep.subr.mxu0 0.0
    %1308 = vmatpush1.msra.mxu0 0.0
    %1309 = vmatprep.subr.mxu0 0.0
    %1310 = vmatpush1.msra.mxu0 0.0
    %1311 = vmatprep.subr.mxu0 0.0
    %1312 = vmatpush1.msra.mxu0 0.0
    %1313 = vmatprep.mubr.f32.mxu0 %v1178
    %1314 = vmatmul.mubr.f32.gmra.mrb[0].mxu0 %v1129
    %v1315 = vpop.f32.mrb[0].mxu0
    %v1316 = vadd.f32 0.0, %v1315
    %v1317 = vpop.f32.mrb[0].mxu0
    %1318 = vmatprep.mubr.f32.mxu0 %v1181
    %1319 = vmatmul.mubr.f32.gmra.mrb[0].mxu0 %v1131
    %v1320 = vpop.f32.mrb[0].mxu0
    %v1321 = vadd.f32 0.0, %v1320
    %v1322 = vpop.f32.mrb[0].mxu0
    %1323 = vmatprep.mubr.f32.mxu0 %v1184
    %1324 = vmatmul.mubr.f32.gmra.mrb[0].mxu0 %v1133
    %v1325 = vpop.f32.mrb[0].mxu0
    %v1326 = vadd.f32 0.0, %v1325
    %v1327 = vpop.f32.mrb[0].mxu0
    %1328 = vmatprep.mubr.f32.mxu0 %v1187
    %1329 = vmatmul.mubr.f32.gmra.mrb[0].mxu0 %v1135
    %v1330 = vpop.f32.mrb[0].mxu0
    %v1331 = vadd.f32 0.0, %v1330
    %v1332 = vpop.f32.mrb[0].mxu0
    %1333 = vmatprep.mubr.f32.mxu0 %v1190
    %1334 = vmatmul.mubr.f32.gmra.mrb[0].mxu0 %v1137
    %v1335 = vpop.f32.mrb[0].mxu0
    %v1336 = vadd.f32 0.0, %v1335
    %v1337 = vpop.f32.mrb[0].mxu0
    %1338 = vmatprep.mubr.f32.mxu0 %v1193
    %1339 = vmatmul.mubr.f32.gmra.mrb[0].mxu0 %v1139
    %v1340 = vpop.f32.mrb[0].mxu0
    %v1341 = vadd.f32 0.0, %v1340
    %v1342 = vpop.f32.mrb[0].mxu0
    %1343 = vmatprep.mubr.f32.mxu0 %v1196
    %1344 = vmatmul.mubr.f32.gmra.mrb[0].mxu0 %v1141
    %v1345 = vpop.f32.mrb[0].mxu0
    %v1346 = vadd.f32 0.0, %v1345
    %v1347 = vpop.f32.mrb[0].mxu0
    %1348 = vmatprep.mubr.f32.mxu0 %v1199
    %1349 = vmatmul.mubr.f32.gmra.mrb[0].mxu0 %v1143
    %v1350 = vpop.f32.mrb[0].mxu0
    %v1351 = vadd.f32 0.0, %v1350
    %v1352 = vpop.f32.mrb[0].mxu0
    %1353 = vmatprep.mubr.f32.mxu0 %v1202
    %1354 = vmatmul.mubr.f32.gmra.mrb[0].mxu0 %v1145
    %v1355 = vpop.f32.mrb[0].mxu0
    %v1356 = vadd.f32 0.0, %v1355
    %v1357 = vpop.f32.mrb[0].mxu0
    %1358 = vmatprep.mubr.f32.mxu0 %v1205
    %1359 = vmatmul.mubr.f32.gmra.mrb[0].mxu0 %v1147
    %v1360 = vpop.f32.mrb[0].mxu0
    %v1361 = vadd.f32 0.0, %v1360
    %v1362 = vpop.f32.mrb[0].mxu0
    %1363 = vmatprep.mubr.f32.mxu0 %v1208
    %1364 = vmatmul.mubr.f32.gmra.mrb[0].mxu0 %v1149
    %v1365 = vpop.f32.mrb[0].mxu0
    %v1366 = vadd.f32 0.0, %v1365
    %v1367 = vpop.f32.mrb[0].mxu0
    %1368 = vmatprep.mubr.f32.mxu0 %v1211
    %1369 = vmatmul.mubr.f32.gmra.mrb[0].mxu0 %v1151
    %v1370 = vpop.f32.mrb[0].mxu0
    %v1371 = vadd.f32 0.0, %v1370
    %v1372 = vpop.f32.mrb[0].mxu0
    %1373 = vmatprep.mubr.f32.mxu0 %v1214
    %1374 = vmatmul.mubr.f32.gmra.mrb[0].mxu0 %v1153
    %v1375 = vpop.f32.mrb[0].mxu0
    %v1376 = vadd.f32 0.0, %v1375
    %v1377 = vpop.f32.mrb[0].mxu0
    %1378 = vmatprep.mubr.f32.mxu0 %v1217
    %1379 = vmatmul.mubr.f32.gmra.mrb[0].mxu0 %v1155
    %v1380 = vpop.f32.mrb[0].mxu0
    %v1381 = vadd.f32 0.0, %v1380
    %v1382 = vpop.f32.mrb[0].mxu0
    %1383 = vmatprep.mubr.f32.mxu0 %v1220
    %1384 = vmatmul.mubr.f32.gmra.mrb[0].mxu0 %v1157
    %v1385 = vpop.f32.mrb[0].mxu0
    %v1386 = vadd.f32 0.0, %v1385
    %v1387 = vpop.f32.mrb[0].mxu0
    %1388 = vmatprep.mubr.f32.mxu0 %v1223
    %1389 = vmatmul.mubr.f32.gmra.mrb[0].mxu0 %v1159
    %v1390 = vpop.f32.mrb[0].mxu0
    %v1391 = vadd.f32 0.0, %v1390
    %v1392 = vpop.f32.mrb[0].mxu0
    %1393 = vmatprep.mubr.f32.mxu0 %v1226
    %1394 = vmatmul.mubr.f32.gmra.mrb[0].mxu0 %v1161
    %v1395 = vpop.f32.mrb[0].mxu0
    %v1396 = vadd.f32 0.0, %v1395
    %v1397 = vpop.f32.mrb[0].mxu0
    %1398 = vmatprep.mubr.f32.mxu0 %v1229
    %1399 = vmatmul.mubr.f32.gmra.mrb[0].mxu0 %v1163
    %v1400 = vpop.f32.mrb[0].mxu0
    %v1401 = vadd.f32 0.0, %v1400
    %v1402 = vpop.f32.mrb[0].mxu0
    %1403 = vmatprep.mubr.f32.mxu0 %v1232
    %1404 = vmatmul.mubr.f32.gmra.mrb[0].mxu0 %v1165
    %v1405 = vpop.f32.mrb[0].mxu0
    %v1406 = vadd.f32 0.0, %v1405
    %v1407 = vpop.f32.mrb[0].mxu0
    %1408 = vmatprep.mubr.f32.mxu0 %v1235
    %1409 = vmatmul.mubr.f32.gmra.mrb[0].mxu0 %v1167
    %v1410 = vpop.f32.mrb[0].mxu0
    %v1411 = vadd.f32 0.0, %v1410
    %v1412 = vpop.f32.mrb[0].mxu0
    %1413 = vmatprep.mubr.f32.mxu0 %v1238
    %1414 = vmatmul.mubr.f32.gmra.mrb[0].mxu0 %v1169
    %v1415 = vpop.f32.mrb[0].mxu0
    %v1416 = vadd.f32 0.0, %v1415
    %v1417 = vpop.f32.mrb[0].mxu0
    %1418 = vmatprep.mubr.f32.mxu0 %v1241
    %1419 = vmatmul.mubr.f32.gmra.mrb[0].mxu0 %v1171
    %v1420 = vpop.f32.mrb[0].mxu0
    %v1421 = vadd.f32 0.0, %v1420
    %v1422 = vpop.f32.mrb[0].mxu0
    %1423 = vmatprep.mubr.f32.mxu0 %v1244
    %1424 = vmatmul.mubr.f32.gmra.mrb[0].mxu0 %v1173
    %v1425 = vpop.f32.mrb[0].mxu0
    %v1426 = vadd.f32 0.0, %v1425
    %v1427 = vpop.f32.mrb[0].mxu0
    %1428 = vmatprep.mubr.f32.mxu0 %v1247
    %1429 = vmatmul.mubr.f32.gmra.mrb[0].mxu0 %v1175
    %v1430 = vpop.f32.mrb[0].mxu0
    %v1431 = vadd.f32 0.0, %v1430
    %v1432 = vpop.f32.mrb[0].mxu0
    %1433 = vdwg.mxu0
    %v1434 = vld [vmem:[#allocation6] sm:$0xff]
    %v1435 = vld [vmem:[#allocation6 + $0x8] sm:$0xff]
    %v1436 = vld [vmem:[#allocation6 + $0x10] sm:$0xff]
    %v1437 = vld [vmem:[#allocation6 + $0x18] sm:$0xff]
    %v1439 = vsel %vm765, %v1316, 0
    %v1442 = vsel %vm765, %v1321, 0
    %v1445 = vsel %vm765, %v1326, 0
    %v1448 = vsel %vm765, %v1331, 0
    %v1451 = vsel %vm765, %v1336, 0
    %v1454 = vsel %vm765, %v1341, 0
    %v1457 = vsel %vm765, %v1346, 0
    %v1460 = vsel %vm765, %v1351, 0
    %v1463 = vsel %vm765, %v1356, 0
    %v1466 = vsel %vm765, %v1361, 0
    %v1469 = vsel %vm765, %v1366, 0
    %v1472 = vsel %vm765, %v1371, 0
    %v1475 = vsel %vm765, %v1376, 0
    %v1478 = vsel %vm765, %v1381, 0
    %v1481 = vsel %vm765, %v1386, 0
    %v1484 = vsel %vm765, %v1391, 0
    %v1487 = vsel %vm765, %v1396, 0
    %v1490 = vsel %vm765, %v1401, 0
    %v1493 = vsel %vm765, %v1406, 0
    %v1496 = vsel %vm765, %v1411, 0
    %v1499 = vsel %vm765, %v1416, 0
    %v1502 = vsel %vm765, %v1421, 0
    %v1505 = vsel %vm765, %v1426, 0
    %v1508 = vsel %vm765, %v1431, 0
    %1510 = vmatprep.subr.mxu0 0.0
    %1511 = vmatpush1.msra.mxu0 %v1434
    %1512 = vmatprep.subr.mxu0 0.0
    %1513 = vmatpush1.msra.mxu0 %v1435
    %1514 = vmatprep.subr.mxu0 0.0
    %1515 = vmatpush1.msra.mxu0 %v1436
    %1516 = vmatprep.subr.mxu0 0.0
    %1517 = vmatpush1.msra.mxu0 %v1437
    %1518 = vmatprep.subr.mxu0 0.0
    %1519 = vmatpush1.msra.mxu0 0.0
    %1520 = vmatprep.subr.mxu0 0.0
    %1521 = vmatpush1.msra.mxu0 0.0
    %1522 = vmatprep.subr.mxu0 0.0
    %1523 = vmatpush1.msra.mxu0 0.0
    %1524 = vmatprep.subr.mxu0 0.0
    %1525 = vmatpush1.msra.mxu0 0.0
    %1526 = vmatprep.subr.mxu0 0.0
    %1527 = vmatpush1.msra.mxu0 0.0
    %1528 = vmatprep.subr.mxu0 0.0
    %1529 = vmatpush1.msra.mxu0 0.0
    %1530 = vmatprep.subr.mxu0 0.0
    %1531 = vmatpush1.msra.mxu0 0.0
    %1532 = vmatprep.subr.mxu0 0.0
    %1533 = vmatpush1.msra.mxu0 0.0
    %1534 = vmatprep.subr.mxu0 0.0
    %1535 = vmatpush1.msra.mxu0 0.0
    %1536 = vmatprep.subr.mxu0 0.0
    %1537 = vmatpush1.msra.mxu0 0.0
    %1538 = vmatprep.subr.mxu0 0.0
    %1539 = vmatpush1.msra.mxu0 0.0
    %1540 = vmatprep.subr.mxu0 0.0
    %1541 = vmatpush1.msra.mxu0 0.0
    %1542 = vmatprep.subr.mxu0 0.0
    %1543 = vmatpush1.msra.mxu0 0.0
    %1544 = vmatprep.subr.mxu0 0.0
    %1545 = vmatpush1.msra.mxu0 0.0
    %1546 = vmatprep.subr.mxu0 0.0
    %1547 = vmatpush1.msra.mxu0 0.0
    %1548 = vmatprep.subr.mxu0 0.0
    %1549 = vmatpush1.msra.mxu0 0.0
    %1550 = vmatprep.subr.mxu0 0.0
    %1551 = vmatpush1.msra.mxu0 0.0
    %1552 = vmatprep.subr.mxu0 0.0
    %1553 = vmatpush1.msra.mxu0 0.0
    %1554 = vmatprep.subr.mxu0 0.0
    %1555 = vmatpush1.msra.mxu0 0.0
    %1556 = vmatprep.subr.mxu0 0.0
    %1557 = vmatpush1.msra.mxu0 0.0
    %1558 = vmatprep.subr.mxu0 0.0
    %1559 = vmatpush1.msra.mxu0 0.0
    %1560 = vmatprep.subr.mxu0 0.0
    %1561 = vmatpush1.msra.mxu0 0.0
    %1562 = vmatprep.subr.mxu0 0.0
    %1563 = vmatpush1.msra.mxu0 0.0
    %1564 = vmatprep.subr.mxu0 0.0
    %1565 = vmatpush1.msra.mxu0 0.0
    %1566 = vmatprep.subr.mxu0 0.0
    %1567 = vmatpush1.msra.mxu0 0.0
    %1568 = vmatprep.subr.mxu0 0.0
    %1569 = vmatpush1.msra.mxu0 0.0
    %1570 = vmatprep.subr.mxu0 0.0
    %1571 = vmatpush1.msra.mxu0 0.0
    %1572 = vmatprep.subr.mxu0 0.0
    %1573 = vmatpush1.msra.mxu0 0.0
    %1574 = vmatprep.mubr.f32.mxu0 0.0
    %1575 = vmatmul.mubr.f32.gmra.mrb[0].mxu0 %v1439
    %v1576 = vpop.f32.mrb[0].mxu0
    %v1577 = vadd.f32 0.0, %v1576
    %v1578 = vpop.f32.mrb[0].mxu0
    %1579 = vmatprep.mubr.f32.mxu0 0.0
    %1580 = vmatmul.mubr.f32.gmra.mrb[0].mxu0 %v1442
    %v1581 = vpop.f32.mrb[0].mxu0
    %v1582 = vadd.f32 0.0, %v1581
    %v1583 = vpop.f32.mrb[0].mxu0
    %1584 = vmatprep.mubr.f32.mxu0 0.0
    %1585 = vmatmul.mubr.f32.gmra.mrb[0].mxu0 %v1445
    %v1586 = vpop.f32.mrb[0].mxu0
    %v1587 = vadd.f32 0.0, %v1586
    %v1588 = vpop.f32.mrb[0].mxu0
    %1589 = vmatprep.mubr.f32.mxu0 0.0
    %1590 = vmatmul.mubr.f32.gmra.mrb[0].mxu0 %v1448
    %v1591 = vpop.f32.mrb[0].mxu0
    %v1592 = vadd.f32 0.0, %v1591
    %v1593 = vpop.f32.mrb[0].mxu0
    %1594 = vmatprep.mubr.f32.mxu0 0.0
    %1595 = vmatmul.mubr.f32.gmra.mrb[0].mxu0 %v1451
    %v1596 = vpop.f32.mrb[0].mxu0
    %v1597 = vadd.f32 0.0, %v1596
    %v1598 = vpop.f32.mrb[0].mxu0
    %1599 = vmatprep.mubr.f32.mxu0 0.0
    %1600 = vmatmul.mubr.f32.gmra.mrb[0].mxu0 %v1454
    %v1601 = vpop.f32.mrb[0].mxu0
    %v1602 = vadd.f32 0.0, %v1601
    %v1603 = vpop.f32.mrb[0].mxu0
    %1604 = vmatprep.mubr.f32.mxu0 0.0
    %1605 = vmatmul.mubr.f32.gmra.mrb[0].mxu0 %v1457
    %v1606 = vpop.f32.mrb[0].mxu0
    %v1607 = vadd.f32 0.0, %v1606
    %v1608 = vpop.f32.mrb[0].mxu0
    %1609 = vmatprep.mubr.f32.mxu0 0.0
    %1610 = vmatmul.mubr.f32.gmra.mrb[0].mxu0 %v1460
    %v1611 = vpop.f32.mrb[0].mxu0
    %v1612 = vadd.f32 0.0, %v1611
    %v1613 = vpop.f32.mrb[0].mxu0
    %1614 = vmatprep.mubr.f32.mxu0 0.0
    %1615 = vmatmul.mubr.f32.gmra.mrb[0].mxu0 %v1463
    %v1616 = vpop.f32.mrb[0].mxu0
    %v1617 = vadd.f32 0.0, %v1616
    %v1618 = vpop.f32.mrb[0].mxu0
    %1619 = vmatprep.mubr.f32.mxu0 0.0
    %1620 = vmatmul.mubr.f32.gmra.mrb[0].mxu0 %v1466
    %v1621 = vpop.f32.mrb[0].mxu0
    %v1622 = vadd.f32 0.0, %v1621
    %v1623 = vpop.f32.mrb[0].mxu0
    %1624 = vmatprep.mubr.f32.mxu0 0.0
    %1625 = vmatmul.mubr.f32.gmra.mrb[0].mxu0 %v1469
    %v1626 = vpop.f32.mrb[0].mxu0
    %v1627 = vadd.f32 0.0, %v1626
    %v1628 = vpop.f32.mrb[0].mxu0
    %1629 = vmatprep.mubr.f32.mxu0 0.0
    %1630 = vmatmul.mubr.f32.gmra.mrb[0].mxu0 %v1472
    %v1631 = vpop.f32.mrb[0].mxu0
    %v1632 = vadd.f32 0.0, %v1631
    %v1633 = vpop.f32.mrb[0].mxu0
    %1634 = vmatprep.mubr.f32.mxu0 0.0
    %1635 = vmatmul.mubr.f32.gmra.mrb[0].mxu0 %v1475
    %v1636 = vpop.f32.mrb[0].mxu0
    %v1637 = vadd.f32 0.0, %v1636
    %v1638 = vpop.f32.mrb[0].mxu0
    %1639 = vmatprep.mubr.f32.mxu0 0.0
    %1640 = vmatmul.mubr.f32.gmra.mrb[0].mxu0 %v1478
    %v1641 = vpop.f32.mrb[0].mxu0
    %v1642 = vadd.f32 0.0, %v1641
    %v1643 = vpop.f32.mrb[0].mxu0
    %1644 = vmatprep.mubr.f32.mxu0 0.0
    %1645 = vmatmul.mubr.f32.gmra.mrb[0].mxu0 %v1481
    %v1646 = vpop.f32.mrb[0].mxu0
    %v1647 = vadd.f32 0.0, %v1646
    %v1648 = vpop.f32.mrb[0].mxu0
    %1649 = vmatprep.mubr.f32.mxu0 0.0
    %1650 = vmatmul.mubr.f32.gmra.mrb[0].mxu0 %v1484
    %v1651 = vpop.f32.mrb[0].mxu0
    %v1652 = vadd.f32 0.0, %v1651
    %v1653 = vpop.f32.mrb[0].mxu0
    %1654 = vmatprep.mubr.f32.mxu0 0.0
    %1655 = vmatmul.mubr.f32.gmra.mrb[0].mxu0 %v1487
    %v1656 = vpop.f32.mrb[0].mxu0
    %v1657 = vadd.f32 0.0, %v1656
    %v1658 = vpop.f32.mrb[0].mxu0
    %1659 = vmatprep.mubr.f32.mxu0 0.0
    %1660 = vmatmul.mubr.f32.gmra.mrb[0].mxu0 %v1490
    %v1661 = vpop.f32.mrb[0].mxu0
    %v1662 = vadd.f32 0.0, %v1661
    %v1663 = vpop.f32.mrb[0].mxu0
    %1664 = vmatprep.mubr.f32.mxu0 0.0
    %1665 = vmatmul.mubr.f32.gmra.mrb[0].mxu0 %v1493
    %v1666 = vpop.f32.mrb[0].mxu0
    %v1667 = vadd.f32 0.0, %v1666
    %v1668 = vpop.f32.mrb[0].mxu0
    %1669 = vmatprep.mubr.f32.mxu0 0.0
    %1670 = vmatmul.mubr.f32.gmra.mrb[0].mxu0 %v1496
    %v1671 = vpop.f32.mrb[0].mxu0
    %v1672 = vadd.f32 0.0, %v1671
    %v1673 = vpop.f32.mrb[0].mxu0
    %1674 = vmatprep.mubr.f32.mxu0 0.0
    %1675 = vmatmul.mubr.f32.gmra.mrb[0].mxu0 %v1499
    %v1676 = vpop.f32.mrb[0].mxu0
    %v1677 = vadd.f32 0.0, %v1676
    %v1678 = vpop.f32.mrb[0].mxu0
    %1679 = vmatprep.mubr.f32.mxu0 0.0
    %1680 = vmatmul.mubr.f32.gmra.mrb[0].mxu0 %v1502
    %v1681 = vpop.f32.mrb[0].mxu0
    %v1682 = vadd.f32 0.0, %v1681
    %v1683 = vpop.f32.mrb[0].mxu0
    %1684 = vmatprep.mubr.f32.mxu0 0.0
    %1685 = vmatmul.mubr.f32.gmra.mrb[0].mxu0 %v1505
    %v1686 = vpop.f32.mrb[0].mxu0
    %v1687 = vadd.f32 0.0, %v1686
    %v1688 = vpop.f32.mrb[0].mxu0
    %1689 = vmatprep.mubr.f32.mxu0 0.0
    %1690 = vmatmul.mubr.f32.gmra.mrb[0].mxu0 %v1508
    %v1691 = vpop.f32.mrb[0].mxu0
    %v1692 = vadd.f32 0.0, %v1691
    %v1693 = vpop.f32.mrb[0].mxu0
    %1694 = vdwg.mxu0
    %v1695 = vmul.f32 %v1577, %v1577
    %v1696 = vmul.f32 %v1582, %v1582
    %v1697 = vmul.f32 %v1587, %v1587
    %v1698 = vmul.f32 %v1592, %v1592
    %v1699 = vmul.f32 %v1597, %v1597
    %v1700 = vmul.f32 %v1602, %v1602
    %v1701 = vmul.f32 %v1607, %v1607
    %v1702 = vmul.f32 %v1612, %v1612
    %v1703 = vmul.f32 %v1617, %v1617
    %v1704 = vmul.f32 %v1622, %v1622
    %v1705 = vmul.f32 %v1627, %v1627
    %v1706 = vmul.f32 %v1632, %v1632
    %v1707 = vsub.f32 %v1637, %v1695
    %v1708 = vsub.f32 %v1642, %v1696
    %v1709 = vsub.f32 %v1647, %v1697
    %v1710 = vsub.f32 %v1652, %v1698
    %v1711 = vsub.f32 %v1657, %v1699
    %v1712 = vsub.f32 %v1662, %v1700
    %v1713 = vsub.f32 %v1667, %v1701
    %v1714 = vsub.f32 %v1672, %v1702
    %v1715 = vsub.f32 %v1677, %v1703
    %v1716 = vsub.f32 %v1682, %v1704
    %v1717 = vsub.f32 %v1687, %v1705
    %v1718 = vsub.f32 %v1692, %v1706
    %v1719 = vsub.f32 %v1105, %v1577
    %v1720 = vsub.f32 %v1106, %v1582
    %v1721 = vsub.f32 %v1107, %v1587
    %v1722 = vsub.f32 %v1108, %v1592
    %v1723 = vsub.f32 %v1109, %v1597
    %v1724 = vsub.f32 %v1110, %v1602
    %v1725 = vsub.f32 %v1111, %v1607
    %v1726 = vsub.f32 %v1112, %v1612
    %v1727 = vsub.f32 %v1113, %v1617
    %v1728 = vsub.f32 %v1114, %v1622
    %v1729 = vsub.f32 %v1115, %v1627
    %v1730 = vsub.f32 %v1116, %v1632
    %v1731 = vadd.f32 %v1707, 1e-05
    %v1732 = vadd.f32 %v1708, 1e-05
    %v1733 = vadd.f32 %v1709, 1e-05
    %v1734 = vadd.f32 %v1710, 1e-05
    %v1735 = vadd.f32 %v1711, 1e-05
    %v1736 = vadd.f32 %v1712, 1e-05
    %v1737 = vadd.f32 %v1713, 1e-05
    %v1738 = vadd.f32 %v1714, 1e-05
    %v1739 = vadd.f32 %v1715, 1e-05
    %v1740 = vadd.f32 %v1716, 1e-05
    %v1741 = vadd.f32 %v1717, 1e-05
    %v1742 = vadd.f32 %v1718, 1e-05
    %v1743 = vrsqrt.pop %v1731
    %v1744 = vrsqrt.pop %v1732
    %v1745 = vrsqrt.pop %v1733
    %v1746 = vrsqrt.pop %v1734
    %v1747 = vrsqrt.pop %v1735
    %v1748 = vrsqrt.pop %v1736
    %v1749 = vrsqrt.pop %v1737
    %v1750 = vrsqrt.pop %v1738
    %v1751 = vrsqrt.pop %v1739
    %v1752 = vrsqrt.pop %v1740
    %v1753 = vrsqrt.pop %v1741
    %v1754 = vrsqrt.pop %v1742
    %v1755 = vmul.f32 %v1719, %v1743
    %v1756 = vmul.f32 %v1720, %v1744
    %v1757 = vmul.f32 %v1721, %v1745
    %v1758 = vmul.f32 %v1722, %v1746
    %v1759 = vmul.f32 %v1723, %v1747
    %v1760 = vmul.f32 %v1724, %v1748
    %v1761 = vmul.f32 %v1725, %v1749
    %v1762 = vmul.f32 %v1726, %v1750
    %v1763 = vmul.f32 %v1727, %v1751
    %v1764 = vmul.f32 %v1728, %v1752
    %v1765 = vmul.f32 %v1729, %v1753
    %v1766 = vmul.f32 %v1730, %v1754
    %v1767 = vld [vmem:[%s7] sm:$0xff]
    %v1768 = vld [vmem:[%s7 + $0x8] sm:$0xff]
    %v1769 = vld [vmem:[%s7 + $0x10] sm:$0xff]
    %v1770 = vld [vmem:[%s7 + $0x18] sm:$0xff]
    %v1771 = vld [vmem:[%s7 + $0x20] sm:$0xff]
    %v1772 = vld [vmem:[%s7 + $0x28] sm:$0xff]
    %v1773 = vld [vmem:[%s7 + $0x30] sm:$0xff]
    %v1774 = vld [vmem:[%s7 + $0x38] sm:$0xff]
    %v1775 = vld [vmem:[%s7 + $0x40] sm:$0xff]
    %v1776 = vld [vmem:[%s7 + $0x48] sm:$0xff]
    %v1777 = vld [vmem:[%s7 + $0x50] sm:$0xff]
    %v1778 = vld [vmem:[%s7 + $0x58] sm:$0xff]
    %1780 = vset.pattern.permute.xlu0 0
    %1781 = vperm.xlu0 %1780, %v1767
    %v1782 = vpop.permute.xlu0 %1781
    %1785 = vset.pattern.permute.xlu0 0
    %1786 = vperm.xlu0 %1785, %v1768
    %v1787 = vpop.permute.xlu0 %1786
    %1790 = vset.pattern.permute.xlu0 0
    %1791 = vperm.xlu0 %1790, %v1769
    %v1792 = vpop.permute.xlu0 %1791
    %1795 = vset.pattern.permute.xlu0 0
    %1796 = vperm.xlu0 %1795, %v1770
    %v1797 = vpop.permute.xlu0 %1796
    %1800 = vset.pattern.permute.xlu0 0
    %1801 = vperm.xlu0 %1800, %v1771
    %v1802 = vpop.permute.xlu0 %1801
    %1805 = vset.pattern.permute.xlu0 0
    %1806 = vperm.xlu0 %1805, %v1772
    %v1807 = vpop.permute.xlu0 %1806
    %1810 = vset.pattern.permute.xlu0 0
    %1811 = vperm.xlu0 %1810, %v1773
    %v1812 = vpop.permute.xlu0 %1811
    %1815 = vset.pattern.permute.xlu0 0
    %1816 = vperm.xlu0 %1815, %v1774
    %v1817 = vpop.permute.xlu0 %1816
    %1820 = vset.pattern.permute.xlu0 0
    %1821 = vperm.xlu0 %1820, %v1775
    %v1822 = vpop.permute.xlu0 %1821
    %1825 = vset.pattern.permute.xlu0 0
    %1826 = vperm.xlu0 %1825, %v1776
    %v1827 = vpop.permute.xlu0 %1826
    %1830 = vset.pattern.permute.xlu0 0
    %1831 = vperm.xlu0 %1830, %v1777
    %v1832 = vpop.permute.xlu0 %1831
    %1835 = vset.pattern.permute.xlu0 0
    %1836 = vperm.xlu0 %1835, %v1778
    %v1837 = vpop.permute.xlu0 %1836
    %v1839 = vmul.f32 %v1755, %v1782
    %v1840 = vmul.f32 %v1756, %v1787
    %v1841 = vmul.f32 %v1757, %v1792
    %v1842 = vmul.f32 %v1758, %v1797
    %v1843 = vmul.f32 %v1759, %v1802
    %v1844 = vmul.f32 %v1760, %v1807
    %v1845 = vmul.f32 %v1761, %v1812
    %v1846 = vmul.f32 %v1762, %v1817
    %v1847 = vmul.f32 %v1763, %v1822
    %v1848 = vmul.f32 %v1764, %v1827
    %v1849 = vmul.f32 %v1765, %v1832
    %v1850 = vmul.f32 %v1766, %v1837
    %1851 = vset.pattern.permute.xlu0 1
    %1852 = vperm.xlu0 %1851, %v1767
    %v1853 = vpop.permute.xlu0 %1852
    %1855 = vset.pattern.permute.xlu0 1
    %1856 = vperm.xlu0 %1855, %v1768
    %v1857 = vpop.permute.xlu0 %1856
    %1859 = vset.pattern.permute.xlu0 1
    %1860 = vperm.xlu0 %1859, %v1769
    %v1861 = vpop.permute.xlu0 %1860
    %1863 = vset.pattern.permute.xlu0 1
    %1864 = vperm.xlu0 %1863, %v1770
    %v1865 = vpop.permute.xlu0 %1864
    %1867 = vset.pattern.permute.xlu0 1
    %1868 = vperm.xlu0 %1867, %v1771
    %v1869 = vpop.permute.xlu0 %1868
    %1871 = vset.pattern.permute.xlu0 1
    %1872 = vperm.xlu0 %1871, %v1772
    %v1873 = vpop.permute.xlu0 %1872
    %1875 = vset.pattern.permute.xlu0 1
    %1876 = vperm.xlu0 %1875, %v1773
    %v1877 = vpop.permute.xlu0 %1876
    %1879 = vset.pattern.permute.xlu0 1
    %1880 = vperm.xlu0 %1879, %v1774
    %v1881 = vpop.permute.xlu0 %1880
    %1883 = vset.pattern.permute.xlu0 1
    %1884 = vperm.xlu0 %1883, %v1775
    %v1885 = vpop.permute.xlu0 %1884
    %1887 = vset.pattern.permute.xlu0 1
    %1888 = vperm.xlu0 %1887, %v1776
    %v1889 = vpop.permute.xlu0 %1888
    %1891 = vset.pattern.permute.xlu0 1
    %1892 = vperm.xlu0 %1891, %v1777
    %v1893 = vpop.permute.xlu0 %1892
    %1895 = vset.pattern.permute.xlu0 1
    %1896 = vperm.xlu0 %1895, %v1778
    %v1897 = vpop.permute.xlu0 %1896
    %v1899 = vadd.f32 %v1839, %v1853
    %v1900 = vadd.f32 %v1840, %v1857
    %v1901 = vadd.f32 %v1841, %v1861
    %v1902 = vadd.f32 %v1842, %v1865
    %v1903 = vadd.f32 %v1843, %v1869
    %v1904 = vadd.f32 %v1844, %v1873
    %v1905 = vadd.f32 %v1845, %v1877
    %v1906 = vadd.f32 %v1846, %v1881
    %v1907 = vadd.f32 %v1847, %v1885
    %v1908 = vadd.f32 %v1848, %v1889
    %v1909 = vadd.f32 %v1849, %v1893
    %v1910 = vadd.f32 %v1850, %v1897
    %v1911 = vmax.f32 %v1899, 0.0
    %v1912 = vmax.f32 %v1900, 0.0
    %v1913 = vmax.f32 %v1901, 0.0
    %v1914 = vmax.f32 %v1902, 0.0
    %v1915 = vmax.f32 %v1903, 0.0
    %v1916 = vmax.f32 %v1904, 0.0
    %v1917 = vmax.f32 %v1905, 0.0
    %v1918 = vmax.f32 %v1906, 0.0
    %v1919 = vmax.f32 %v1907, 0.0
    %v1920 = vmax.f32 %v1908, 0.0
    %v1921 = vmax.f32 %v1909, 0.0
    %v1922 = vmax.f32 %v1910, 0.0
    %v1923 = vld [vmem:[#allocation7] sm:$0xf]
    %v1924 = vld [vmem:[#allocation7 + $0x4] sm:$0xf]
    %v1925 = vld [vmem:[#allocation7 + $0x8] sm:$0xf]
    %v1926 = vld [vmem:[#allocation7 + $0xc] sm:$0xf]
    %v1927 = vld [vmem:[#allocation7 + $0x10] sm:$0xf]
    %v1928 = vld [vmem:[#allocation7 + $0x14] sm:$0xf]
    %v1929 = vld [vmem:[#allocation7 + $0x18] sm:$0xf]
    %v1930 = vld [vmem:[#allocation7 + $0x1c] sm:$0xf]
    %v1931 = vld [vmem:[#allocation7 + $0x20] sm:$0xf]
    %v1932 = vld [vmem:[#allocation7 + $0x24] sm:$0xf]
    %v1933 = vld [vmem:[#allocation7 + $0x28] sm:$0xf]
    %v1934 = vld [vmem:[#allocation7 + $0x2c] sm:$0xf]
    %v1935 = vld [vmem:[#allocation7 + $0x30] sm:$0xf]
    %v1936 = vld [vmem:[#allocation7 + $0x34] sm:$0xf]
    %v1937 = vld [vmem:[#allocation7 + $0x38] sm:$0xf]
    %v1938 = vld [vmem:[#allocation7 + $0x3c] sm:$0xf]
    %v1939 = vld [vmem:[#allocation7 + $0x40] sm:$0xf]
    %v1940 = vld [vmem:[#allocation7 + $0x44] sm:$0xf]
    %v1941 = vld [vmem:[#allocation7 + $0x48] sm:$0xf]
    %v1942 = vld [vmem:[#allocation7 + $0x4c] sm:$0xf]
    %v1943 = vld [vmem:[#allocation7 + $0x50] sm:$0xf]
    %v1944 = vld [vmem:[#allocation7 + $0x54] sm:$0xf]
    %v1945 = vld [vmem:[#allocation7 + $0x58] sm:$0xf]
    %v1946 = vld [vmem:[#allocation7 + $0x5c] sm:$0xf]
    %v1947 = vpack.c.bf16 %v1912, %v1911
    %v1948 = vpack.c.bf16 %v1914, %v1913
    %v1949 = vpack.c.bf16 %v1916, %v1915
    %v1950 = vpack.c.bf16 %v1918, %v1917
    %v1951 = vpack.c.bf16 %v1920, %v1919
    %v1952 = vpack.c.bf16 %v1922, %v1921
    %v1953 = vld [vmem:[%s9] sm:$0xf]
    %v1954 = vld [vmem:[%s9 + $0x4] sm:$0xf]
    %v1955 = vld [vmem:[%s9 + $0x8] sm:$0xf]
    %v1956 = vld [vmem:[%s9 + $0xc] sm:$0xf]
    %v1961 = vunpack.c.l.b16 %v1953
    %v1962 = vunpack.c.l.b16 %v1954
    %v1963 = vunpack.c.l.b16 %v1955
    %v1964 = vunpack.c.l.b16 %v1956
    %v1965 = vpack.c.b16 %v1962, %v1961
    %v1966 = vpack.c.b16 %v1964, %v1963
    %v1970 = vsel %vm765, %v1947, 0
    %v1973 = vsel %vm765, %v1948, 0
    %v1976 = vsel %vm765, %v1949, 0
    %v1979 = vsel %vm765, %v1950, 0
    %v1982 = vsel %vm765, %v1951, 0
    %v1985 = vsel %vm765, %v1952, 0
    %1987 = vmatprep.subr.bf16.mxu0 0
    %1988 = vmatpush1.bf16.msra.mxu0 %v1965
    %1989 = vmatprep.subr.bf16.mxu0 0
    %1990 = vmatpush1.bf16.msra.mxu0 %v1966
    %1991 = vmatprep.subr.bf16.mxu0 0
    %1992 = vmatpush1.bf16.msra.mxu0 0
    %1993 = vmatprep.subr.bf16.mxu0 0
    %1994 = vmatpush1.bf16.msra.mxu0 0
    %1995 = vmatprep.subr.bf16.mxu0 0
    %1996 = vmatpush1.bf16.msra.mxu0 0
    %1997 = vmatprep.subr.bf16.mxu0 0
    %1998 = vmatpush1.bf16.msra.mxu0 0
    %1999 = vmatprep.subr.bf16.mxu0 0
    %2000 = vmatpush1.bf16.msra.mxu0 0
    %2001 = vmatprep.subr.bf16.mxu0 0
    %2002 = vmatpush1.bf16.msra.mxu0 0
    %2003 = vmatprep.subr.bf16.mxu0 0
    %2004 = vmatpush1.bf16.msra.mxu0 0
    %2005 = vmatprep.subr.bf16.mxu0 0
    %2006 = vmatpush1.bf16.msra.mxu0 0
    %2007 = vmatprep.subr.bf16.mxu0 0
    %2008 = vmatpush1.bf16.msra.mxu0 0
    %2009 = vmatprep.subr.bf16.mxu0 0
    %2010 = vmatpush1.bf16.msra.mxu0 0
    %2011 = vmatprep.subr.bf16.mxu0 0
    %2012 = vmatpush1.bf16.msra.mxu0 0
    %2013 = vmatprep.subr.bf16.mxu0 0
    %2014 = vmatpush1.bf16.msra.mxu0 0
    %2015 = vmatprep.subr.bf16.mxu0 0
    %2016 = vmatpush1.bf16.msra.mxu0 0
    %2017 = vmatprep.subr.bf16.mxu0 0
    %2018 = vmatpush1.bf16.msra.mxu0 0
    %2019 = vmatprep.mubr.bf16.mxu0 0
    %2020 = vmatmul.mubr.bf16.gmra.mrb[0].mxu0 %v1970
    %v2021 = vpop.f32.mrb[0].mxu0
    %v2022 = vadd.f32 0.0, %v2021
    %v2023 = vpop.f32.mrb[0].mxu0
    %v2024 = vpop.f32.mrb[0].mxu0
    %v2025 = vadd.f32 0.0, %v2024
    %v2026 = vpop.f32.mrb[0].mxu0
    %2027 = vmatprep.mubr.bf16.mxu0 0
    %2028 = vmatmul.mubr.bf16.gmra.mrb[0].mxu0 %v1973
    %v2029 = vpop.f32.mrb[0].mxu0
    %v2030 = vadd.f32 0.0, %v2029
    %v2031 = vpop.f32.mrb[0].mxu0
    %v2032 = vpop.f32.mrb[0].mxu0
    %v2033 = vadd.f32 0.0, %v2032
    %v2034 = vpop.f32.mrb[0].mxu0
    %2035 = vmatprep.mubr.bf16.mxu0 0
    %2036 = vmatmul.mubr.bf16.gmra.mrb[0].mxu0 %v1976
    %v2037 = vpop.f32.mrb[0].mxu0
    %v2038 = vadd.f32 0.0, %v2037
    %v2039 = vpop.f32.mrb[0].mxu0
    %v2040 = vpop.f32.mrb[0].mxu0
    %v2041 = vadd.f32 0.0, %v2040
    %v2042 = vpop.f32.mrb[0].mxu0
    %2043 = vmatprep.mubr.bf16.mxu0 0
    %2044 = vmatmul.mubr.bf16.gmra.mrb[0].mxu0 %v1979
    %v2045 = vpop.f32.mrb[0].mxu0
    %v2046 = vadd.f32 0.0, %v2045
    %v2047 = vpop.f32.mrb[0].mxu0
    %v2048 = vpop.f32.mrb[0].mxu0
    %v2049 = vadd.f32 0.0, %v2048
    %v2050 = vpop.f32.mrb[0].mxu0
    %2051 = vmatprep.mubr.bf16.mxu0 0
    %2052 = vmatmul.mubr.bf16.gmra.mrb[0].mxu0 %v1982
    %v2053 = vpop.f32.mrb[0].mxu0
    %v2054 = vadd.f32 0.0, %v2053
    %v2055 = vpop.f32.mrb[0].mxu0
    %v2056 = vpop.f32.mrb[0].mxu0
    %v2057 = vadd.f32 0.0, %v2056
    %v2058 = vpop.f32.mrb[0].mxu0
    %2059 = vmatprep.mubr.bf16.mxu0 0
    %2060 = vmatmul.mubr.bf16.gmra.mrb[0].mxu0 %v1985
    %v2061 = vpop.f32.mrb[0].mxu0
    %v2062 = vadd.f32 0.0, %v2061
    %v2063 = vpop.f32.mrb[0].mxu0
    %v2064 = vpop.f32.mrb[0].mxu0
    %v2065 = vadd.f32 0.0, %v2064
    %v2066 = vpop.f32.mrb[0].mxu0
    %2067 = vdwg.mxu0
    %v2068 = vpack.c.bf16 %v2025, %v2022
    %v2069 = vpack.c.bf16 %v2033, %v2030
    %v2070 = vpack.c.bf16 %v2041, %v2038
    %v2071 = vpack.c.bf16 %v2049, %v2046
    %v2072 = vpack.c.bf16 %v2057, %v2054
    %v2073 = vpack.c.bf16 %v2065, %v2062
    %v2098 = vunpack.c.l.b16 %v1923
    %v2099 = vunpack.c.l.b16 %v1924
    %v2100 = vunpack.c.l.b16 %v1925
    %v2101 = vunpack.c.l.b16 %v1926
    %v2102 = vunpack.c.l.b16 %v1927
    %v2103 = vunpack.c.l.b16 %v1928
    %v2104 = vunpack.c.l.b16 %v1929
    %v2105 = vunpack.c.l.b16 %v1930
    %v2106 = vunpack.c.l.b16 %v1931
    %v2107 = vunpack.c.l.b16 %v1932
    %v2108 = vunpack.c.l.b16 %v1933
    %v2109 = vunpack.c.l.b16 %v1934
    %v2110 = vunpack.c.l.b16 %v1935
    %v2111 = vunpack.c.l.b16 %v1936
    %v2112 = vunpack.c.l.b16 %v1937
    %v2113 = vunpack.c.l.b16 %v1938
    %v2114 = vunpack.c.l.b16 %v1939
    %v2115 = vunpack.c.l.b16 %v1940
    %v2116 = vunpack.c.l.b16 %v1941
    %v2117 = vunpack.c.l.b16 %v1942
    %v2118 = vunpack.c.l.b16 %v1943
    %v2119 = vunpack.c.l.b16 %v1944
    %v2120 = vunpack.c.l.b16 %v1945
    %v2121 = vunpack.c.l.b16 %v1946
    %v2122 = vpack.c.b16 %v2099, %v2098
    %v2123 = vpack.c.b16 %v2101, %v2100
    %v2124 = vpack.c.b16 %v2103, %v2102
    %v2125 = vpack.c.b16 %v2105, %v2104
    %v2126 = vpack.c.b16 %v2107, %v2106
    %v2127 = vpack.c.b16 %v2109, %v2108
    %v2128 = vpack.c.b16 %v2111, %v2110
    %v2129 = vpack.c.b16 %v2113, %v2112
    %v2130 = vpack.c.b16 %v2115, %v2114
    %v2131 = vpack.c.b16 %v2117, %v2116
    %v2132 = vpack.c.b16 %v2119, %v2118
    %v2133 = vpack.c.b16 %v2121, %v2120
    %vm2134 = vcmask 785408
    %v2136 = vsel %vm2134, %v2122, 0
    %v2139 = vsel %vm2134, %v2123, 0
    %v2142 = vsel %vm2134, %v2124, 0
    %v2145 = vsel %vm2134, %v2125, 0
    %v2148 = vsel %vm2134, %v2126, 0
    %v2151 = vsel %vm2134, %v2127, 0
    %v2154 = vsel %vm2134, %v2128, 0
    %v2157 = vsel %vm2134, %v2129, 0
    %v2160 = vsel %vm2134, %v2130, 0
    %v2163 = vsel %vm2134, %v2131, 0
    %v2166 = vsel %vm2134, %v2132, 0
    %v2169 = vsel %vm2134, %v2133, 0
    %2171 = vmatprep.subr.bf16.mxu0 0
    %2172 = vmatpush1.bf16.msra.mxu0 %v2068
    %2173 = vmatprep.subr.bf16.mxu0 0
    %2174 = vmatpush1.bf16.msra.mxu0 %v2069
    %2175 = vmatprep.subr.bf16.mxu0 0
    %2176 = vmatpush1.bf16.msra.mxu0 %v2070
    %2177 = vmatprep.subr.bf16.mxu0 0
    %2178 = vmatpush1.bf16.msra.mxu0 %v2071
    %2179 = vmatprep.subr.bf16.mxu0 0
    %2180 = vmatpush1.bf16.msra.mxu0 %v2072
    %2181 = vmatprep.subr.bf16.mxu0 0
    %2182 = vmatpush1.bf16.msra.mxu0 %v2073
    %2183 = vmatprep.subr.bf16.mxu0 0
    %2184 = vmatpush1.bf16.msra.mxu0 0
    %2185 = vmatprep.subr.bf16.mxu0 0
    %2186 = vmatpush1.bf16.msra.mxu0 0
    %2187 = vmatprep.subr.bf16.mxu0 0
    %2188 = vmatpush1.bf16.msra.mxu0 0
    %2189 = vmatprep.subr.bf16.mxu0 0
    %2190 = vmatpush1.bf16.msra.mxu0 0
    %2191 = vmatprep.subr.bf16.mxu0 0
    %2192 = vmatpush1.bf16.msra.mxu0 0
    %2193 = vmatprep.subr.bf16.mxu0 0
    %2194 = vmatpush1.bf16.msra.mxu0 0
    %2195 = vmatprep.subr.bf16.mxu0 0
    %2196 = vmatpush1.bf16.msra.mxu0 0
    %2197 = vmatprep.subr.bf16.mxu0 0
    %2198 = vmatpush1.bf16.msra.mxu0 0
    %2199 = vmatprep.subr.bf16.mxu0 0
    %2200 = vmatpush1.bf16.msra.mxu0 0
    %2201 = vmatprep.subr.bf16.mxu0 0
    %2202 = vmatpush1.bf16.msra.mxu0 0
    %2203 = vmatprep.mubr.bf16.mxu0 0
    %2204 = vmatmul.mubr.bf16.gmra.mrb[0].mxu0 %v2136
    %v2205 = vpop.f32.mrb[0].mxu0
    %v2206 = vadd.f32 0.0, %v2205
    %v2207 = vpop.f32.mrb[0].mxu0
    %v2208 = vpop.f32.mrb[0].mxu0
    %v2209 = vadd.f32 0.0, %v2208
    %v2210 = vpop.f32.mrb[0].mxu0
    %2211 = vmatprep.mubr.bf16.mxu0 0
    %2212 = vmatmul.mubr.bf16.gmra.mrb[0].mxu0 %v2139
    %v2213 = vpop.f32.mrb[0].mxu0
    %v2214 = vadd.f32 0.0, %v2213
    %v2215 = vpop.f32.mrb[0].mxu0
    %v2216 = vpop.f32.mrb[0].mxu0
    %v2217 = vadd.f32 0.0, %v2216
    %v2218 = vpop.f32.mrb[0].mxu0
    %2219 = vmatprep.mubr.bf16.mxu0 0
    %2220 = vmatmul.mubr.bf16.gmra.mrb[0].mxu0 %v2142
    %v2221 = vpop.f32.mrb[0].mxu0
    %v2222 = vadd.f32 0.0, %v2221
    %v2223 = vpop.f32.mrb[0].mxu0
    %v2224 = vpop.f32.mrb[0].mxu0
    %v2225 = vadd.f32 0.0, %v2224
    %v2226 = vpop.f32.mrb[0].mxu0
    %2227 = vmatprep.mubr.bf16.mxu0 0
    %2228 = vmatmul.mubr.bf16.gmra.mrb[0].mxu0 %v2145
    %v2229 = vpop.f32.mrb[0].mxu0
    %v2230 = vadd.f32 0.0, %v2229
    %v2231 = vpop.f32.mrb[0].mxu0
    %v2232 = vpop.f32.mrb[0].mxu0
    %v2233 = vadd.f32 0.0, %v2232
    %v2234 = vpop.f32.mrb[0].mxu0
    %2235 = vmatprep.mubr.bf16.mxu0 0
    %2236 = vmatmul.mubr.bf16.gmra.mrb[0].mxu0 %v2148
    %v2237 = vpop.f32.mrb[0].mxu0
    %v2238 = vadd.f32 0.0, %v2237
    %v2239 = vpop.f32.mrb[0].mxu0
    %v2240 = vpop.f32.mrb[0].mxu0
    %v2241 = vadd.f32 0.0, %v2240
    %v2242 = vpop.f32.mrb[0].mxu0
    %2243 = vmatprep.mubr.bf16.mxu0 0
    %2244 = vmatmul.mubr.bf16.gmra.mrb[0].mxu0 %v2151
    %v2245 = vpop.f32.mrb[0].mxu0
    %v2246 = vadd.f32 0.0, %v2245
    %v2247 = vpop.f32.mrb[0].mxu0
    %v2248 = vpop.f32.mrb[0].mxu0
    %v2249 = vadd.f32 0.0, %v2248
    %v2250 = vpop.f32.mrb[0].mxu0
    %2251 = vmatprep.mubr.bf16.mxu0 0
    %2252 = vmatmul.mubr.bf16.gmra.mrb[0].mxu0 %v2154
    %v2253 = vpop.f32.mrb[0].mxu0
    %v2254 = vadd.f32 0.0, %v2253
    %v2255 = vpop.f32.mrb[0].mxu0
    %v2256 = vpop.f32.mrb[0].mxu0
    %v2257 = vadd.f32 0.0, %v2256
    %v2258 = vpop.f32.mrb[0].mxu0
    %2259 = vmatprep.mubr.bf16.mxu0 0
    %2260 = vmatmul.mubr.bf16.gmra.mrb[0].mxu0 %v2157
    %v2261 = vpop.f32.mrb[0].mxu0
    %v2262 = vadd.f32 0.0, %v2261
    %v2263 = vpop.f32.mrb[0].mxu0
    %v2264 = vpop.f32.mrb[0].mxu0
    %v2265 = vadd.f32 0.0, %v2264
    %v2266 = vpop.f32.mrb[0].mxu0
    %2267 = vmatprep.mubr.bf16.mxu0 0
    %2268 = vmatmul.mubr.bf16.gmra.mrb[0].mxu0 %v2160
    %v2269 = vpop.f32.mrb[0].mxu0
    %v2270 = vadd.f32 0.0, %v2269
    %v2271 = vpop.f32.mrb[0].mxu0
    %v2272 = vpop.f32.mrb[0].mxu0
    %v2273 = vadd.f32 0.0, %v2272
    %v2274 = vpop.f32.mrb[0].mxu0
    %2275 = vmatprep.mubr.bf16.mxu0 0
    %2276 = vmatmul.mubr.bf16.gmra.mrb[0].mxu0 %v2163
    %v2277 = vpop.f32.mrb[0].mxu0
    %v2278 = vadd.f32 0.0, %v2277
    %v2279 = vpop.f32.mrb[0].mxu0
    %v2280 = vpop.f32.mrb[0].mxu0
    %v2281 = vadd.f32 0.0, %v2280
    %v2282 = vpop.f32.mrb[0].mxu0
    %2283 = vmatprep.mubr.bf16.mxu0 0
    %2284 = vmatmul.mubr.bf16.gmra.mrb[0].mxu0 %v2166
    %v2285 = vpop.f32.mrb[0].mxu0
    %v2286 = vadd.f32 0.0, %v2285
    %v2287 = vpop.f32.mrb[0].mxu0
    %v2288 = vpop.f32.mrb[0].mxu0
    %v2289 = vadd.f32 0.0, %v2288
    %v2290 = vpop.f32.mrb[0].mxu0
    %2291 = vmatprep.mubr.bf16.mxu0 0
    %2292 = vmatmul.mubr.bf16.gmra.mrb[0].mxu0 %v2169
    %v2293 = vpop.f32.mrb[0].mxu0
    %v2294 = vadd.f32 0.0, %v2293
    %v2295 = vpop.f32.mrb[0].mxu0
    %v2296 = vpop.f32.mrb[0].mxu0
    %v2297 = vadd.f32 0.0, %v2296
    %v2298 = vpop.f32.mrb[0].mxu0
    %2299 = vdwg.mxu0
    %v2300 = vld [vmem:[%s10] sm:$0xff]
    %v2301 = vld [vmem:[%s10 + $0x8] sm:$0xff]
    %v2302 = vld [vmem:[%s10 + $0x10] sm:$0xff]
    %v2303 = vld [vmem:[%s10 + $0x18] sm:$0xff]
    %v2304 = vld [vmem:[%s10 + $0x20] sm:$0xff]
    %v2305 = vld [vmem:[%s10 + $0x28] sm:$0xff]
    %v2306 = vld [vmem:[%s10 + $0x30] sm:$0xff]
    %v2307 = vld [vmem:[%s10 + $0x38] sm:$0xff]
    %v2308 = vld [vmem:[%s10 + $0x40] sm:$0xff]
    %v2309 = vld [vmem:[%s10 + $0x48] sm:$0xff]
    %v2310 = vld [vmem:[%s10 + $0x50] sm:$0xff]
    %v2311 = vld [vmem:[%s10 + $0x58] sm:$0xff]
    %v2312 = vld [vmem:[%s10 + $0x60] sm:$0xff]
    %v2313 = vld [vmem:[%s10 + $0x68] sm:$0xff]
    %v2314 = vld [vmem:[%s10 + $0x70] sm:$0xff]
    %v2315 = vld [vmem:[%s10 + $0x78] sm:$0xff]
    %v2316 = vld [vmem:[%s10 + $0x80] sm:$0xff]
    %v2317 = vld [vmem:[%s10 + $0x88] sm:$0xff]
    %v2318 = vld [vmem:[%s10 + $0x90] sm:$0xff]
    %v2319 = vld [vmem:[%s10 + $0x98] sm:$0xff]
    %v2320 = vld [vmem:[%s10 + $0xa0] sm:$0xff]
    %v2321 = vld [vmem:[%s10 + $0xa8] sm:$0xff]
    %v2322 = vld [vmem:[%s10 + $0xb0] sm:$0xff]
    %v2323 = vld [vmem:[%s10 + $0xb8] sm:$0xff]
    %v2324 = vld [vmem:[%s10 + $0xc0] sm:$0xff]
    %v2325 = vld [vmem:[%s10 + $0xc8] sm:$0xff]
    %v2326 = vld [vmem:[%s10 + $0xd0] sm:$0xff]
    %v2327 = vld [vmem:[%s10 + $0xd8] sm:$0xff]
    %v2328 = vld [vmem:[%s10 + $0xe0] sm:$0xff]
    %v2329 = vld [vmem:[%s10 + $0xe8] sm:$0xff]
    %v2330 = vld [vmem:[%s10 + $0xf0] sm:$0xff]
    %v2331 = vld [vmem:[%s10 + $0xf8] sm:$0xff]
    %v2332 = vld [vmem:[%s10 + $0x100] sm:$0xff]
    %v2333 = vld [vmem:[%s10 + $0x108] sm:$0xff]
    %v2334 = vld [vmem:[%s10 + $0x110] sm:$0xff]
    %v2335 = vld [vmem:[%s10 + $0x118] sm:$0xff]
    %v2336 = vld [vmem:[%s10 + $0x120] sm:$0xff]
    %v2337 = vld [vmem:[%s10 + $0x128] sm:$0xff]
    %v2338 = vld [vmem:[%s10 + $0x130] sm:$0xff]
    %v2339 = vld [vmem:[%s10 + $0x138] sm:$0xff]
    %v2340 = vld [vmem:[%s10 + $0x140] sm:$0xff]
    %v2341 = vld [vmem:[%s10 + $0x148] sm:$0xff]
    %v2342 = vld [vmem:[%s10 + $0x150] sm:$0xff]
    %v2343 = vld [vmem:[%s10 + $0x158] sm:$0xff]
    %v2344 = vld [vmem:[%s10 + $0x160] sm:$0xff]
    %v2345 = vld [vmem:[%s10 + $0x168] sm:$0xff]
    %v2346 = vld [vmem:[%s10 + $0x170] sm:$0xff]
    %v2347 = vld [vmem:[%s10 + $0x178] sm:$0xff]
    %v2348 = vpack.c.bf16 %v2209, %v2206
    %v2349 = vpack.c.bf16 %v2217, %v2214
    %v2350 = vpack.c.bf16 %v2225, %v2222
    %v2351 = vpack.c.bf16 %v2233, %v2230
    %v2352 = vpack.c.bf16 %v2241, %v2238
    %v2353 = vpack.c.bf16 %v2249, %v2246
    %v2354 = vpack.c.bf16 %v2257, %v2254
    %v2355 = vpack.c.bf16 %v2265, %v2262
    %v2356 = vpack.c.bf16 %v2273, %v2270
    %v2357 = vpack.c.bf16 %v2281, %v2278
    %v2358 = vpack.c.bf16 %v2289, %v2286
    %v2359 = vpack.c.bf16 %v2297, %v2294
    %v2408 = vunpack.c.l.b16 %v2300
    %v2409 = vunpack.c.h.b16 %v2300
    %v2410 = vunpack.c.l.b16 %v2301
    %v2411 = vunpack.c.h.b16 %v2301
    %v2412 = vunpack.c.l.b16 %v2302
    %v2413 = vunpack.c.h.b16 %v2302
    %v2414 = vunpack.c.l.b16 %v2303
    %v2415 = vunpack.c.h.b16 %v2303
    %v2416 = vunpack.c.l.b16 %v2304
    %v2417 = vunpack.c.h.b16 %v2304
    %v2418 = vunpack.c.l.b16 %v2305
    %v2419 = vunpack.c.h.b16 %v2305
    %v2420 = vunpack.c.l.b16 %v2306
    %v2421 = vunpack.c.h.b16 %v2306
    %v2422 = vunpack.c.l.b16 %v2307
    %v2423 = vunpack.c.h.b16 %v2307
    %v2424 = vunpack.c.l.b16 %v2308
    %v2425 = vunpack.c.h.b16 %v2308
    %v2426 = vunpack.c.l.b16 %v2309
    %v2427 = vunpack.c.h.b16 %v2309
    %v2428 = vunpack.c.l.b16 %v2310
    %v2429 = vunpack.c.h.b16 %v2310
    %v2430 = vunpack.c.l.b16 %v2311
    %v2431 = vunpack.c.h.b16 %v2311
    %v2432 = vunpack.c.l.b16 %v2312
    %v2433 = vunpack.c.h.b16 %v2312
    %v2434 = vunpack.c.l.b16 %v2313
    %v2435 = vunpack.c.h.b16 %v2313
    %v2436 = vunpack.c.l.b16 %v2314
    %v2437 = vunpack.c.h.b16 %v2314
    %v2438 = vunpack.c.l.b16 %v2315
    %v2439 = vunpack.c.h.b16 %v2315
    %v2440 = vunpack.c.l.b16 %v2316
    %v2441 = vunpack.c.h.b16 %v2316
    %v2442 = vunpack.c.l.b16 %v2317
    %v2443 = vunpack.c.h.b16 %v2317
    %v2444 = vunpack.c.l.b16 %v2318
    %v2445 = vunpack.c.h.b16 %v2318
    %v2446 = vunpack.c.l.b16 %v2319
    %v2447 = vunpack.c.h.b16 %v2319
    %v2448 = vunpack.c.l.b16 %v2320
    %v2449 = vunpack.c.h.b16 %v2320
    %v2450 = vunpack.c.l.b16 %v2321
    %v2451 = vunpack.c.h.b16 %v2321
    %v2452 = vunpack.c.l.b16 %v2322
    %v2453 = vunpack.c.h.b16 %v2322
    %v2454 = vunpack.c.l.b16 %v2323
    %v2455 = vunpack.c.h.b16 %v2323
    %v2456 = vunpack.c.l.b16 %v2324
    %v2457 = vunpack.c.h.b16 %v2324
    %v2458 = vunpack.c.l.b16 %v2325
    %v2459 = vunpack.c.h.b16 %v2325
    %v2460 = vunpack.c.l.b16 %v2326
    %v2461 = vunpack.c.h.b16 %v2326
    %v2462 = vunpack.c.l.b16 %v2327
    %v2463 = vunpack.c.h.b16 %v2327
    %v2464 = vunpack.c.l.b16 %v2328
    %v2465 = vunpack.c.h.b16 %v2328
    %v2466 = vunpack.c.l.b16 %v2329
    %v2467 = vunpack.c.h.b16 %v2329
    %v2468 = vunpack.c.l.b16 %v2330
    %v2469 = vunpack.c.h.b16 %v2330
    %v2470 = vunpack.c.l.b16 %v2331
    %v2471 = vunpack.c.h.b16 %v2331
    %v2472 = vunpack.c.l.b16 %v2332
    %v2473 = vunpack.c.h.b16 %v2332
    %v2474 = vunpack.c.l.b16 %v2333
    %v2475 = vunpack.c.h.b16 %v2333
    %v2476 = vunpack.c.l.b16 %v2334
    %v2477 = vunpack.c.h.b16 %v2334
    %v2478 = vunpack.c.l.b16 %v2335
    %v2479 = vunpack.c.h.b16 %v2335
    %v2480 = vunpack.c.l.b16 %v2336
    %v2481 = vunpack.c.h.b16 %v2336
    %v2482 = vunpack.c.l.b16 %v2337
    %v2483 = vunpack.c.h.b16 %v2337
    %v2484 = vunpack.c.l.b16 %v2338
    %v2485 = vunpack.c.h.b16 %v2338
    %v2486 = vunpack.c.l.b16 %v2339
    %v2487 = vunpack.c.h.b16 %v2339
    %v2488 = vunpack.c.l.b16 %v2340
    %v2489 = vunpack.c.h.b16 %v2340
    %v2490 = vunpack.c.l.b16 %v2341
    %v2491 = vunpack.c.h.b16 %v2341
    %v2492 = vunpack.c.l.b16 %v2342
    %v2493 = vunpack.c.h.b16 %v2342
    %v2494 = vunpack.c.l.b16 %v2343
    %v2495 = vunpack.c.h.b16 %v2343
    %v2496 = vunpack.c.l.b16 %v2344
    %v2497 = vunpack.c.h.b16 %v2344
    %v2498 = vunpack.c.l.b16 %v2345
    %v2499 = vunpack.c.h.b16 %v2345
    %v2500 = vunpack.c.l.b16 %v2346
    %v2501 = vunpack.c.h.b16 %v2346
    %v2502 = vunpack.c.l.b16 %v2347
    %v2503 = vunpack.c.h.b16 %v2347
    %v2504 = vpack.c.b16 %v2410, %v2408
    %v2505 = vpack.c.b16 %v2411, %v2409
    %v2506 = vpack.c.b16 %v2414, %v2412
    %v2507 = vpack.c.b16 %v2415, %v2413
    %v2508 = vpack.c.b16 %v2418, %v2416
    %v2509 = vpack.c.b16 %v2419, %v2417
    %v2510 = vpack.c.b16 %v2422, %v2420
    %v2511 = vpack.c.b16 %v2423, %v2421
    %v2512 = vpack.c.b16 %v2426, %v2424
    %v2513 = vpack.c.b16 %v2427, %v2425
    %v2514 = vpack.c.b16 %v2430, %v2428
    %v2515 = vpack.c.b16 %v2431, %v2429
    %v2516 = vpack.c.b16 %v2434, %v2432
    %v2517 = vpack.c.b16 %v2435, %v2433
    %v2518 = vpack.c.b16 %v2438, %v2436
    %v2519 = vpack.c.b16 %v2439, %v2437
    %v2520 = vpack.c.b16 %v2442, %v2440
    %v2521 = vpack.c.b16 %v2443, %v2441
    %v2522 = vpack.c.b16 %v2446, %v2444
    %v2523 = vpack.c.b16 %v2447, %v2445
    %v2524 = vpack.c.b16 %v2450, %v2448
    %v2525 = vpack.c.b16 %v2451, %v2449
    %v2526 = vpack.c.b16 %v2454, %v2452
    %v2527 = vpack.c.b16 %v2455, %v2453
    %v2528 = vpack.c.b16 %v2458, %v2456
    %v2529 = vpack.c.b16 %v2459, %v2457
    %v2530 = vpack.c.b16 %v2462, %v2460
    %v2531 = vpack.c.b16 %v2463, %v2461
    %v2532 = vpack.c.b16 %v2466, %v2464
    %v2533 = vpack.c.b16 %v2467, %v2465
    %v2534 = vpack.c.b16 %v2470, %v2468
    %v2535 = vpack.c.b16 %v2471, %v2469
    %v2536 = vpack.c.b16 %v2474, %v2472
    %v2537 = vpack.c.b16 %v2475, %v2473
    %v2538 = vpack.c.b16 %v2478, %v2476
    %v2539 = vpack.c.b16 %v2479, %v2477
    %v2540 = vpack.c.b16 %v2482, %v2480
    %v2541 = vpack.c.b16 %v2483, %v2481
    %v2542 = vpack.c.b16 %v2486, %v2484
    %v2543 = vpack.c.b16 %v2487, %v2485
    %v2544 = vpack.c.b16 %v2490, %v2488
    %v2545 = vpack.c.b16 %v2491, %v2489
    %v2546 = vpack.c.b16 %v2494, %v2492
    %v2547 = vpack.c.b16 %v2495, %v2493
    %v2548 = vpack.c.b16 %v2498, %v2496
    %v2549 = vpack.c.b16 %v2499, %v2497
    %v2550 = vpack.c.b16 %v2502, %v2500
    %v2551 = vpack.c.b16 %v2503, %v2501
    %v2577 = vsel %vm310, %v2505, 0
    %v2580 = vsel %vm310, %v2507, 0
    %v2583 = vsel %vm310, %v2509, 0
    %v2586 = vsel %vm310, %v2511, 0
    %v2589 = vsel %vm310, %v2513, 0
    %v2592 = vsel %vm310, %v2515, 0
    %v2595 = vsel %vm310, %v2517, 0
    %v2598 = vsel %vm310, %v2519, 0
    %v2601 = vsel %vm310, %v2521, 0
    %v2604 = vsel %vm310, %v2523, 0
    %v2607 = vsel %vm310, %v2525, 0
    %v2610 = vsel %vm310, %v2527, 0
    %v2613 = vsel %vm310, %v2529, 0
    %v2616 = vsel %vm310, %v2531, 0
    %v2619 = vsel %vm310, %v2533, 0
    %v2622 = vsel %vm310, %v2535, 0
    %v2625 = vsel %vm310, %v2537, 0
    %v2628 = vsel %vm310, %v2539, 0
    %v2631 = vsel %vm310, %v2541, 0
    %v2634 = vsel %vm310, %v2543, 0
    %v2637 = vsel %vm310, %v2545, 0
    %v2640 = vsel %vm310, %v2547, 0
    %v2643 = vsel %vm310, %v2549, 0
    %v2646 = vsel %vm310, %v2551, 0
    %2648 = vmatprep.subr.bf16.mxu0 0
    %2649 = vmatpush1.bf16.msra.mxu0 %v2348
    %2650 = vmatprep.subr.bf16.mxu0 0
    %2651 = vmatpush1.bf16.msra.mxu0 %v2349
    %2652 = vmatprep.subr.bf16.mxu0 0
    %2653 = vmatpush1.bf16.msra.mxu0 %v2350
    %2654 = vmatprep.subr.bf16.mxu0 0
    %2655 = vmatpush1.bf16.msra.mxu0 %v2351
    %2656 = vmatprep.subr.bf16.mxu0 0
    %2657 = vmatpush1.bf16.msra.mxu0 %v2352
    %2658 = vmatprep.subr.bf16.mxu0 0
    %2659 = vmatpush1.bf16.msra.mxu0 %v2353
    %2660 = vmatprep.subr.bf16.mxu0 0
    %2661 = vmatpush1.bf16.msra.mxu0 %v2354
    %2662 = vmatprep.subr.bf16.mxu0 0
    %2663 = vmatpush1.bf16.msra.mxu0 %v2355
    %2664 = vmatprep.subr.bf16.mxu0 0
    %2665 = vmatpush1.bf16.msra.mxu0 %v2356
    %2666 = vmatprep.subr.bf16.mxu0 0
    %2667 = vmatpush1.bf16.msra.mxu0 %v2357
    %2668 = vmatprep.subr.bf16.mxu0 0
    %2669 = vmatpush1.bf16.msra.mxu0 %v2358
    %2670 = vmatprep.subr.bf16.mxu0 0
    %2671 = vmatpush1.bf16.msra.mxu0 %v2359
    %2672 = vmatprep.subr.bf16.mxu0 0
    %2673 = vmatpush1.bf16.msra.mxu0 0
    %2674 = vmatprep.subr.bf16.mxu0 0
    %2675 = vmatpush1.bf16.msra.mxu0 0
    %2676 = vmatprep.subr.bf16.mxu0 0
    %2677 = vmatpush1.bf16.msra.mxu0 0
    %2678 = vmatprep.subr.bf16.mxu0 0
    %2679 = vmatpush1.bf16.msra.mxu0 0
    %2680 = vmatprep.mubr.bf16.mxu0 %v2577
    %2681 = vmatmul.mubr.bf16.gmra.mrb[0].mxu0 %v2504
    %v2682 = vpop.f32.mrb[0].mxu0
    %v2683 = vadd.f32 0.0, %v2682
    %v2684 = vpop.f32.mrb[0].mxu0
    %v2685 = vpop.f32.mrb[0].mxu0
    %v2686 = vadd.f32 0.0, %v2685
    %v2687 = vpop.f32.mrb[0].mxu0
    %2688 = vmatprep.mubr.bf16.mxu0 %v2580
    %2689 = vmatmul.mubr.bf16.gmra.mrb[0].mxu0 %v2506
    %v2690 = vpop.f32.mrb[0].mxu0
    %v2691 = vadd.f32 0.0, %v2690
    %v2692 = vpop.f32.mrb[0].mxu0
    %v2693 = vpop.f32.mrb[0].mxu0
    %v2694 = vadd.f32 0.0, %v2693
    %v2695 = vpop.f32.mrb[0].mxu0
    %2696 = vmatprep.mubr.bf16.mxu0 %v2583
    %2697 = vmatmul.mubr.bf16.gmra.mrb[0].mxu0 %v2508
    %v2698 = vpop.f32.mrb[0].mxu0
    %v2699 = vadd.f32 0.0, %v2698
    %v2700 = vpop.f32.mrb[0].mxu0
    %v2701 = vpop.f32.mrb[0].mxu0
    %v2702 = vadd.f32 0.0, %v2701
    %v2703 = vpop.f32.mrb[0].mxu0
    %2704 = vmatprep.mubr.bf16.mxu0 %v2586
    %2705 = vmatmul.mubr.bf16.gmra.mrb[0].mxu0 %v2510
    %v2706 = vpop.f32.mrb[0].mxu0
    %v2707 = vadd.f32 0.0, %v2706
    %v2708 = vpop.f32.mrb[0].mxu0
    %v2709 = vpop.f32.mrb[0].mxu0
    %v2710 = vadd.f32 0.0, %v2709
    %v2711 = vpop.f32.mrb[0].mxu0
    %2712 = vmatprep.mubr.bf16.mxu0 %v2589
    %2713 = vmatmul.mubr.bf16.gmra.mrb[0].mxu0 %v2512
    %v2714 = vpop.f32.mrb[0].mxu0
    %v2715 = vadd.f32 0.0, %v2714
    %v2716 = vpop.f32.mrb[0].mxu0
    %v2717 = vpop.f32.mrb[0].mxu0
    %v2718 = vadd.f32 0.0, %v2717
    %v2719 = vpop.f32.mrb[0].mxu0
    %2720 = vmatprep.mubr.bf16.mxu0 %v2592
    %2721 = vmatmul.mubr.bf16.gmra.mrb[0].mxu0 %v2514
    %v2722 = vpop.f32.mrb[0].mxu0
    %v2723 = vadd.f32 0.0, %v2722
    %v2724 = vpop.f32.mrb[0].mxu0
    %v2725 = vpop.f32.mrb[0].mxu0
    %v2726 = vadd.f32 0.0, %v2725
    %v2727 = vpop.f32.mrb[0].mxu0
    %2728 = vmatprep.mubr.bf16.mxu0 %v2595
    %2729 = vmatmul.mubr.bf16.gmra.mrb[0].mxu0 %v2516
    %v2730 = vpop.f32.mrb[0].mxu0
    %v2731 = vadd.f32 0.0, %v2730
    %v2732 = vpop.f32.mrb[0].mxu0
    %v2733 = vpop.f32.mrb[0].mxu0
    %v2734 = vadd.f32 0.0, %v2733
    %v2735 = vpop.f32.mrb[0].mxu0
    %2736 = vmatprep.mubr.bf16.mxu0 %v2598
    %2737 = vmatmul.mubr.bf16.gmra.mrb[0].mxu0 %v2518
    %v2738 = vpop.f32.mrb[0].mxu0
    %v2739 = vadd.f32 0.0, %v2738
    %v2740 = vpop.f32.mrb[0].mxu0
    %v2741 = vpop.f32.mrb[0].mxu0
    %v2742 = vadd.f32 0.0, %v2741
    %v2743 = vpop.f32.mrb[0].mxu0
    %2744 = vmatprep.mubr.bf16.mxu0 %v2601
    %2745 = vmatmul.mubr.bf16.gmra.mrb[0].mxu0 %v2520
    %v2746 = vpop.f32.mrb[0].mxu0
    %v2747 = vadd.f32 0.0, %v2746
    %v2748 = vpop.f32.mrb[0].mxu0
    %v2749 = vpop.f32.mrb[0].mxu0
    %v2750 = vadd.f32 0.0, %v2749
    %v2751 = vpop.f32.mrb[0].mxu0
    %2752 = vmatprep.mubr.bf16.mxu0 %v2604
    %2753 = vmatmul.mubr.bf16.gmra.mrb[0].mxu0 %v2522
    %v2754 = vpop.f32.mrb[0].mxu0
    %v2755 = vadd.f32 0.0, %v2754
    %v2756 = vpop.f32.mrb[0].mxu0
    %v2757 = vpop.f32.mrb[0].mxu0
    %v2758 = vadd.f32 0.0, %v2757
    %v2759 = vpop.f32.mrb[0].mxu0
    %2760 = vmatprep.mubr.bf16.mxu0 %v2607
    %2761 = vmatmul.mubr.bf16.gmra.mrb[0].mxu0 %v2524
    %v2762 = vpop.f32.mrb[0].mxu0
    %v2763 = vadd.f32 0.0, %v2762
    %v2764 = vpop.f32.mrb[0].mxu0
    %v2765 = vpop.f32.mrb[0].mxu0
    %v2766 = vadd.f32 0.0, %v2765
    %v2767 = vpop.f32.mrb[0].mxu0
    %2768 = vmatprep.mubr.bf16.mxu0 %v2610
    %2769 = vmatmul.mubr.bf16.gmra.mrb[0].mxu0 %v2526
    %v2770 = vpop.f32.mrb[0].mxu0
    %v2771 = vadd.f32 0.0, %v2770
    %v2772 = vpop.f32.mrb[0].mxu0
    %v2773 = vpop.f32.mrb[0].mxu0
    %v2774 = vadd.f32 0.0, %v2773
    %v2775 = vpop.f32.mrb[0].mxu0
    %2776 = vmatprep.mubr.bf16.mxu0 %v2613
    %2777 = vmatmul.mubr.bf16.gmra.mrb[0].mxu0 %v2528
    %v2778 = vpop.f32.mrb[0].mxu0
    %v2779 = vadd.f32 0.0, %v2778
    %v2780 = vpop.f32.mrb[0].mxu0
    %v2781 = vpop.f32.mrb[0].mxu0
    %v2782 = vadd.f32 0.0, %v2781
    %v2783 = vpop.f32.mrb[0].mxu0
    %2784 = vmatprep.mubr.bf16.mxu0 %v2616
    %2785 = vmatmul.mubr.bf16.gmra.mrb[0].mxu0 %v2530
    %v2786 = vpop.f32.mrb[0].mxu0
    %v2787 = vadd.f32 0.0, %v2786
    %v2788 = vpop.f32.mrb[0].mxu0
    %v2789 = vpop.f32.mrb[0].mxu0
    %v2790 = vadd.f32 0.0, %v2789
    %v2791 = vpop.f32.mrb[0].mxu0
    %2792 = vmatprep.mubr.bf16.mxu0 %v2619
    %2793 = vmatmul.mubr.bf16.gmra.mrb[0].mxu0 %v2532
    %v2794 = vpop.f32.mrb[0].mxu0
    %v2795 = vadd.f32 0.0, %v2794
    %v2796 = vpop.f32.mrb[0].mxu0
    %v2797 = vpop.f32.mrb[0].mxu0
    %v2798 = vadd.f32 0.0, %v2797
    %v2799 = vpop.f32.mrb[0].mxu0
    %2800 = vmatprep.mubr.bf16.mxu0 %v2622
    %2801 = vmatmul.mubr.bf16.gmra.mrb[0].mxu0 %v2534
    %v2802 = vpop.f32.mrb[0].mxu0
    %v2803 = vadd.f32 0.0, %v2802
    %v2804 = vpop.f32.mrb[0].mxu0
    %v2805 = vpop.f32.mrb[0].mxu0
    %v2806 = vadd.f32 0.0, %v2805
    %v2807 = vpop.f32.mrb[0].mxu0
    %2808 = vmatprep.mubr.bf16.mxu0 %v2625
    %2809 = vmatmul.mubr.bf16.gmra.mrb[0].mxu0 %v2536
    %v2810 = vpop.f32.mrb[0].mxu0
    %v2811 = vadd.f32 0.0, %v2810
    %v2812 = vpop.f32.mrb[0].mxu0
    %v2813 = vpop.f32.mrb[0].mxu0
    %v2814 = vadd.f32 0.0, %v2813
    %v2815 = vpop.f32.mrb[0].mxu0
    %2816 = vmatprep.mubr.bf16.mxu0 %v2628
    %2817 = vmatmul.mubr.bf16.gmra.mrb[0].mxu0 %v2538
    %v2818 = vpop.f32.mrb[0].mxu0
    %v2819 = vadd.f32 0.0, %v2818
    %v2820 = vpop.f32.mrb[0].mxu0
    %v2821 = vpop.f32.mrb[0].mxu0
    %v2822 = vadd.f32 0.0, %v2821
    %v2823 = vpop.f32.mrb[0].mxu0
    %2824 = vmatprep.mubr.bf16.mxu0 %v2631
    %2825 = vmatmul.mubr.bf16.gmra.mrb[0].mxu0 %v2540
    %v2826 = vpop.f32.mrb[0].mxu0
    %v2827 = vadd.f32 0.0, %v2826
    %v2828 = vpop.f32.mrb[0].mxu0
    %v2829 = vpop.f32.mrb[0].mxu0
    %v2830 = vadd.f32 0.0, %v2829
    %v2831 = vpop.f32.mrb[0].mxu0
    %2832 = vmatprep.mubr.bf16.mxu0 %v2634
    %2833 = vmatmul.mubr.bf16.gmra.mrb[0].mxu0 %v2542
    %v2834 = vpop.f32.mrb[0].mxu0
    %v2835 = vadd.f32 0.0, %v2834
    %v2836 = vpop.f32.mrb[0].mxu0
    %v2837 = vpop.f32.mrb[0].mxu0
    %v2838 = vadd.f32 0.0, %v2837
    %v2839 = vpop.f32.mrb[0].mxu0
    %2840 = vmatprep.mubr.bf16.mxu0 %v2637
    %2841 = vmatmul.mubr.bf16.gmra.mrb[0].mxu0 %v2544
    %v2842 = vpop.f32.mrb[0].mxu0
    %v2843 = vadd.f32 0.0, %v2842
    %v2844 = vpop.f32.mrb[0].mxu0
    %v2845 = vpop.f32.mrb[0].mxu0
    %v2846 = vadd.f32 0.0, %v2845
    %v2847 = vpop.f32.mrb[0].mxu0
    %2848 = vmatprep.mubr.bf16.mxu0 %v2640
    %2849 = vmatmul.mubr.bf16.gmra.mrb[0].mxu0 %v2546
    %v2850 = vpop.f32.mrb[0].mxu0
    %v2851 = vadd.f32 0.0, %v2850
    %v2852 = vpop.f32.mrb[0].mxu0
    %v2853 = vpop.f32.mrb[0].mxu0
    %v2854 = vadd.f32 0.0, %v2853
    %v2855 = vpop.f32.mrb[0].mxu0
    %2856 = vmatprep.mubr.bf16.mxu0 %v2643
    %2857 = vmatmul.mubr.bf16.gmra.mrb[0].mxu0 %v2548
    %v2858 = vpop.f32.mrb[0].mxu0
    %v2859 = vadd.f32 0.0, %v2858
    %v2860 = vpop.f32.mrb[0].mxu0
    %v2861 = vpop.f32.mrb[0].mxu0
    %v2862 = vadd.f32 0.0, %v2861
    %v2863 = vpop.f32.mrb[0].mxu0
    %2864 = vmatprep.mubr.bf16.mxu0 %v2646
    %2865 = vmatmul.mubr.bf16.gmra.mrb[0].mxu0 %v2550
    %v2866 = vpop.f32.mrb[0].mxu0
    %v2867 = vadd.f32 0.0, %v2866
    %v2868 = vpop.f32.mrb[0].mxu0
    %v2869 = vpop.f32.mrb[0].mxu0
    %v2870 = vadd.f32 0.0, %v2869
    %v2871 = vpop.f32.mrb[0].mxu0
    %2872 = vdwg.mxu0
    %v2873 = vld [vmem:[#allocation9] sm:$0xff]
    %v2874 = vld [vmem:[#allocation9 + $0x8] sm:$0xff]
    %v2875 = vld [vmem:[#allocation9 + $0x10] sm:$0xff]
    %v2876 = vld [vmem:[#allocation9 + $0x18] sm:$0xff]
    %v2877 = vld [vmem:[#allocation9 + $0x20] sm:$0xff]
    %v2878 = vld [vmem:[#allocation9 + $0x28] sm:$0xff]
    %v2879 = vld [vmem:[#allocation9 + $0x30] sm:$0xff]
    %v2880 = vld [vmem:[#allocation9 + $0x38] sm:$0xff]
    %v2882 = vsel %vm310, %v2683, 0
    %v2885 = vsel %vm310, %v2686, 0
    %v2888 = vsel %vm310, %v2691, 0
    %v2891 = vsel %vm310, %v2694, 0
    %v2894 = vsel %vm310, %v2699, 0
    %v2897 = vsel %vm310, %v2702, 0
    %v2900 = vsel %vm310, %v2707, 0
    %v2903 = vsel %vm310, %v2710, 0
    %v2906 = vsel %vm310, %v2715, 0
    %v2909 = vsel %vm310, %v2718, 0
    %v2912 = vsel %vm310, %v2723, 0
    %v2915 = vsel %vm310, %v2726, 0
    %v2918 = vsel %vm310, %v2731, 0
    %v2921 = vsel %vm310, %v2734, 0
    %v2924 = vsel %vm310, %v2739, 0
    %v2927 = vsel %vm310, %v2742, 0
    %2929 = vmatprep.subr.mxu0 0.0
    %2930 = vmatpush1.msra.mxu0 %v2873
    %2931 = vmatprep.subr.mxu0 0.0
    %2932 = vmatpush1.msra.mxu0 %v2874
    %2933 = vmatprep.subr.mxu0 0.0
    %2934 = vmatpush1.msra.mxu0 %v2875
    %2935 = vmatprep.subr.mxu0 0.0
    %2936 = vmatpush1.msra.mxu0 %v2876
    %2937 = vmatprep.subr.mxu0 0.0
    %2938 = vmatpush1.msra.mxu0 %v2877
    %2939 = vmatprep.subr.mxu0 0.0
    %2940 = vmatpush1.msra.mxu0 %v2878
    %2941 = vmatprep.subr.mxu0 0.0
    %2942 = vmatpush1.msra.mxu0 %v2879
    %2943 = vmatprep.subr.mxu0 0.0
    %2944 = vmatpush1.msra.mxu0 %v2880
    %2945 = vmatprep.subr.mxu0 0.0
    %2946 = vmatpush1.msra.mxu0 0.0
    %2947 = vmatprep.subr.mxu0 0.0
    %2948 = vmatpush1.msra.mxu0 0.0
    %2949 = vmatprep.subr.mxu0 0.0
    %2950 = vmatpush1.msra.mxu0 0.0
    %2951 = vmatprep.subr.mxu0 0.0
    %2952 = vmatpush1.msra.mxu0 0.0
    %2953 = vmatprep.subr.mxu0 0.0
    %2954 = vmatpush1.msra.mxu0 0.0
    %2955 = vmatprep.subr.mxu0 0.0
    %2956 = vmatpush1.msra.mxu0 0.0
    %2957 = vmatprep.subr.mxu0 0.0
    %2958 = vmatpush1.msra.mxu0 0.0
    %2959 = vmatprep.subr.mxu0 0.0
    %2960 = vmatpush1.msra.mxu0 0.0
    %2961 = vmatprep.subr.mxu0 0.0
    %2962 = vmatpush1.msra.mxu0 0.0
    %2963 = vmatprep.subr.mxu0 0.0
    %2964 = vmatpush1.msra.mxu0 0.0
    %2965 = vmatprep.subr.mxu0 0.0
    %2966 = vmatpush1.msra.mxu0 0.0
    %2967 = vmatprep.subr.mxu0 0.0
    %2968 = vmatpush1.msra.mxu0 0.0
    %2969 = vmatprep.subr.mxu0 0.0
    %2970 = vmatpush1.msra.mxu0 0.0
    %2971 = vmatprep.subr.mxu0 0.0
    %2972 = vmatpush1.msra.mxu0 0.0
    %2973 = vmatprep.subr.mxu0 0.0
    %2974 = vmatpush1.msra.mxu0 0.0
    %2975 = vmatprep.subr.mxu0 0.0
    %2976 = vmatpush1.msra.mxu0 0.0
    %2977 = vmatprep.subr.mxu0 0.0
    %2978 = vmatpush1.msra.mxu0 0.0
    %2979 = vmatprep.subr.mxu0 0.0
    %2980 = vmatpush1.msra.mxu0 0.0
    %2981 = vmatprep.subr.mxu0 0.0
    %2982 = vmatpush1.msra.mxu0 0.0
    %2983 = vmatprep.subr.mxu0 0.0
    %2984 = vmatpush1.msra.mxu0 0.0
    %2985 = vmatprep.subr.mxu0 0.0
    %2986 = vmatpush1.msra.mxu0 0.0
    %2987 = vmatprep.subr.mxu0 0.0
    %2988 = vmatpush1.msra.mxu0 0.0
    %2989 = vmatprep.subr.mxu0 0.0
    %2990 = vmatpush1.msra.mxu0 0.0
    %2991 = vmatprep.subr.mxu0 0.0
    %2992 = vmatpush1.msra.mxu0 0.0
    %2993 = vmatprep.mubr.f32.mxu0 0.0
    %2994 = vmatmul.mubr.f32.gmra.mrb[0].mxu0 %v2882
    %v2995 = vpop.f32.mrb[0].mxu0
    %v2996 = vadd.f32 0.0, %v2995
    %v2997 = vpop.f32.mrb[0].mxu0
    %2998 = vmatprep.mubr.f32.mxu0 0.0
    %2999 = vmatmul.mubr.f32.gmra.mrb[0].mxu0 %v2885
    %v3000 = vpop.f32.mrb[0].mxu0
    %v3001 = vadd.f32 0.0, %v3000
    %v3002 = vpop.f32.mrb[0].mxu0
    %3003 = vmatprep.mubr.f32.mxu0 0.0
    %3004 = vmatmul.mubr.f32.gmra.mrb[0].mxu0 %v2888
    %v3005 = vpop.f32.mrb[0].mxu0
    %v3006 = vadd.f32 0.0, %v3005
    %v3007 = vpop.f32.mrb[0].mxu0
    %3008 = vmatprep.mubr.f32.mxu0 0.0
    %3009 = vmatmul.mubr.f32.gmra.mrb[0].mxu0 %v2891
    %v3010 = vpop.f32.mrb[0].mxu0
    %v3011 = vadd.f32 0.0, %v3010
    %v3012 = vpop.f32.mrb[0].mxu0
    %3013 = vmatprep.mubr.f32.mxu0 0.0
    %3014 = vmatmul.mubr.f32.gmra.mrb[0].mxu0 %v2894
    %v3015 = vpop.f32.mrb[0].mxu0
    %v3016 = vadd.f32 0.0, %v3015
    %v3017 = vpop.f32.mrb[0].mxu0
    %3018 = vmatprep.mubr.f32.mxu0 0.0
    %3019 = vmatmul.mubr.f32.gmra.mrb[0].mxu0 %v2897
    %v3020 = vpop.f32.mrb[0].mxu0
    %v3021 = vadd.f32 0.0, %v3020
    %v3022 = vpop.f32.mrb[0].mxu0
    %3023 = vmatprep.mubr.f32.mxu0 0.0
    %3024 = vmatmul.mubr.f32.gmra.mrb[0].mxu0 %v2900
    %v3025 = vpop.f32.mrb[0].mxu0
    %v3026 = vadd.f32 0.0, %v3025
    %v3027 = vpop.f32.mrb[0].mxu0
    %3028 = vmatprep.mubr.f32.mxu0 0.0
    %3029 = vmatmul.mubr.f32.gmra.mrb[0].mxu0 %v2903
    %v3030 = vpop.f32.mrb[0].mxu0
    %v3031 = vadd.f32 0.0, %v3030
    %v3032 = vpop.f32.mrb[0].mxu0
    %3033 = vmatprep.mubr.f32.mxu0 0.0
    %3034 = vmatmul.mubr.f32.gmra.mrb[0].mxu0 %v2906
    %v3035 = vpop.f32.mrb[0].mxu0
    %v3036 = vadd.f32 0.0, %v3035
    %v3037 = vpop.f32.mrb[0].mxu0
    %3038 = vmatprep.mubr.f32.mxu0 0.0
    %3039 = vmatmul.mubr.f32.gmra.mrb[0].mxu0 %v2909
    %v3040 = vpop.f32.mrb[0].mxu0
    %v3041 = vadd.f32 0.0, %v3040
    %v3042 = vpop.f32.mrb[0].mxu0
    %3043 = vmatprep.mubr.f32.mxu0 0.0
    %3044 = vmatmul.mubr.f32.gmra.mrb[0].mxu0 %v2912
    %v3045 = vpop.f32.mrb[0].mxu0
    %v3046 = vadd.f32 0.0, %v3045
    %v3047 = vpop.f32.mrb[0].mxu0
    %3048 = vmatprep.mubr.f32.mxu0 0.0
    %3049 = vmatmul.mubr.f32.gmra.mrb[0].mxu0 %v2915
    %v3050 = vpop.f32.mrb[0].mxu0
    %v3051 = vadd.f32 0.0, %v3050
    %v3052 = vpop.f32.mrb[0].mxu0
    %3053 = vmatprep.mubr.f32.mxu0 0.0
    %3054 = vmatmul.mubr.f32.gmra.mrb[0].mxu0 %v2918
    %v3055 = vpop.f32.mrb[0].mxu0
    %v3056 = vadd.f32 0.0, %v3055
    %v3057 = vpop.f32.mrb[0].mxu0
    %3058 = vmatprep.mubr.f32.mxu0 0.0
    %3059 = vmatmul.mubr.f32.gmra.mrb[0].mxu0 %v2921
    %v3060 = vpop.f32.mrb[0].mxu0
    %v3061 = vadd.f32 0.0, %v3060
    %v3062 = vpop.f32.mrb[0].mxu0
    %3063 = vmatprep.mubr.f32.mxu0 0.0
    %3064 = vmatmul.mubr.f32.gmra.mrb[0].mxu0 %v2924
    %v3065 = vpop.f32.mrb[0].mxu0
    %v3066 = vadd.f32 0.0, %v3065
    %v3067 = vpop.f32.mrb[0].mxu0
    %3068 = vmatprep.mubr.f32.mxu0 0.0
    %3069 = vmatmul.mubr.f32.gmra.mrb[0].mxu0 %v2927
    %v3070 = vpop.f32.mrb[0].mxu0
    %v3071 = vadd.f32 0.0, %v3070
    %v3072 = vpop.f32.mrb[0].mxu0
    %3073 = vdwg.mxu0
    %v3074 = vadd.f32 %v2747, %v2996
    %v3075 = vadd.f32 %v2750, %v3001
    %v3076 = vadd.f32 %v2755, %v3006
    %v3077 = vadd.f32 %v2758, %v3011
    %v3078 = vadd.f32 %v2763, %v3016
    %v3079 = vadd.f32 %v2766, %v3021
    %v3080 = vadd.f32 %v2771, %v3026
    %v3081 = vadd.f32 %v2774, %v3031
    %v3082 = vadd.f32 %v2779, %v3036
    %v3083 = vadd.f32 %v2782, %v3041
    %v3084 = vadd.f32 %v2787, %v3046
    %v3085 = vadd.f32 %v2790, %v3051
    %v3086 = vadd.f32 %v2795, %v3056
    %v3087 = vadd.f32 %v2798, %v3061
    %v3088 = vadd.f32 %v2803, %v3066
    %v3089 = vadd.f32 %v2806, %v3071
    %s3090 = scalar_lea.vmem [#allocation9], 64
    %v3091 = vld [vmem:[%s3090] sm:$0xff]
    %v3092 = vld [vmem:[%s3090 + $0x8] sm:$0xff]
    %v3093 = vld [vmem:[%s3090 + $0x10] sm:$0xff]
    %v3094 = vld [vmem:[%s3090 + $0x18] sm:$0xff]
    %v3095 = vld [vmem:[%s3090 + $0x20] sm:$0xff]
    %v3096 = vld [vmem:[%s3090 + $0x28] sm:$0xff]
    %v3097 = vld [vmem:[%s3090 + $0x30] sm:$0xff]
    %v3098 = vld [vmem:[%s3090 + $0x38] sm:$0xff]
    %v3100 = vsel %vm310, %v2811, 0
    %v3103 = vsel %vm310, %v2814, 0
    %v3106 = vsel %vm310, %v2819, 0
    %v3109 = vsel %vm310, %v2822, 0
    %v3112 = vsel %vm310, %v2827, 0
    %v3115 = vsel %vm310, %v2830, 0
    %v3118 = vsel %vm310, %v2835, 0
    %v3121 = vsel %vm310, %v2838, 0
    %v3124 = vsel %vm310, %v2843, 0
    %v3127 = vsel %vm310, %v2846, 0
    %v3130 = vsel %vm310, %v2851, 0
    %v3133 = vsel %vm310, %v2854, 0
    %v3136 = vsel %vm310, %v2859, 0
    %v3139 = vsel %vm310, %v2862, 0
    %v3142 = vsel %vm310, %v2867, 0
    %v3145 = vsel %vm310, %v2870, 0
    %3147 = vmatprep.subr.mxu0 0.0
    %3148 = vmatpush1.msra.mxu0 %v3091
    %3149 = vmatprep.subr.mxu0 0.0
    %3150 = vmatpush1.msra.mxu0 %v3092
    %3151 = vmatprep.subr.mxu0 0.0
    %3152 = vmatpush1.msra.mxu0 %v3093
    %3153 = vmatprep.subr.mxu0 0.0
    %3154 = vmatpush1.msra.mxu0 %v3094
    %3155 = vmatprep.subr.mxu0 0.0
    %3156 = vmatpush1.msra.mxu0 %v3095
    %3157 = vmatprep.subr.mxu0 0.0
    %3158 = vmatpush1.msra.mxu0 %v3096
    %3159 = vmatprep.subr.mxu0 0.0
    %3160 = vmatpush1.msra.mxu0 %v3097
    %3161 = vmatprep.subr.mxu0 0.0
    %3162 = vmatpush1.msra.mxu0 %v3098
    %3163 = vmatprep.subr.mxu0 0.0
    %3164 = vmatpush1.msra.mxu0 0.0
    %3165 = vmatprep.subr.mxu0 0.0
    %3166 = vmatpush1.msra.mxu0 0.0
    %3167 = vmatprep.subr.mxu0 0.0
    %3168 = vmatpush1.msra.mxu0 0.0
    %3169 = vmatprep.subr.mxu0 0.0
    %3170 = vmatpush1.msra.mxu0 0.0
    %3171 = vmatprep.subr.mxu0 0.0
    %3172 = vmatpush1.msra.mxu0 0.0
    %3173 = vmatprep.subr.mxu0 0.0
    %3174 = vmatpush1.msra.mxu0 0.0
    %3175 = vmatprep.subr.mxu0 0.0
    %3176 = vmatpush1.msra.mxu0 0.0
    %3177 = vmatprep.subr.mxu0 0.0
    %3178 = vmatpush1.msra.mxu0 0.0
    %3179 = vmatprep.subr.mxu0 0.0
    %3180 = vmatpush1.msra.mxu0 0.0
    %3181 = vmatprep.subr.mxu0 0.0
    %3182 = vmatpush1.msra.mxu0 0.0
    %3183 = vmatprep.subr.mxu0 0.0
    %3184 = vmatpush1.msra.mxu0 0.0
    %3185 = vmatprep.subr.mxu0 0.0
    %3186 = vmatpush1.msra.mxu0 0.0
    %3187 = vmatprep.subr.mxu0 0.0
    %3188 = vmatpush1.msra.mxu0 0.0
    %3189 = vmatprep.subr.mxu0 0.0
    %3190 = vmatpush1.msra.mxu0 0.0
    %3191 = vmatprep.subr.mxu0 0.0
    %3192 = vmatpush1.msra.mxu0 0.0
    %3193 = vmatprep.subr.mxu0 0.0
    %3194 = vmatpush1.msra.mxu0 0.0
    %3195 = vmatprep.subr.mxu0 0.0
    %3196 = vmatpush1.msra.mxu0 0.0
    %3197 = vmatprep.subr.mxu0 0.0
    %3198 = vmatpush1.msra.mxu0 0.0
    %3199 = vmatprep.subr.mxu0 0.0
    %3200 = vmatpush1.msra.mxu0 0.0
    %3201 = vmatprep.subr.mxu0 0.0
    %3202 = vmatpush1.msra.mxu0 0.0
    %3203 = vmatprep.subr.mxu0 0.0
    %3204 = vmatpush1.msra.mxu0 0.0
    %3205 = vmatprep.subr.mxu0 0.0
    %3206 = vmatpush1.msra.mxu0 0.0
    %3207 = vmatprep.subr.mxu0 0.0
    %3208 = vmatpush1.msra.mxu0 0.0
    %3209 = vmatprep.subr.mxu0 0.0
    %3210 = vmatpush1.msra.mxu0 0.0
    %3211 = vmatprep.mubr.f32.mxu0 0.0
    %3212 = vmatmul.mubr.f32.gmra.mrb[0].mxu0 %v3100
    %v3213 = vpop.f32.mrb[0].mxu0
    %v3214 = vadd.f32 0.0, %v3213
    %v3215 = vpop.f32.mrb[0].mxu0
    %3216 = vmatprep.mubr.f32.mxu0 0.0
    %3217 = vmatmul.mubr.f32.gmra.mrb[0].mxu0 %v3103
    %v3218 = vpop.f32.mrb[0].mxu0
    %v3219 = vadd.f32 0.0, %v3218
    %v3220 = vpop.f32.mrb[0].mxu0
    %3221 = vmatprep.mubr.f32.mxu0 0.0
    %3222 = vmatmul.mubr.f32.gmra.mrb[0].mxu0 %v3106
    %v3223 = vpop.f32.mrb[0].mxu0
    %v3224 = vadd.f32 0.0, %v3223
    %v3225 = vpop.f32.mrb[0].mxu0
    %3226 = vmatprep.mubr.f32.mxu0 0.0
    %3227 = vmatmul.mubr.f32.gmra.mrb[0].mxu0 %v3109
    %v3228 = vpop.f32.mrb[0].mxu0
    %v3229 = vadd.f32 0.0, %v3228
    %v3230 = vpop.f32.mrb[0].mxu0
    %3231 = vmatprep.mubr.f32.mxu0 0.0
    %3232 = vmatmul.mubr.f32.gmra.mrb[0].mxu0 %v3112
    %v3233 = vpop.f32.mrb[0].mxu0
    %v3234 = vadd.f32 0.0, %v3233
    %v3235 = vpop.f32.mrb[0].mxu0
    %3236 = vmatprep.mubr.f32.mxu0 0.0
    %3237 = vmatmul.mubr.f32.gmra.mrb[0].mxu0 %v3115
    %v3238 = vpop.f32.mrb[0].mxu0
    %v3239 = vadd.f32 0.0, %v3238
    %v3240 = vpop.f32.mrb[0].mxu0
    %3241 = vmatprep.mubr.f32.mxu0 0.0
    %3242 = vmatmul.mubr.f32.gmra.mrb[0].mxu0 %v3118
    %v3243 = vpop.f32.mrb[0].mxu0
    %v3244 = vadd.f32 0.0, %v3243
    %v3245 = vpop.f32.mrb[0].mxu0
    %3246 = vmatprep.mubr.f32.mxu0 0.0
    %3247 = vmatmul.mubr.f32.gmra.mrb[0].mxu0 %v3121
    %v3248 = vpop.f32.mrb[0].mxu0
    %v3249 = vadd.f32 0.0, %v3248
    %v3250 = vpop.f32.mrb[0].mxu0
    %3251 = vmatprep.mubr.f32.mxu0 0.0
    %3252 = vmatmul.mubr.f32.gmra.mrb[0].mxu0 %v3124
    %v3253 = vpop.f32.mrb[0].mxu0
    %v3254 = vadd.f32 0.0, %v3253
    %v3255 = vpop.f32.mrb[0].mxu0
    %3256 = vmatprep.mubr.f32.mxu0 0.0
    %3257 = vmatmul.mubr.f32.gmra.mrb[0].mxu0 %v3127
    %v3258 = vpop.f32.mrb[0].mxu0
    %v3259 = vadd.f32 0.0, %v3258
    %v3260 = vpop.f32.mrb[0].mxu0
    %3261 = vmatprep.mubr.f32.mxu0 0.0
    %3262 = vmatmul.mubr.f32.gmra.mrb[0].mxu0 %v3130
    %v3263 = vpop.f32.mrb[0].mxu0
    %v3264 = vadd.f32 0.0, %v3263
    %v3265 = vpop.f32.mrb[0].mxu0
    %3266 = vmatprep.mubr.f32.mxu0 0.0
    %3267 = vmatmul.mubr.f32.gmra.mrb[0].mxu0 %v3133
    %v3268 = vpop.f32.mrb[0].mxu0
    %v3269 = vadd.f32 0.0, %v3268
    %v3270 = vpop.f32.mrb[0].mxu0
    %3271 = vmatprep.mubr.f32.mxu0 0.0
    %3272 = vmatmul.mubr.f32.gmra.mrb[0].mxu0 %v3136
    %v3273 = vpop.f32.mrb[0].mxu0
    %v3274 = vadd.f32 0.0, %v3273
    %v3275 = vpop.f32.mrb[0].mxu0
    %3276 = vmatprep.mubr.f32.mxu0 0.0
    %3277 = vmatmul.mubr.f32.gmra.mrb[0].mxu0 %v3139
    %v3278 = vpop.f32.mrb[0].mxu0
    %v3279 = vadd.f32 0.0, %v3278
    %v3280 = vpop.f32.mrb[0].mxu0
    %3281 = vmatprep.mubr.f32.mxu0 0.0
    %3282 = vmatmul.mubr.f32.gmra.mrb[0].mxu0 %v3142
    %v3283 = vpop.f32.mrb[0].mxu0
    %v3284 = vadd.f32 0.0, %v3283
    %v3285 = vpop.f32.mrb[0].mxu0
    %3286 = vmatprep.mubr.f32.mxu0 0.0
    %3287 = vmatmul.mubr.f32.gmra.mrb[0].mxu0 %v3145
    %v3288 = vpop.f32.mrb[0].mxu0
    %v3289 = vadd.f32 0.0, %v3288
    %v3290 = vpop.f32.mrb[0].mxu0
    %3291 = vdwg.mxu0
    %v3292 = vadd.f32 %v3074, %v3214
    %v3293 = vadd.f32 %v3075, %v3219
    %v3294 = vadd.f32 %v3076, %v3224
    %v3295 = vadd.f32 %v3077, %v3229
    %v3296 = vadd.f32 %v3078, %v3234
    %v3297 = vadd.f32 %v3079, %v3239
    %v3298 = vadd.f32 %v3080, %v3244
    %v3299 = vadd.f32 %v3081, %v3249
    %v3300 = vadd.f32 %v3082, %v3254
    %v3301 = vadd.f32 %v3083, %v3259
    %v3302 = vadd.f32 %v3084, %v3264
    %v3303 = vadd.f32 %v3085, %v3269
    %v3304 = vadd.f32 %v3086, %v3274
    %v3305 = vadd.f32 %v3087, %v3279
    %v3306 = vadd.f32 %v3088, %v3284
    %v3307 = vadd.f32 %v3089, %v3289
    %v3308 = vmul.f32 %v3292, %v3292
    %v3309 = vmul.f32 %v3293, %v3293
    %v3310 = vmul.f32 %v3294, %v3294
    %v3311 = vmul.f32 %v3295, %v3295
    %v3312 = vmul.f32 %v3296, %v3296
    %v3313 = vmul.f32 %v3297, %v3297
    %v3314 = vmul.f32 %v3298, %v3298
    %v3315 = vmul.f32 %v3299, %v3299
    %v3316 = vmul.f32 %v3300, %v3300
    %v3317 = vmul.f32 %v3301, %v3301
    %v3318 = vmul.f32 %v3302, %v3302
    %v3319 = vmul.f32 %v3303, %v3303
    %v3320 = vmul.f32 %v3304, %v3304
    %v3321 = vmul.f32 %v3305, %v3305
    %v3322 = vmul.f32 %v3306, %v3306
    %v3323 = vmul.f32 %v3307, %v3307
    %v3324 = vld [vmem:[%s12] sm:$0xff]
    %v3325 = vld [vmem:[%s12 + $0x8] sm:$0xff]
    %v3326 = vld [vmem:[%s12 + $0x10] sm:$0xff]
    %v3327 = vld [vmem:[%s12 + $0x18] sm:$0xff]
    %v3328 = vld [vmem:[%s12 + $0x20] sm:$0xff]
    %v3329 = vld [vmem:[%s12 + $0x28] sm:$0xff]
    %v3330 = vld [vmem:[%s12 + $0x30] sm:$0xff]
    %v3331 = vld [vmem:[%s12 + $0x38] sm:$0xff]
    %v3332 = vld [vmem:[%s12 + $0x40] sm:$0xff]
    %v3333 = vld [vmem:[%s12 + $0x48] sm:$0xff]
    %v3334 = vld [vmem:[%s12 + $0x50] sm:$0xff]
    %v3335 = vld [vmem:[%s12 + $0x58] sm:$0xff]
    %v3336 = vld [vmem:[%s12 + $0x60] sm:$0xff]
    %v3337 = vld [vmem:[%s12 + $0x68] sm:$0xff]
    %v3338 = vld [vmem:[%s12 + $0x70] sm:$0xff]
    %v3339 = vld [vmem:[%s12 + $0x78] sm:$0xff]
    %v3340 = vld [vmem:[%s12 + $0x80] sm:$0xff]
    %v3341 = vld [vmem:[%s12 + $0x88] sm:$0xff]
    %v3342 = vld [vmem:[%s12 + $0x90] sm:$0xff]
    %v3343 = vld [vmem:[%s12 + $0x98] sm:$0xff]
    %v3344 = vld [vmem:[%s12 + $0xa0] sm:$0xff]
    %v3345 = vld [vmem:[%s12 + $0xa8] sm:$0xff]
    %v3346 = vld [vmem:[%s12 + $0xb0] sm:$0xff]
    %v3347 = vld [vmem:[%s12 + $0xb8] sm:$0xff]
    %v3348 = vld [vmem:[%s12 + $0xc0] sm:$0xff]
    %v3349 = vld [vmem:[%s12 + $0xc8] sm:$0xff]
    %v3350 = vld [vmem:[%s12 + $0xd0] sm:$0xff]
    %v3351 = vld [vmem:[%s12 + $0xd8] sm:$0xff]
    %v3352 = vld [vmem:[%s12 + $0xe0] sm:$0xff]
    %v3353 = vld [vmem:[%s12 + $0xe8] sm:$0xff]
    %v3354 = vld [vmem:[%s12 + $0xf0] sm:$0xff]
    %v3355 = vld [vmem:[%s12 + $0xf8] sm:$0xff]
    %v3356 = vld [vmem:[%s12 + $0x100] sm:$0xff]
    %v3357 = vld [vmem:[%s12 + $0x108] sm:$0xff]
    %v3358 = vld [vmem:[%s12 + $0x110] sm:$0xff]
    %v3359 = vld [vmem:[%s12 + $0x118] sm:$0xff]
    %v3360 = vld [vmem:[%s12 + $0x120] sm:$0xff]
    %v3361 = vld [vmem:[%s12 + $0x128] sm:$0xff]
    %v3362 = vld [vmem:[%s12 + $0x130] sm:$0xff]
    %v3363 = vld [vmem:[%s12 + $0x138] sm:$0xff]
    %v3364 = vld [vmem:[%s12 + $0x140] sm:$0xff]
    %v3365 = vld [vmem:[%s12 + $0x148] sm:$0xff]
    %v3366 = vld [vmem:[%s12 + $0x150] sm:$0xff]
    %v3367 = vld [vmem:[%s12 + $0x158] sm:$0xff]
    %v3368 = vld [vmem:[%s12 + $0x160] sm:$0xff]
    %v3369 = vld [vmem:[%s12 + $0x168] sm:$0xff]
    %v3370 = vld [vmem:[%s12 + $0x170] sm:$0xff]
    %v3371 = vld [vmem:[%s12 + $0x178] sm:$0xff]
    %v3372 = vld [vmem:[%s12 + $0x180] sm:$0xff]
    %v3373 = vld [vmem:[%s12 + $0x188] sm:$0xff]
    %v3374 = vld [vmem:[%s12 + $0x190] sm:$0xff]
    %v3375 = vld [vmem:[%s12 + $0x198] sm:$0xff]
    %v3376 = vld [vmem:[%s12 + $0x1a0] sm:$0xff]
    %v3377 = vld [vmem:[%s12 + $0x1a8] sm:$0xff]
    %v3378 = vld [vmem:[%s12 + $0x1b0] sm:$0xff]
    %v3379 = vld [vmem:[%s12 + $0x1b8] sm:$0xff]
    %v3380 = vld [vmem:[%s12 + $0x1c0] sm:$0xff]
    %v3381 = vld [vmem:[%s12 + $0x1c8] sm:$0xff]
    %v3382 = vld [vmem:[%s12 + $0x1d0] sm:$0xff]
    %v3383 = vld [vmem:[%s12 + $0x1d8] sm:$0xff]
    %v3384 = vld [vmem:[%s12 + $0x1e0] sm:$0xff]
    %v3385 = vld [vmem:[%s12 + $0x1e8] sm:$0xff]
    %v3386 = vld [vmem:[%s12 + $0x1f0] sm:$0xff]
    %v3387 = vld [vmem:[%s12 + $0x1f8] sm:$0xff]
    %3388 = vmatprep.subr.mxu0 0.0
    %3389 = vmatpush1.msra.mxu0 %v3292
    %3390 = vmatprep.subr.mxu0 0.0
    %3391 = vmatpush1.msra.mxu0 %v3293
    %3392 = vmatprep.subr.mxu0 0.0
    %3393 = vmatpush1.msra.mxu0 %v3294
    %3394 = vmatprep.subr.mxu0 0.0
    %3395 = vmatpush1.msra.mxu0 %v3295
    %3396 = vmatprep.subr.mxu0 0.0
    %3397 = vmatpush1.msra.mxu0 %v3296
    %3398 = vmatprep.subr.mxu0 0.0
    %3399 = vmatpush1.msra.mxu0 %v3297
    %3400 = vmatprep.subr.mxu0 0.0
    %3401 = vmatpush1.msra.mxu0 %v3298
    %3402 = vmatprep.subr.mxu0 0.0
    %3403 = vmatpush1.msra.mxu0 %v3299
    %3404 = vmatprep.subr.mxu0 0.0
    %3405 = vmatpush1.msra.mxu0 %v3300
    %3406 = vmatprep.subr.mxu0 0.0
    %3407 = vmatpush1.msra.mxu0 %v3301
    %3408 = vmatprep.subr.mxu0 0.0
    %3409 = vmatpush1.msra.mxu0 %v3302
    %3410 = vmatprep.subr.mxu0 0.0
    %3411 = vmatpush1.msra.mxu0 %v3303
    %3412 = vmatprep.subr.mxu0 0.0
    %3413 = vmatpush1.msra.mxu0 %v3304
    %3414 = vmatprep.subr.mxu0 0.0
    %3415 = vmatpush1.msra.mxu0 %v3305
    %3416 = vmatprep.subr.mxu0 0.0
    %3417 = vmatpush1.msra.mxu0 %v3306
    %3418 = vmatprep.subr.mxu0 0.0
    %3419 = vmatpush1.msra.mxu0 %v3307
    %3420 = vmatprep.subr.mxu0 0.0
    %3421 = vmatpush1.msra.mxu0 %v3308
    %3422 = vmatprep.subr.mxu0 0.0
    %3423 = vmatpush1.msra.mxu0 %v3309
    %3424 = vmatprep.subr.mxu0 0.0
    %3425 = vmatpush1.msra.mxu0 %v3310
    %3426 = vmatprep.subr.mxu0 0.0
    %3427 = vmatpush1.msra.mxu0 %v3311
    %3428 = vmatprep.subr.mxu0 0.0
    %3429 = vmatpush1.msra.mxu0 %v3312
    %3430 = vmatprep.subr.mxu0 0.0
    %3431 = vmatpush1.msra.mxu0 %v3313
    %3432 = vmatprep.subr.mxu0 0.0
    %3433 = vmatpush1.msra.mxu0 %v3314
    %3434 = vmatprep.subr.mxu0 0.0
    %3435 = vmatpush1.msra.mxu0 %v3315
    %3436 = vmatprep.subr.mxu0 0.0
    %3437 = vmatpush1.msra.mxu0 %v3316
    %3438 = vmatprep.subr.mxu0 0.0
    %3439 = vmatpush1.msra.mxu0 %v3317
    %3440 = vmatprep.subr.mxu0 0.0
    %3441 = vmatpush1.msra.mxu0 %v3318
    %3442 = vmatprep.subr.mxu0 0.0
    %3443 = vmatpush1.msra.mxu0 %v3319
    %3444 = vmatprep.subr.mxu0 0.0
    %3445 = vmatpush1.msra.mxu0 %v3320
    %3446 = vmatprep.subr.mxu0 0.0
    %3447 = vmatpush1.msra.mxu0 %v3321
    %3448 = vmatprep.subr.mxu0 0.0
    %3449 = vmatpush1.msra.mxu0 %v3322
    %3450 = vmatprep.subr.mxu0 0.0
    %3451 = vmatpush1.msra.mxu0 %v3323
    %3452 = vmatprep.mubr.f32.mxu0 %v3325
    %3453 = vmatmul.mubr.f32.gmra.mrb[0].mxu0 %v3324
    %v3454 = vpop.f32.mrb[0].mxu0
    %v3455 = vadd.f32 0.0, %v3454
    %v3456 = vpop.f32.mrb[0].mxu0
    %3457 = vmatprep.mubr.f32.mxu0 %v3327
    %3458 = vmatmul.mubr.f32.gmra.mrb[0].mxu0 %v3326
    %v3459 = vpop.f32.mrb[0].mxu0
    %v3460 = vadd.f32 0.0, %v3459
    %v3461 = vpop.f32.mrb[0].mxu0
    %3462 = vmatprep.mubr.f32.mxu0 %v3329
    %3463 = vmatmul.mubr.f32.gmra.mrb[0].mxu0 %v3328
    %v3464 = vpop.f32.mrb[0].mxu0
    %v3465 = vadd.f32 0.0, %v3464
    %v3466 = vpop.f32.mrb[0].mxu0
    %3467 = vmatprep.mubr.f32.mxu0 %v3331
    %3468 = vmatmul.mubr.f32.gmra.mrb[0].mxu0 %v3330
    %v3469 = vpop.f32.mrb[0].mxu0
    %v3470 = vadd.f32 0.0, %v3469
    %v3471 = vpop.f32.mrb[0].mxu0
    %3472 = vmatprep.mubr.f32.mxu0 %v3333
    %3473 = vmatmul.mubr.f32.gmra.mrb[0].mxu0 %v3332
    %v3474 = vpop.f32.mrb[0].mxu0
    %v3475 = vadd.f32 0.0, %v3474
    %v3476 = vpop.f32.mrb[0].mxu0
    %3477 = vmatprep.mubr.f32.mxu0 %v3335
    %3478 = vmatmul.mubr.f32.gmra.mrb[0].mxu0 %v3334
    %v3479 = vpop.f32.mrb[0].mxu0
    %v3480 = vadd.f32 0.0, %v3479
    %v3481 = vpop.f32.mrb[0].mxu0
    %3482 = vmatprep.mubr.f32.mxu0 %v3337
    %3483 = vmatmul.mubr.f32.gmra.mrb[0].mxu0 %v3336
    %v3484 = vpop.f32.mrb[0].mxu0
    %v3485 = vadd.f32 0.0, %v3484
    %v3486 = vpop.f32.mrb[0].mxu0
    %3487 = vmatprep.mubr.f32.mxu0 %v3339
    %3488 = vmatmul.mubr.f32.gmra.mrb[0].mxu0 %v3338
    %v3489 = vpop.f32.mrb[0].mxu0
    %v3490 = vadd.f32 0.0, %v3489
    %v3491 = vpop.f32.mrb[0].mxu0
    %3492 = vmatprep.mubr.f32.mxu0 %v3341
    %3493 = vmatmul.mubr.f32.gmra.mrb[0].mxu0 %v3340
    %v3494 = vpop.f32.mrb[0].mxu0
    %v3495 = vadd.f32 0.0, %v3494
    %v3496 = vpop.f32.mrb[0].mxu0
    %3497 = vmatprep.mubr.f32.mxu0 %v3343
    %3498 = vmatmul.mubr.f32.gmra.mrb[0].mxu0 %v3342
    %v3499 = vpop.f32.mrb[0].mxu0
    %v3500 = vadd.f32 0.0, %v3499
    %v3501 = vpop.f32.mrb[0].mxu0
    %3502 = vmatprep.mubr.f32.mxu0 %v3345
    %3503 = vmatmul.mubr.f32.gmra.mrb[0].mxu0 %v3344
    %v3504 = vpop.f32.mrb[0].mxu0
    %v3505 = vadd.f32 0.0, %v3504
    %v3506 = vpop.f32.mrb[0].mxu0
    %3507 = vmatprep.mubr.f32.mxu0 %v3347
    %3508 = vmatmul.mubr.f32.gmra.mrb[0].mxu0 %v3346
    %v3509 = vpop.f32.mrb[0].mxu0
    %v3510 = vadd.f32 0.0, %v3509
    %v3511 = vpop.f32.mrb[0].mxu0
    %3512 = vmatprep.mubr.f32.mxu0 %v3349
    %3513 = vmatmul.mubr.f32.gmra.mrb[0].mxu0 %v3348
    %v3514 = vpop.f32.mrb[0].mxu0
    %v3515 = vadd.f32 0.0, %v3514
    %v3516 = vpop.f32.mrb[0].mxu0
    %3517 = vmatprep.mubr.f32.mxu0 %v3351
    %3518 = vmatmul.mubr.f32.gmra.mrb[0].mxu0 %v3350
    %v3519 = vpop.f32.mrb[0].mxu0
    %v3520 = vadd.f32 0.0, %v3519
    %v3521 = vpop.f32.mrb[0].mxu0
    %3522 = vmatprep.mubr.f32.mxu0 %v3353
    %3523 = vmatmul.mubr.f32.gmra.mrb[0].mxu0 %v3352
    %v3524 = vpop.f32.mrb[0].mxu0
    %v3525 = vadd.f32 0.0, %v3524
    %v3526 = vpop.f32.mrb[0].mxu0
    %3527 = vmatprep.mubr.f32.mxu0 %v3355
    %3528 = vmatmul.mubr.f32.gmra.mrb[0].mxu0 %v3354
    %v3529 = vpop.f32.mrb[0].mxu0
    %v3530 = vadd.f32 0.0, %v3529
    %v3531 = vpop.f32.mrb[0].mxu0
    %3532 = vmatprep.mubr.f32.mxu0 %v3357
    %3533 = vmatmul.mubr.f32.gmra.mrb[0].mxu0 %v3356
    %v3534 = vpop.f32.mrb[0].mxu0
    %v3535 = vadd.f32 0.0, %v3534
    %v3536 = vpop.f32.mrb[0].mxu0
    %3537 = vmatprep.mubr.f32.mxu0 %v3359
    %3538 = vmatmul.mubr.f32.gmra.mrb[0].mxu0 %v3358
    %v3539 = vpop.f32.mrb[0].mxu0
    %v3540 = vadd.f32 0.0, %v3539
    %v3541 = vpop.f32.mrb[0].mxu0
    %3542 = vmatprep.mubr.f32.mxu0 %v3361
    %3543 = vmatmul.mubr.f32.gmra.mrb[0].mxu0 %v3360
    %v3544 = vpop.f32.mrb[0].mxu0
    %v3545 = vadd.f32 0.0, %v3544
    %v3546 = vpop.f32.mrb[0].mxu0
    %3547 = vmatprep.mubr.f32.mxu0 %v3363
    %3548 = vmatmul.mubr.f32.gmra.mrb[0].mxu0 %v3362
    %v3549 = vpop.f32.mrb[0].mxu0
    %v3550 = vadd.f32 0.0, %v3549
    %v3551 = vpop.f32.mrb[0].mxu0
    %3552 = vmatprep.mubr.f32.mxu0 %v3365
    %3553 = vmatmul.mubr.f32.gmra.mrb[0].mxu0 %v3364
    %v3554 = vpop.f32.mrb[0].mxu0
    %v3555 = vadd.f32 0.0, %v3554
    %v3556 = vpop.f32.mrb[0].mxu0
    %3557 = vmatprep.mubr.f32.mxu0 %v3367
    %3558 = vmatmul.mubr.f32.gmra.mrb[0].mxu0 %v3366
    %v3559 = vpop.f32.mrb[0].mxu0
    %v3560 = vadd.f32 0.0, %v3559
    %v3561 = vpop.f32.mrb[0].mxu0
    %3562 = vmatprep.mubr.f32.mxu0 %v3369
    %3563 = vmatmul.mubr.f32.gmra.mrb[0].mxu0 %v3368
    %v3564 = vpop.f32.mrb[0].mxu0
    %v3565 = vadd.f32 0.0, %v3564
    %v3566 = vpop.f32.mrb[0].mxu0
    %3567 = vmatprep.mubr.f32.mxu0 %v3371
    %3568 = vmatmul.mubr.f32.gmra.mrb[0].mxu0 %v3370
    %v3569 = vpop.f32.mrb[0].mxu0
    %v3570 = vadd.f32 0.0, %v3569
    %v3571 = vpop.f32.mrb[0].mxu0
    %3572 = vmatprep.mubr.f32.mxu0 %v3373
    %3573 = vmatmul.mubr.f32.gmra.mrb[0].mxu0 %v3372
    %v3574 = vpop.f32.mrb[0].mxu0
    %v3575 = vadd.f32 0.0, %v3574
    %v3576 = vpop.f32.mrb[0].mxu0
    %3577 = vmatprep.mubr.f32.mxu0 %v3375
    %3578 = vmatmul.mubr.f32.gmra.mrb[0].mxu0 %v3374
    %v3579 = vpop.f32.mrb[0].mxu0
    %v3580 = vadd.f32 0.0, %v3579
    %v3581 = vpop.f32.mrb[0].mxu0
    %3582 = vmatprep.mubr.f32.mxu0 %v3377
    %3583 = vmatmul.mubr.f32.gmra.mrb[0].mxu0 %v3376
    %v3584 = vpop.f32.mrb[0].mxu0
    %v3585 = vadd.f32 0.0, %v3584
    %v3586 = vpop.f32.mrb[0].mxu0
    %3587 = vmatprep.mubr.f32.mxu0 %v3379
    %3588 = vmatmul.mubr.f32.gmra.mrb[0].mxu0 %v3378
    %v3589 = vpop.f32.mrb[0].mxu0
    %v3590 = vadd.f32 0.0, %v3589
    %v3591 = vpop.f32.mrb[0].mxu0
    %3592 = vmatprep.mubr.f32.mxu0 %v3381
    %3593 = vmatmul.mubr.f32.gmra.mrb[0].mxu0 %v3380
    %v3594 = vpop.f32.mrb[0].mxu0
    %v3595 = vadd.f32 0.0, %v3594
    %v3596 = vpop.f32.mrb[0].mxu0
    %3597 = vmatprep.mubr.f32.mxu0 %v3383
    %3598 = vmatmul.mubr.f32.gmra.mrb[0].mxu0 %v3382
    %v3599 = vpop.f32.mrb[0].mxu0
    %v3600 = vadd.f32 0.0, %v3599
    %v3601 = vpop.f32.mrb[0].mxu0
    %3602 = vmatprep.mubr.f32.mxu0 %v3385
    %3603 = vmatmul.mubr.f32.gmra.mrb[0].mxu0 %v3384
    %v3604 = vpop.f32.mrb[0].mxu0
    %v3605 = vadd.f32 0.0, %v3604
    %v3606 = vpop.f32.mrb[0].mxu0
    %3607 = vmatprep.mubr.f32.mxu0 %v3387
    %3608 = vmatmul.mubr.f32.gmra.mrb[0].mxu0 %v3386
    %v3609 = vpop.f32.mrb[0].mxu0
    %v3610 = vadd.f32 0.0, %v3609
    %v3611 = vpop.f32.mrb[0].mxu0
    %3612 = vdwg.mxu0
    %v3613 = vld [vmem:[#allocation10] sm:$0xff]
    %v3614 = vld [vmem:[#allocation10 + $0x8] sm:$0xff]
    %v3615 = vld [vmem:[#allocation10 + $0x10] sm:$0xff]
    %v3616 = vld [vmem:[#allocation10 + $0x18] sm:$0xff]
    %v3617 = vld [vmem:[#allocation10 + $0x20] sm:$0xff]
    %v3618 = vld [vmem:[#allocation10 + $0x28] sm:$0xff]
    %v3619 = vld [vmem:[#allocation10 + $0x30] sm:$0xff]
    %v3620 = vld [vmem:[#allocation10 + $0x38] sm:$0xff]
    %v3622 = vsel %vm310, %v3455, 0
    %v3625 = vsel %vm310, %v3460, 0
    %v3628 = vsel %vm310, %v3465, 0
    %v3631 = vsel %vm310, %v3470, 0
    %v3634 = vsel %vm310, %v3475, 0
    %v3637 = vsel %vm310, %v3480, 0
    %v3640 = vsel %vm310, %v3485, 0
    %v3643 = vsel %vm310, %v3490, 0
    %v3646 = vsel %vm310, %v3495, 0
    %v3649 = vsel %vm310, %v3500, 0
    %v3652 = vsel %vm310, %v3505, 0
    %v3655 = vsel %vm310, %v3510, 0
    %v3658 = vsel %vm310, %v3515, 0
    %v3661 = vsel %vm310, %v3520, 0
    %v3664 = vsel %vm310, %v3525, 0
    %v3667 = vsel %vm310, %v3530, 0
    %v3670 = vsel %vm310, %v3535, 0
    %v3673 = vsel %vm310, %v3540, 0
    %v3676 = vsel %vm310, %v3545, 0
    %v3679 = vsel %vm310, %v3550, 0
    %v3682 = vsel %vm310, %v3555, 0
    %v3685 = vsel %vm310, %v3560, 0
    %v3688 = vsel %vm310, %v3565, 0
    %v3691 = vsel %vm310, %v3570, 0
    %v3694 = vsel %vm310, %v3575, 0
    %v3697 = vsel %vm310, %v3580, 0
    %v3700 = vsel %vm310, %v3585, 0
    %v3703 = vsel %vm310, %v3590, 0
    %v3706 = vsel %vm310, %v3595, 0
    %v3709 = vsel %vm310, %v3600, 0
    %v3712 = vsel %vm310, %v3605, 0
    %v3715 = vsel %vm310, %v3610, 0
    %3717 = vmatprep.subr.mxu0 0.0
    %3718 = vmatpush1.msra.mxu0 %v3613
    %3719 = vmatprep.subr.mxu0 0.0
    %3720 = vmatpush1.msra.mxu0 %v3614
    %3721 = vmatprep.subr.mxu0 0.0
    %3722 = vmatpush1.msra.mxu0 %v3615
    %3723 = vmatprep.subr.mxu0 0.0
    %3724 = vmatpush1.msra.mxu0 %v3616
    %3725 = vmatprep.subr.mxu0 0.0
    %3726 = vmatpush1.msra.mxu0 %v3617
    %3727 = vmatprep.subr.mxu0 0.0
    %3728 = vmatpush1.msra.mxu0 %v3618
    %3729 = vmatprep.subr.mxu0 0.0
    %3730 = vmatpush1.msra.mxu0 %v3619
    %3731 = vmatprep.subr.mxu0 0.0
    %3732 = vmatpush1.msra.mxu0 %v3620
    %3733 = vmatprep.subr.mxu0 0.0
    %3734 = vmatpush1.msra.mxu0 0.0
    %3735 = vmatprep.subr.mxu0 0.0
    %3736 = vmatpush1.msra.mxu0 0.0
    %3737 = vmatprep.subr.mxu0 0.0
    %3738 = vmatpush1.msra.mxu0 0.0
    %3739 = vmatprep.subr.mxu0 0.0
    %3740 = vmatpush1.msra.mxu0 0.0
    %3741 = vmatprep.subr.mxu0 0.0
    %3742 = vmatpush1.msra.mxu0 0.0
    %3743 = vmatprep.subr.mxu0 0.0
    %3744 = vmatpush1.msra.mxu0 0.0
    %3745 = vmatprep.subr.mxu0 0.0
    %3746 = vmatpush1.msra.mxu0 0.0
    %3747 = vmatprep.subr.mxu0 0.0
    %3748 = vmatpush1.msra.mxu0 0.0
    %3749 = vmatprep.subr.mxu0 0.0
    %3750 = vmatpush1.msra.mxu0 0.0
    %3751 = vmatprep.subr.mxu0 0.0
    %3752 = vmatpush1.msra.mxu0 0.0
    %3753 = vmatprep.subr.mxu0 0.0
    %3754 = vmatpush1.msra.mxu0 0.0
    %3755 = vmatprep.subr.mxu0 0.0
    %3756 = vmatpush1.msra.mxu0 0.0
    %3757 = vmatprep.subr.mxu0 0.0
    %3758 = vmatpush1.msra.mxu0 0.0
    %3759 = vmatprep.subr.mxu0 0.0
    %3760 = vmatpush1.msra.mxu0 0.0
    %3761 = vmatprep.subr.mxu0 0.0
    %3762 = vmatpush1.msra.mxu0 0.0
    %3763 = vmatprep.subr.mxu0 0.0
    %3764 = vmatpush1.msra.mxu0 0.0
    %3765 = vmatprep.subr.mxu0 0.0
    %3766 = vmatpush1.msra.mxu0 0.0
    %3767 = vmatprep.subr.mxu0 0.0
    %3768 = vmatpush1.msra.mxu0 0.0
    %3769 = vmatprep.subr.mxu0 0.0
    %3770 = vmatpush1.msra.mxu0 0.0
    %3771 = vmatprep.subr.mxu0 0.0
    %3772 = vmatpush1.msra.mxu0 0.0
    %3773 = vmatprep.subr.mxu0 0.0
    %3774 = vmatpush1.msra.mxu0 0.0
    %3775 = vmatprep.subr.mxu0 0.0
    %3776 = vmatpush1.msra.mxu0 0.0
    %3777 = vmatprep.subr.mxu0 0.0
    %3778 = vmatpush1.msra.mxu0 0.0
    %3779 = vmatprep.subr.mxu0 0.0
    %3780 = vmatpush1.msra.mxu0 0.0
    %3781 = vmatprep.mubr.f32.mxu0 0.0
    %3782 = vmatmul.mubr.f32.gmra.mrb[0].mxu0 %v3622
    %v3783 = vpop.f32.mrb[0].mxu0
    %v3784 = vadd.f32 0.0, %v3783
    %v3785 = vpop.f32.mrb[0].mxu0
    %3786 = vmatprep.mubr.f32.mxu0 0.0
    %3787 = vmatmul.mubr.f32.gmra.mrb[0].mxu0 %v3625
    %v3788 = vpop.f32.mrb[0].mxu0
    %v3789 = vadd.f32 0.0, %v3788
    %v3790 = vpop.f32.mrb[0].mxu0
    %3791 = vmatprep.mubr.f32.mxu0 0.0
    %3792 = vmatmul.mubr.f32.gmra.mrb[0].mxu0 %v3628
    %v3793 = vpop.f32.mrb[0].mxu0
    %v3794 = vadd.f32 0.0, %v3793
    %v3795 = vpop.f32.mrb[0].mxu0
    %3796 = vmatprep.mubr.f32.mxu0 0.0
    %3797 = vmatmul.mubr.f32.gmra.mrb[0].mxu0 %v3631
    %v3798 = vpop.f32.mrb[0].mxu0
    %v3799 = vadd.f32 0.0, %v3798
    %v3800 = vpop.f32.mrb[0].mxu0
    %3801 = vmatprep.mubr.f32.mxu0 0.0
    %3802 = vmatmul.mubr.f32.gmra.mrb[0].mxu0 %v3634
    %v3803 = vpop.f32.mrb[0].mxu0
    %v3804 = vadd.f32 0.0, %v3803
    %v3805 = vpop.f32.mrb[0].mxu0
    %3806 = vmatprep.mubr.f32.mxu0 0.0
    %3807 = vmatmul.mubr.f32.gmra.mrb[0].mxu0 %v3637
    %v3808 = vpop.f32.mrb[0].mxu0
    %v3809 = vadd.f32 0.0, %v3808
    %v3810 = vpop.f32.mrb[0].mxu0
    %3811 = vmatprep.mubr.f32.mxu0 0.0
    %3812 = vmatmul.mubr.f32.gmra.mrb[0].mxu0 %v3640
    %v3813 = vpop.f32.mrb[0].mxu0
    %v3814 = vadd.f32 0.0, %v3813
    %v3815 = vpop.f32.mrb[0].mxu0
    %3816 = vmatprep.mubr.f32.mxu0 0.0
    %3817 = vmatmul.mubr.f32.gmra.mrb[0].mxu0 %v3643
    %v3818 = vpop.f32.mrb[0].mxu0
    %v3819 = vadd.f32 0.0, %v3818
    %v3820 = vpop.f32.mrb[0].mxu0
    %3821 = vmatprep.mubr.f32.mxu0 0.0
    %3822 = vmatmul.mubr.f32.gmra.mrb[0].mxu0 %v3646
    %v3823 = vpop.f32.mrb[0].mxu0
    %v3824 = vadd.f32 0.0, %v3823
    %v3825 = vpop.f32.mrb[0].mxu0
    %3826 = vmatprep.mubr.f32.mxu0 0.0
    %3827 = vmatmul.mubr.f32.gmra.mrb[0].mxu0 %v3649
    %v3828 = vpop.f32.mrb[0].mxu0
    %v3829 = vadd.f32 0.0, %v3828
    %v3830 = vpop.f32.mrb[0].mxu0
    %3831 = vmatprep.mubr.f32.mxu0 0.0
    %3832 = vmatmul.mubr.f32.gmra.mrb[0].mxu0 %v3652
    %v3833 = vpop.f32.mrb[0].mxu0
    %v3834 = vadd.f32 0.0, %v3833
    %v3835 = vpop.f32.mrb[0].mxu0
    %3836 = vmatprep.mubr.f32.mxu0 0.0
    %3837 = vmatmul.mubr.f32.gmra.mrb[0].mxu0 %v3655
    %v3838 = vpop.f32.mrb[0].mxu0
    %v3839 = vadd.f32 0.0, %v3838
    %v3840 = vpop.f32.mrb[0].mxu0
    %3841 = vmatprep.mubr.f32.mxu0 0.0
    %3842 = vmatmul.mubr.f32.gmra.mrb[0].mxu0 %v3658
    %v3843 = vpop.f32.mrb[0].mxu0
    %v3844 = vadd.f32 0.0, %v3843
    %v3845 = vpop.f32.mrb[0].mxu0
    %3846 = vmatprep.mubr.f32.mxu0 0.0
    %3847 = vmatmul.mubr.f32.gmra.mrb[0].mxu0 %v3661
    %v3848 = vpop.f32.mrb[0].mxu0
    %v3849 = vadd.f32 0.0, %v3848
    %v3850 = vpop.f32.mrb[0].mxu0
    %3851 = vmatprep.mubr.f32.mxu0 0.0
    %3852 = vmatmul.mubr.f32.gmra.mrb[0].mxu0 %v3664
    %v3853 = vpop.f32.mrb[0].mxu0
    %v3854 = vadd.f32 0.0, %v3853
    %v3855 = vpop.f32.mrb[0].mxu0
    %3856 = vmatprep.mubr.f32.mxu0 0.0
    %3857 = vmatmul.mubr.f32.gmra.mrb[0].mxu0 %v3667
    %v3858 = vpop.f32.mrb[0].mxu0
    %v3859 = vadd.f32 0.0, %v3858
    %v3860 = vpop.f32.mrb[0].mxu0
    %3861 = vmatprep.mubr.f32.mxu0 0.0
    %3862 = vmatmul.mubr.f32.gmra.mrb[0].mxu0 %v3670
    %v3863 = vpop.f32.mrb[0].mxu0
    %v3864 = vadd.f32 0.0, %v3863
    %v3865 = vpop.f32.mrb[0].mxu0
    %3866 = vmatprep.mubr.f32.mxu0 0.0
    %3867 = vmatmul.mubr.f32.gmra.mrb[0].mxu0 %v3673
    %v3868 = vpop.f32.mrb[0].mxu0
    %v3869 = vadd.f32 0.0, %v3868
    %v3870 = vpop.f32.mrb[0].mxu0
    %3871 = vmatprep.mubr.f32.mxu0 0.0
    %3872 = vmatmul.mubr.f32.gmra.mrb[0].mxu0 %v3676
    %v3873 = vpop.f32.mrb[0].mxu0
    %v3874 = vadd.f32 0.0, %v3873
    %v3875 = vpop.f32.mrb[0].mxu0
    %3876 = vmatprep.mubr.f32.mxu0 0.0
    %3877 = vmatmul.mubr.f32.gmra.mrb[0].mxu0 %v3679
    %v3878 = vpop.f32.mrb[0].mxu0
    %v3879 = vadd.f32 0.0, %v3878
    %v3880 = vpop.f32.mrb[0].mxu0
    %3881 = vmatprep.mubr.f32.mxu0 0.0
    %3882 = vmatmul.mubr.f32.gmra.mrb[0].mxu0 %v3682
    %v3883 = vpop.f32.mrb[0].mxu0
    %v3884 = vadd.f32 0.0, %v3883
    %v3885 = vpop.f32.mrb[0].mxu0
    %3886 = vmatprep.mubr.f32.mxu0 0.0
    %3887 = vmatmul.mubr.f32.gmra.mrb[0].mxu0 %v3685
    %v3888 = vpop.f32.mrb[0].mxu0
    %v3889 = vadd.f32 0.0, %v3888
    %v3890 = vpop.f32.mrb[0].mxu0
    %3891 = vmatprep.mubr.f32.mxu0 0.0
    %3892 = vmatmul.mubr.f32.gmra.mrb[0].mxu0 %v3688
    %v3893 = vpop.f32.mrb[0].mxu0
    %v3894 = vadd.f32 0.0, %v3893
    %v3895 = vpop.f32.mrb[0].mxu0
    %3896 = vmatprep.mubr.f32.mxu0 0.0
    %3897 = vmatmul.mubr.f32.gmra.mrb[0].mxu0 %v3691
    %v3898 = vpop.f32.mrb[0].mxu0
    %v3899 = vadd.f32 0.0, %v3898
    %v3900 = vpop.f32.mrb[0].mxu0
    %3901 = vmatprep.mubr.f32.mxu0 0.0
    %3902 = vmatmul.mubr.f32.gmra.mrb[0].mxu0 %v3694
    %v3903 = vpop.f32.mrb[0].mxu0
    %v3904 = vadd.f32 0.0, %v3903
    %v3905 = vpop.f32.mrb[0].mxu0
    %3906 = vmatprep.mubr.f32.mxu0 0.0
    %3907 = vmatmul.mubr.f32.gmra.mrb[0].mxu0 %v3697
    %v3908 = vpop.f32.mrb[0].mxu0
    %v3909 = vadd.f32 0.0, %v3908
    %v3910 = vpop.f32.mrb[0].mxu0
    %3911 = vmatprep.mubr.f32.mxu0 0.0
    %3912 = vmatmul.mubr.f32.gmra.mrb[0].mxu0 %v3700
    %v3913 = vpop.f32.mrb[0].mxu0
    %v3914 = vadd.f32 0.0, %v3913
    %v3915 = vpop.f32.mrb[0].mxu0
    %3916 = vmatprep.mubr.f32.mxu0 0.0
    %3917 = vmatmul.mubr.f32.gmra.mrb[0].mxu0 %v3703
    %v3918 = vpop.f32.mrb[0].mxu0
    %v3919 = vadd.f32 0.0, %v3918
    %v3920 = vpop.f32.mrb[0].mxu0
    %3921 = vmatprep.mubr.f32.mxu0 0.0
    %3922 = vmatmul.mubr.f32.gmra.mrb[0].mxu0 %v3706
    %v3923 = vpop.f32.mrb[0].mxu0
    %v3924 = vadd.f32 0.0, %v3923
    %v3925 = vpop.f32.mrb[0].mxu0
    %3926 = vmatprep.mubr.f32.mxu0 0.0
    %3927 = vmatmul.mubr.f32.gmra.mrb[0].mxu0 %v3709
    %v3928 = vpop.f32.mrb[0].mxu0
    %v3929 = vadd.f32 0.0, %v3928
    %v3930 = vpop.f32.mrb[0].mxu0
    %3931 = vmatprep.mubr.f32.mxu0 0.0
    %3932 = vmatmul.mubr.f32.gmra.mrb[0].mxu0 %v3712
    %v3933 = vpop.f32.mrb[0].mxu0
    %v3934 = vadd.f32 0.0, %v3933
    %v3935 = vpop.f32.mrb[0].mxu0
    %3936 = vmatprep.mubr.f32.mxu0 0.0
    %3937 = vmatmul.mubr.f32.gmra.mrb[0].mxu0 %v3715
    %v3938 = vpop.f32.mrb[0].mxu0
    %v3939 = vadd.f32 0.0, %v3938
    %v3940 = vpop.f32.mrb[0].mxu0
    %3941 = vdwg.mxu0
    %v3942 = vmul.f32 %v3784, %v3784
    %v3943 = vmul.f32 %v3789, %v3789
    %v3944 = vmul.f32 %v3794, %v3794
    %v3945 = vmul.f32 %v3799, %v3799
    %v3946 = vmul.f32 %v3804, %v3804
    %v3947 = vmul.f32 %v3809, %v3809
    %v3948 = vmul.f32 %v3814, %v3814
    %v3949 = vmul.f32 %v3819, %v3819
    %v3950 = vmul.f32 %v3824, %v3824
    %v3951 = vmul.f32 %v3829, %v3829
    %v3952 = vmul.f32 %v3834, %v3834
    %v3953 = vmul.f32 %v3839, %v3839
    %v3954 = vmul.f32 %v3844, %v3844
    %v3955 = vmul.f32 %v3849, %v3849
    %v3956 = vmul.f32 %v3854, %v3854
    %v3957 = vmul.f32 %v3859, %v3859
    %v3958 = vsub.f32 %v3864, %v3942
    %v3959 = vsub.f32 %v3869, %v3943
    %v3960 = vsub.f32 %v3874, %v3944
    %v3961 = vsub.f32 %v3879, %v3945
    %v3962 = vsub.f32 %v3884, %v3946
    %v3963 = vsub.f32 %v3889, %v3947
    %v3964 = vsub.f32 %v3894, %v3948
    %v3965 = vsub.f32 %v3899, %v3949
    %v3966 = vsub.f32 %v3904, %v3950
    %v3967 = vsub.f32 %v3909, %v3951
    %v3968 = vsub.f32 %v3914, %v3952
    %v3969 = vsub.f32 %v3919, %v3953
    %v3970 = vsub.f32 %v3924, %v3954
    %v3971 = vsub.f32 %v3929, %v3955
    %v3972 = vsub.f32 %v3934, %v3956
    %v3973 = vsub.f32 %v3939, %v3957
    %v3974 = vsub.f32 %v3292, %v3784
    %v3975 = vsub.f32 %v3293, %v3789
    %v3976 = vsub.f32 %v3294, %v3794
    %v3977 = vsub.f32 %v3295, %v3799
    %v3978 = vsub.f32 %v3296, %v3804
    %v3979 = vsub.f32 %v3297, %v3809
    %v3980 = vsub.f32 %v3298, %v3814
    %v3981 = vsub.f32 %v3299, %v3819
    %v3982 = vsub.f32 %v3300, %v3824
    %v3983 = vsub.f32 %v3301, %v3829
    %v3984 = vsub.f32 %v3302, %v3834
    %v3985 = vsub.f32 %v3303, %v3839
    %v3986 = vsub.f32 %v3304, %v3844
    %v3987 = vsub.f32 %v3305, %v3849
    %v3988 = vsub.f32 %v3306, %v3854
    %v3989 = vsub.f32 %v3307, %v3859
    %v3990 = vadd.f32 %v3958, 1e-05
    %v3991 = vadd.f32 %v3959, 1e-05
    %v3992 = vadd.f32 %v3960, 1e-05
    %v3993 = vadd.f32 %v3961, 1e-05
    %v3994 = vadd.f32 %v3962, 1e-05
    %v3995 = vadd.f32 %v3963, 1e-05
    %v3996 = vadd.f32 %v3964, 1e-05
    %v3997 = vadd.f32 %v3965, 1e-05
    %v3998 = vadd.f32 %v3966, 1e-05
    %v3999 = vadd.f32 %v3967, 1e-05
    %v4000 = vadd.f32 %v3968, 1e-05
    %v4001 = vadd.f32 %v3969, 1e-05
    %v4002 = vadd.f32 %v3970, 1e-05
    %v4003 = vadd.f32 %v3971, 1e-05
    %v4004 = vadd.f32 %v3972, 1e-05
    %v4005 = vadd.f32 %v3973, 1e-05
    %v4006 = vrsqrt.pop %v3990
    %v4007 = vrsqrt.pop %v3991
    %v4008 = vrsqrt.pop %v3992
    %v4009 = vrsqrt.pop %v3993
    %v4010 = vrsqrt.pop %v3994
    %v4011 = vrsqrt.pop %v3995
    %v4012 = vrsqrt.pop %v3996
    %v4013 = vrsqrt.pop %v3997
    %v4014 = vrsqrt.pop %v3998
    %v4015 = vrsqrt.pop %v3999
    %v4016 = vrsqrt.pop %v4000
    %v4017 = vrsqrt.pop %v4001
    %v4018 = vrsqrt.pop %v4002
    %v4019 = vrsqrt.pop %v4003
    %v4020 = vrsqrt.pop %v4004
    %v4021 = vrsqrt.pop %v4005
    %v4022 = vmul.f32 %v3974, %v4006
    %v4023 = vmul.f32 %v3975, %v4007
    %v4024 = vmul.f32 %v3976, %v4008
    %v4025 = vmul.f32 %v3977, %v4009
    %v4026 = vmul.f32 %v3978, %v4010
    %v4027 = vmul.f32 %v3979, %v4011
    %v4028 = vmul.f32 %v3980, %v4012
    %v4029 = vmul.f32 %v3981, %v4013
    %v4030 = vmul.f32 %v3982, %v4014
    %v4031 = vmul.f32 %v3983, %v4015
    %v4032 = vmul.f32 %v3984, %v4016
    %v4033 = vmul.f32 %v3985, %v4017
    %v4034 = vmul.f32 %v3986, %v4018
    %v4035 = vmul.f32 %v3987, %v4019
    %v4036 = vmul.f32 %v3988, %v4020
    %v4037 = vmul.f32 %v3989, %v4021
    %v4038 = vld [vmem:[%s14] sm:$0xff]
    %v4039 = vld [vmem:[%s14 + $0x8] sm:$0xff]
    %v4040 = vld [vmem:[%s14 + $0x10] sm:$0xff]
    %v4041 = vld [vmem:[%s14 + $0x18] sm:$0xff]
    %v4042 = vld [vmem:[%s14 + $0x20] sm:$0xff]
    %v4043 = vld [vmem:[%s14 + $0x28] sm:$0xff]
    %v4044 = vld [vmem:[%s14 + $0x30] sm:$0xff]
    %v4045 = vld [vmem:[%s14 + $0x38] sm:$0xff]
    %v4046 = vld [vmem:[%s14 + $0x40] sm:$0xff]
    %v4047 = vld [vmem:[%s14 + $0x48] sm:$0xff]
    %v4048 = vld [vmem:[%s14 + $0x50] sm:$0xff]
    %v4049 = vld [vmem:[%s14 + $0x58] sm:$0xff]
    %v4050 = vld [vmem:[%s14 + $0x60] sm:$0xff]
    %v4051 = vld [vmem:[%s14 + $0x68] sm:$0xff]
    %v4052 = vld [vmem:[%s14 + $0x70] sm:$0xff]
    %v4053 = vld [vmem:[%s14 + $0x78] sm:$0xff]
    %4055 = vset.pattern.permute.xlu0 0
    %4056 = vperm.xlu0 %4055, %v4038
    %v4057 = vpop.permute.xlu0 %4056
    %4060 = vset.pattern.permute.xlu0 0
    %4061 = vperm.xlu0 %4060, %v4039
    %v4062 = vpop.permute.xlu0 %4061
    %4065 = vset.pattern.permute.xlu0 0
    %4066 = vperm.xlu0 %4065, %v4040
    %v4067 = vpop.permute.xlu0 %4066
    %4070 = vset.pattern.permute.xlu0 0
    %4071 = vperm.xlu0 %4070, %v4041
    %v4072 = vpop.permute.xlu0 %4071
    %4075 = vset.pattern.permute.xlu0 0
    %4076 = vperm.xlu0 %4075, %v4042
    %v4077 = vpop.permute.xlu0 %4076
    %4080 = vset.pattern.permute.xlu0 0
    %4081 = vperm.xlu0 %4080, %v4043
    %v4082 = vpop.permute.xlu0 %4081
    %4085 = vset.pattern.permute.xlu0 0
    %4086 = vperm.xlu0 %4085, %v4044
    %v4087 = vpop.permute.xlu0 %4086
    %4090 = vset.pattern.permute.xlu0 0
    %4091 = vperm.xlu0 %4090, %v4045
    %v4092 = vpop.permute.xlu0 %4091
    %4095 = vset.pattern.permute.xlu0 0
    %4096 = vperm.xlu0 %4095, %v4046
    %v4097 = vpop.permute.xlu0 %4096
    %4100 = vset.pattern.permute.xlu0 0
    %4101 = vperm.xlu0 %4100, %v4047
    %v4102 = vpop.permute.xlu0 %4101
    %4105 = vset.pattern.permute.xlu0 0
    %4106 = vperm.xlu0 %4105, %v4048
    %v4107 = vpop.permute.xlu0 %4106
    %4110 = vset.pattern.permute.xlu0 0
    %4111 = vperm.xlu0 %4110, %v4049
    %v4112 = vpop.permute.xlu0 %4111
    %4115 = vset.pattern.permute.xlu0 0
    %4116 = vperm.xlu0 %4115, %v4050
    %v4117 = vpop.permute.xlu0 %4116
    %4120 = vset.pattern.permute.xlu0 0
    %4121 = vperm.xlu0 %4120, %v4051
    %v4122 = vpop.permute.xlu0 %4121
    %4125 = vset.pattern.permute.xlu0 0
    %4126 = vperm.xlu0 %4125, %v4052
    %v4127 = vpop.permute.xlu0 %4126
    %4130 = vset.pattern.permute.xlu0 0
    %4131 = vperm.xlu0 %4130, %v4053
    %v4132 = vpop.permute.xlu0 %4131
    %v4134 = vmul.f32 %v4022, %v4057
    %v4135 = vmul.f32 %v4023, %v4062
    %v4136 = vmul.f32 %v4024, %v4067
    %v4137 = vmul.f32 %v4025, %v4072
    %v4138 = vmul.f32 %v4026, %v4077
    %v4139 = vmul.f32 %v4027, %v4082
    %v4140 = vmul.f32 %v4028, %v4087
    %v4141 = vmul.f32 %v4029, %v4092
    %v4142 = vmul.f32 %v4030, %v4097
    %v4143 = vmul.f32 %v4031, %v4102
    %v4144 = vmul.f32 %v4032, %v4107
    %v4145 = vmul.f32 %v4033, %v4112
    %v4146 = vmul.f32 %v4034, %v4117
    %v4147 = vmul.f32 %v4035, %v4122
    %v4148 = vmul.f32 %v4036, %v4127
    %v4149 = vmul.f32 %v4037, %v4132
    %4150 = vset.pattern.permute.xlu0 1
    %4151 = vperm.xlu0 %4150, %v4038
    %v4152 = vpop.permute.xlu0 %4151
    %4154 = vset.pattern.permute.xlu0 1
    %4155 = vperm.xlu0 %4154, %v4039
    %v4156 = vpop.permute.xlu0 %4155
    %4158 = vset.pattern.permute.xlu0 1
    %4159 = vperm.xlu0 %4158, %v4040
    %v4160 = vpop.permute.xlu0 %4159
    %4162 = vset.pattern.permute.xlu0 1
    %4163 = vperm.xlu0 %4162, %v4041
    %v4164 = vpop.permute.xlu0 %4163
    %4166 = vset.pattern.permute.xlu0 1
    %4167 = vperm.xlu0 %4166, %v4042
    %v4168 = vpop.permute.xlu0 %4167
    %4170 = vset.pattern.permute.xlu0 1
    %4171 = vperm.xlu0 %4170, %v4043
    %v4172 = vpop.permute.xlu0 %4171
    %4174 = vset.pattern.permute.xlu0 1
    %4175 = vperm.xlu0 %4174, %v4044
    %v4176 = vpop.permute.xlu0 %4175
    %4178 = vset.pattern.permute.xlu0 1
    %4179 = vperm.xlu0 %4178, %v4045
    %v4180 = vpop.permute.xlu0 %4179
    %4182 = vset.pattern.permute.xlu0 1
    %4183 = vperm.xlu0 %4182, %v4046
    %v4184 = vpop.permute.xlu0 %4183
    %4186 = vset.pattern.permute.xlu0 1
    %4187 = vperm.xlu0 %4186, %v4047
    %v4188 = vpop.permute.xlu0 %4187
    %4190 = vset.pattern.permute.xlu0 1
    %4191 = vperm.xlu0 %4190, %v4048
    %v4192 = vpop.permute.xlu0 %4191
    %4194 = vset.pattern.permute.xlu0 1
    %4195 = vperm.xlu0 %4194, %v4049
    %v4196 = vpop.permute.xlu0 %4195
    %4198 = vset.pattern.permute.xlu0 1
    %4199 = vperm.xlu0 %4198, %v4050
    %v4200 = vpop.permute.xlu0 %4199
    %4202 = vset.pattern.permute.xlu0 1
    %4203 = vperm.xlu0 %4202, %v4051
    %v4204 = vpop.permute.xlu0 %4203
    %4206 = vset.pattern.permute.xlu0 1
    %4207 = vperm.xlu0 %4206, %v4052
    %v4208 = vpop.permute.xlu0 %4207
    %4210 = vset.pattern.permute.xlu0 1
    %4211 = vperm.xlu0 %4210, %v4053
    %v4212 = vpop.permute.xlu0 %4211
    %v4214 = vadd.f32 %v4134, %v4152
    %v4215 = vadd.f32 %v4135, %v4156
    %v4216 = vadd.f32 %v4136, %v4160
    %v4217 = vadd.f32 %v4137, %v4164
    %v4218 = vadd.f32 %v4138, %v4168
    %v4219 = vadd.f32 %v4139, %v4172
    %v4220 = vadd.f32 %v4140, %v4176
    %v4221 = vadd.f32 %v4141, %v4180
    %v4222 = vadd.f32 %v4142, %v4184
    %v4223 = vadd.f32 %v4143, %v4188
    %v4224 = vadd.f32 %v4144, %v4192
    %v4225 = vadd.f32 %v4145, %v4196
    %v4226 = vadd.f32 %v4146, %v4200
    %v4227 = vadd.f32 %v4147, %v4204
    %v4228 = vadd.f32 %v4148, %v4208
    %v4229 = vadd.f32 %v4149, %v4212
    %v4230 = vmax.f32 %v4214, 0.0
    %v4231 = vmax.f32 %v4215, 0.0
    %v4232 = vmax.f32 %v4216, 0.0
    %v4233 = vmax.f32 %v4217, 0.0
    %v4234 = vmax.f32 %v4218, 0.0
    %v4235 = vmax.f32 %v4219, 0.0
    %v4236 = vmax.f32 %v4220, 0.0
    %v4237 = vmax.f32 %v4221, 0.0
    %v4238 = vmax.f32 %v4222, 0.0
    %v4239 = vmax.f32 %v4223, 0.0
    %v4240 = vmax.f32 %v4224, 0.0
    %v4241 = vmax.f32 %v4225, 0.0
    %v4242 = vmax.f32 %v4226, 0.0
    %v4243 = vmax.f32 %v4227, 0.0
    %v4244 = vmax.f32 %v4228, 0.0
    %v4245 = vmax.f32 %v4229, 0.0
    %v4246 = vld [vmem:[#allocation12] sm:$0xf]
    %v4247 = vld [vmem:[#allocation12 + $0x4] sm:$0xf]
    %v4248 = vld [vmem:[#allocation12 + $0x8] sm:$0xf]
    %v4249 = vld [vmem:[#allocation12 + $0xc] sm:$0xf]
    %v4250 = vld [vmem:[#allocation12 + $0x10] sm:$0xf]
    %v4251 = vld [vmem:[#allocation12 + $0x14] sm:$0xf]
    %v4252 = vld [vmem:[#allocation12 + $0x18] sm:$0xf]
    %v4253 = vld [vmem:[#allocation12 + $0x1c] sm:$0xf]
    %v4254 = vld [vmem:[#allocation12 + $0x20] sm:$0xf]
    %v4255 = vld [vmem:[#allocation12 + $0x24] sm:$0xf]
    %v4256 = vld [vmem:[#allocation12 + $0x28] sm:$0xf]
    %v4257 = vld [vmem:[#allocation12 + $0x2c] sm:$0xf]
    %v4258 = vld [vmem:[#allocation12 + $0x30] sm:$0xf]
    %v4259 = vld [vmem:[#allocation12 + $0x34] sm:$0xf]
    %v4260 = vld [vmem:[#allocation12 + $0x38] sm:$0xf]
    %v4261 = vld [vmem:[#allocation12 + $0x3c] sm:$0xf]
    %v4262 = vld [vmem:[#allocation12 + $0x40] sm:$0xf]
    %v4263 = vld [vmem:[#allocation12 + $0x44] sm:$0xf]
    %v4264 = vld [vmem:[#allocation12 + $0x48] sm:$0xf]
    %v4265 = vld [vmem:[#allocation12 + $0x4c] sm:$0xf]
    %v4266 = vld [vmem:[#allocation12 + $0x50] sm:$0xf]
    %v4267 = vld [vmem:[#allocation12 + $0x54] sm:$0xf]
    %v4268 = vld [vmem:[#allocation12 + $0x58] sm:$0xf]
    %v4269 = vld [vmem:[#allocation12 + $0x5c] sm:$0xf]
    %v4270 = vld [vmem:[#allocation12 + $0x60] sm:$0xf]
    %v4271 = vld [vmem:[#allocation12 + $0x64] sm:$0xf]
    %v4272 = vld [vmem:[#allocation12 + $0x68] sm:$0xf]
    %v4273 = vld [vmem:[#allocation12 + $0x6c] sm:$0xf]
    %v4274 = vld [vmem:[#allocation12 + $0x70] sm:$0xf]
    %v4275 = vld [vmem:[#allocation12 + $0x74] sm:$0xf]
    %v4276 = vld [vmem:[#allocation12 + $0x78] sm:$0xf]
    %v4277 = vld [vmem:[#allocation12 + $0x7c] sm:$0xf]
    %v4278 = vld [vmem:[#allocation12 + $0x80] sm:$0xf]
    %v4279 = vld [vmem:[#allocation12 + $0x84] sm:$0xf]
    %v4280 = vld [vmem:[#allocation12 + $0x88] sm:$0xf]
    %v4281 = vld [vmem:[#allocation12 + $0x8c] sm:$0xf]
    %v4282 = vpack.c.bf16 %v4231, %v4230
    %v4283 = vpack.c.bf16 %v4233, %v4232
    %v4284 = vpack.c.bf16 %v4235, %v4234
    %v4285 = vpack.c.bf16 %v4237, %v4236
    %v4286 = vpack.c.bf16 %v4239, %v4238
    %v4287 = vpack.c.bf16 %v4241, %v4240
    %v4288 = vpack.c.bf16 %v4243, %v4242
    %v4289 = vpack.c.bf16 %v4245, %v4244
    %v4326 = vunpack.c.l.b16 %v4246
    %v4327 = vunpack.c.l.b16 %v4247
    %v4328 = vunpack.c.l.b16 %v4248
    %v4329 = vunpack.c.l.b16 %v4249
    %v4330 = vunpack.c.l.b16 %v4250
    %v4331 = vunpack.c.l.b16 %v4251
    %v4332 = vunpack.c.l.b16 %v4252
    %v4333 = vunpack.c.l.b16 %v4253
    %v4334 = vunpack.c.l.b16 %v4254
    %v4335 = vunpack.c.l.b16 %v4255
    %v4336 = vunpack.c.l.b16 %v4256
    %v4337 = vunpack.c.l.b16 %v4257
    %v4338 = vunpack.c.l.b16 %v4258
    %v4339 = vunpack.c.l.b16 %v4259
    %v4340 = vunpack.c.l.b16 %v4260
    %v4341 = vunpack.c.l.b16 %v4261
    %v4342 = vunpack.c.l.b16 %v4262
    %v4343 = vunpack.c.l.b16 %v4263
    %v4344 = vunpack.c.l.b16 %v4264
    %v4345 = vunpack.c.l.b16 %v4265
    %v4346 = vunpack.c.l.b16 %v4266
    %v4347 = vunpack.c.l.b16 %v4267
    %v4348 = vunpack.c.l.b16 %v4268
    %v4349 = vunpack.c.l.b16 %v4269
    %v4350 = vunpack.c.l.b16 %v4270
    %v4351 = vunpack.c.l.b16 %v4271
    %v4352 = vunpack.c.l.b16 %v4272
    %v4353 = vunpack.c.l.b16 %v4273
    %v4354 = vunpack.c.l.b16 %v4274
    %v4355 = vunpack.c.l.b16 %v4275
    %v4356 = vunpack.c.l.b16 %v4276
    %v4357 = vunpack.c.l.b16 %v4277
    %v4358 = vunpack.c.l.b16 %v4278
    %v4359 = vunpack.c.l.b16 %v4279
    %v4360 = vunpack.c.l.b16 %v4280
    %v4361 = vunpack.c.l.b16 %v4281
    %v4362 = vpack.c.b16 %v4327, %v4326
    %v4363 = vpack.c.b16 %v4329, %v4328
    %v4364 = vpack.c.b16 %v4331, %v4330
    %v4365 = vpack.c.b16 %v4333, %v4332
    %v4366 = vpack.c.b16 %v4335, %v4334
    %v4367 = vpack.c.b16 %v4337, %v4336
    %v4368 = vpack.c.b16 %v4339, %v4338
    %v4369 = vpack.c.b16 %v4341, %v4340
    %v4370 = vpack.c.b16 %v4343, %v4342
    %v4371 = vpack.c.b16 %v4345, %v4344
    %v4372 = vpack.c.b16 %v4347, %v4346
    %v4373 = vpack.c.b16 %v4349, %v4348
    %v4374 = vpack.c.b16 %v4351, %v4350
    %v4375 = vpack.c.b16 %v4353, %v4352
    %v4376 = vpack.c.b16 %v4355, %v4354
    %v4377 = vpack.c.b16 %v4357, %v4356
    %v4378 = vpack.c.b16 %v4359, %v4358
    %v4379 = vpack.c.b16 %v4361, %v4360
    %4398 = vmatprep.subr.bf16.mxu0 0
    %4399 = vmatpush1.bf16.msra.mxu0 %v4282
    %4400 = vmatprep.subr.bf16.mxu0 0
    %4401 = vmatpush1.bf16.msra.mxu0 %v4283
    %4402 = vmatprep.subr.bf16.mxu0 0
    %4403 = vmatpush1.bf16.msra.mxu0 %v4284
    %4404 = vmatprep.subr.bf16.mxu0 0
    %4405 = vmatpush1.bf16.msra.mxu0 %v4285
    %4406 = vmatprep.subr.bf16.mxu0 0
    %4407 = vmatpush1.bf16.msra.mxu0 %v4286
    %4408 = vmatprep.subr.bf16.mxu0 0
    %4409 = vmatpush1.bf16.msra.mxu0 %v4287
    %4410 = vmatprep.subr.bf16.mxu0 0
    %4411 = vmatpush1.bf16.msra.mxu0 %v4288
    %4412 = vmatprep.subr.bf16.mxu0 0
    %4413 = vmatpush1.bf16.msra.mxu0 %v4289
    %4414 = vmatprep.subr.bf16.mxu0 0
    %4415 = vmatpush1.bf16.msra.mxu0 0
    %4416 = vmatprep.subr.bf16.mxu0 0
    %4417 = vmatpush1.bf16.msra.mxu0 0
    %4418 = vmatprep.subr.bf16.mxu0 0
    %4419 = vmatpush1.bf16.msra.mxu0 0
    %4420 = vmatprep.subr.bf16.mxu0 0
    %4421 = vmatpush1.bf16.msra.mxu0 0
    %4422 = vmatprep.subr.bf16.mxu0 0
    %4423 = vmatpush1.bf16.msra.mxu0 0
    %4424 = vmatprep.subr.bf16.mxu0 0
    %4425 = vmatpush1.bf16.msra.mxu0 0
    %4426 = vmatprep.subr.bf16.mxu0 0
    %4427 = vmatpush1.bf16.msra.mxu0 0
    %4428 = vmatprep.subr.bf16.mxu0 0
    %4429 = vmatpush1.bf16.msra.mxu0 0
    %4430 = vmatprep.mubr.bf16.mxu0 0
    %4431 = vmatmul.mubr.bf16.gmra.mrb[0].mxu0 %v4362
    %v4432 = vpop.f32.mrb[0].mxu0
    %v4433 = vadd.f32 0.0, %v4432
    %v4434 = vpop.f32.mrb[0].mxu0
    %v4435 = vpop.f32.mrb[0].mxu0
    %v4436 = vadd.f32 0.0, %v4435
    %v4437 = vpop.f32.mrb[0].mxu0
    %4438 = vmatprep.mubr.bf16.mxu0 0
    %4439 = vmatmul.mubr.bf16.gmra.mrb[0].mxu0 %v4363
    %v4440 = vpop.f32.mrb[0].mxu0
    %v4441 = vadd.f32 0.0, %v4440
    %v4442 = vpop.f32.mrb[0].mxu0
    %v4443 = vpop.f32.mrb[0].mxu0
    %v4444 = vadd.f32 0.0, %v4443
    %v4445 = vpop.f32.mrb[0].mxu0
    %4446 = vmatprep.mubr.bf16.mxu0 0
    %4447 = vmatmul.mubr.bf16.gmra.mrb[0].mxu0 %v4364
    %v4448 = vpop.f32.mrb[0].mxu0
    %v4449 = vadd.f32 0.0, %v4448
    %v4450 = vpop.f32.mrb[0].mxu0
    %v4451 = vpop.f32.mrb[0].mxu0
    %v4452 = vadd.f32 0.0, %v4451
    %v4453 = vpop.f32.mrb[0].mxu0
    %4454 = vmatprep.mubr.bf16.mxu0 0
    %4455 = vmatmul.mubr.bf16.gmra.mrb[0].mxu0 %v4365
    %v4456 = vpop.f32.mrb[0].mxu0
    %v4457 = vadd.f32 0.0, %v4456
    %v4458 = vpop.f32.mrb[0].mxu0
    %v4459 = vpop.f32.mrb[0].mxu0
    %v4460 = vadd.f32 0.0, %v4459
    %v4461 = vpop.f32.mrb[0].mxu0
    %4462 = vmatprep.mubr.bf16.mxu0 0
    %4463 = vmatmul.mubr.bf16.gmra.mrb[0].mxu0 %v4366
    %v4464 = vpop.f32.mrb[0].mxu0
    %v4465 = vadd.f32 0.0, %v4464
    %v4466 = vpop.f32.mrb[0].mxu0
    %v4467 = vpop.f32.mrb[0].mxu0
    %v4468 = vadd.f32 0.0, %v4467
    %v4469 = vpop.f32.mrb[0].mxu0
    %4470 = vmatprep.mubr.bf16.mxu0 0
    %4471 = vmatmul.mubr.bf16.gmra.mrb[0].mxu0 %v4367
    %v4472 = vpop.f32.mrb[0].mxu0
    %v4473 = vadd.f32 0.0, %v4472
    %v4474 = vpop.f32.mrb[0].mxu0
    %v4475 = vpop.f32.mrb[0].mxu0
    %v4476 = vadd.f32 0.0, %v4475
    %v4477 = vpop.f32.mrb[0].mxu0
    %4478 = vmatprep.mubr.bf16.mxu0 0
    %4479 = vmatmul.mubr.bf16.gmra.mrb[0].mxu0 %v4368
    %v4480 = vpop.f32.mrb[0].mxu0
    %v4481 = vadd.f32 0.0, %v4480
    %v4482 = vpop.f32.mrb[0].mxu0
    %v4483 = vpop.f32.mrb[0].mxu0
    %v4484 = vadd.f32 0.0, %v4483
    %v4485 = vpop.f32.mrb[0].mxu0
    %4486 = vmatprep.mubr.bf16.mxu0 0
    %4487 = vmatmul.mubr.bf16.gmra.mrb[0].mxu0 %v4369
    %v4488 = vpop.f32.mrb[0].mxu0
    %v4489 = vadd.f32 0.0, %v4488
    %v4490 = vpop.f32.mrb[0].mxu0
    %v4491 = vpop.f32.mrb[0].mxu0
    %v4492 = vadd.f32 0.0, %v4491
    %v4493 = vpop.f32.mrb[0].mxu0
    %4494 = vmatprep.mubr.bf16.mxu0 0
    %4495 = vmatmul.mubr.bf16.gmra.mrb[0].mxu0 %v4370
    %v4496 = vpop.f32.mrb[0].mxu0
    %v4497 = vadd.f32 0.0, %v4496
    %v4498 = vpop.f32.mrb[0].mxu0
    %v4499 = vpop.f32.mrb[0].mxu0
    %v4500 = vadd.f32 0.0, %v4499
    %v4501 = vpop.f32.mrb[0].mxu0
    %4502 = vmatprep.mubr.bf16.mxu0 0
    %4503 = vmatmul.mubr.bf16.gmra.mrb[0].mxu0 %v4371
    %v4504 = vpop.f32.mrb[0].mxu0
    %v4505 = vadd.f32 0.0, %v4504
    %v4506 = vpop.f32.mrb[0].mxu0
    %v4507 = vpop.f32.mrb[0].mxu0
    %v4508 = vadd.f32 0.0, %v4507
    %v4509 = vpop.f32.mrb[0].mxu0
    %4510 = vmatprep.mubr.bf16.mxu0 0
    %4511 = vmatmul.mubr.bf16.gmra.mrb[0].mxu0 %v4372
    %v4512 = vpop.f32.mrb[0].mxu0
    %v4513 = vadd.f32 0.0, %v4512
    %v4514 = vpop.f32.mrb[0].mxu0
    %v4515 = vpop.f32.mrb[0].mxu0
    %v4516 = vadd.f32 0.0, %v4515
    %v4517 = vpop.f32.mrb[0].mxu0
    %4518 = vmatprep.mubr.bf16.mxu0 0
    %4519 = vmatmul.mubr.bf16.gmra.mrb[0].mxu0 %v4373
    %v4520 = vpop.f32.mrb[0].mxu0
    %v4521 = vadd.f32 0.0, %v4520
    %v4522 = vpop.f32.mrb[0].mxu0
    %v4523 = vpop.f32.mrb[0].mxu0
    %v4524 = vadd.f32 0.0, %v4523
    %v4525 = vpop.f32.mrb[0].mxu0
    %4526 = vmatprep.mubr.bf16.mxu0 0
    %4527 = vmatmul.mubr.bf16.gmra.mrb[0].mxu0 %v4374
    %v4528 = vpop.f32.mrb[0].mxu0
    %v4529 = vadd.f32 0.0, %v4528
    %v4530 = vpop.f32.mrb[0].mxu0
    %v4531 = vpop.f32.mrb[0].mxu0
    %v4532 = vadd.f32 0.0, %v4531
    %v4533 = vpop.f32.mrb[0].mxu0
    %4534 = vmatprep.mubr.bf16.mxu0 0
    %4535 = vmatmul.mubr.bf16.gmra.mrb[0].mxu0 %v4375
    %v4536 = vpop.f32.mrb[0].mxu0
    %v4537 = vadd.f32 0.0, %v4536
    %v4538 = vpop.f32.mrb[0].mxu0
    %v4539 = vpop.f32.mrb[0].mxu0
    %v4540 = vadd.f32 0.0, %v4539
    %v4541 = vpop.f32.mrb[0].mxu0
    %4542 = vmatprep.mubr.bf16.mxu0 0
    %4543 = vmatmul.mubr.bf16.gmra.mrb[0].mxu0 %v4376
    %v4544 = vpop.f32.mrb[0].mxu0
    %v4545 = vadd.f32 0.0, %v4544
    %v4546 = vpop.f32.mrb[0].mxu0
    %v4547 = vpop.f32.mrb[0].mxu0
    %v4548 = vadd.f32 0.0, %v4547
    %v4549 = vpop.f32.mrb[0].mxu0
    %4550 = vmatprep.mubr.bf16.mxu0 0
    %4551 = vmatmul.mubr.bf16.gmra.mrb[0].mxu0 %v4377
    %v4552 = vpop.f32.mrb[0].mxu0
    %v4553 = vadd.f32 0.0, %v4552
    %v4554 = vpop.f32.mrb[0].mxu0
    %v4555 = vpop.f32.mrb[0].mxu0
    %v4556 = vadd.f32 0.0, %v4555
    %v4557 = vpop.f32.mrb[0].mxu0
    %4558 = vmatprep.mubr.bf16.mxu0 0
    %4559 = vmatmul.mubr.bf16.gmra.mrb[0].mxu0 %v4378
    %v4560 = vpop.f32.mrb[0].mxu0
    %v4561 = vadd.f32 0.0, %v4560
    %v4562 = vpop.f32.mrb[0].mxu0
    %v4563 = vpop.f32.mrb[0].mxu0
    %v4564 = vadd.f32 0.0, %v4563
    %v4565 = vpop.f32.mrb[0].mxu0
    %4566 = vmatprep.mubr.bf16.mxu0 0
    %4567 = vmatmul.mubr.bf16.gmra.mrb[0].mxu0 %v4379
    %v4568 = vpop.f32.mrb[0].mxu0
    %v4569 = vadd.f32 0.0, %v4568
    %v4570 = vpop.f32.mrb[0].mxu0
    %v4571 = vpop.f32.mrb[0].mxu0
    %v4572 = vadd.f32 0.0, %v4571
    %v4573 = vpop.f32.mrb[0].mxu0
    %4574 = vdwg.mxu0
    %v4576 = vsel %vm310, %v4433, 0
    %v4579 = vsel %vm310, %v4436, 0
    %v4582 = vsel %vm310, %v4441, 0
    %v4585 = vsel %vm310, %v4444, 0
    %v4588 = vsel %vm310, %v4449, 0
    %v4591 = vsel %vm310, %v4452, 0
    %v4594 = vsel %vm310, %v4457, 0
    %v4597 = vsel %vm310, %v4460, 0
    %v4600 = vsel %vm310, %v4465, 0
    %v4603 = vsel %vm310, %v4468, 0
    %v4606 = vsel %vm310, %v4473, 0
    %v4609 = vsel %vm310, %v4476, 0
    %4611 = vmatprep.subr.mxu0 0.0
    %4612 = vmatpush1.msra.mxu0 %v2873
    %4613 = vmatprep.subr.mxu0 0.0
    %4614 = vmatpush1.msra.mxu0 %v2874
    %4615 = vmatprep.subr.mxu0 0.0
    %4616 = vmatpush1.msra.mxu0 %v2875
    %4617 = vmatprep.subr.mxu0 0.0
    %4618 = vmatpush1.msra.mxu0 %v2876
    %4619 = vmatprep.subr.mxu0 0.0
    %4620 = vmatpush1.msra.mxu0 %v2877
    %4621 = vmatprep.subr.mxu0 0.0
    %4622 = vmatpush1.msra.mxu0 %v2878
    %4623 = vmatprep.subr.mxu0 0.0
    %4624 = vmatpush1.msra.mxu0 %v2879
    %4625 = vmatprep.subr.mxu0 0.0
    %4626 = vmatpush1.msra.mxu0 %v2880
    %4627 = vmatprep.subr.mxu0 0.0
    %4628 = vmatpush1.msra.mxu0 0.0
    %4629 = vmatprep.subr.mxu0 0.0
    %4630 = vmatpush1.msra.mxu0 0.0
    %4631 = vmatprep.subr.mxu0 0.0
    %4632 = vmatpush1.msra.mxu0 0.0
    %4633 = vmatprep.subr.mxu0 0.0
    %4634 = vmatpush1.msra.mxu0 0.0
    %4635 = vmatprep.subr.mxu0 0.0
    %4636 = vmatpush1.msra.mxu0 0.0
    %4637 = vmatprep.subr.mxu0 0.0
    %4638 = vmatpush1.msra.mxu0 0.0
    %4639 = vmatprep.subr.mxu0 0.0
    %4640 = vmatpush1.msra.mxu0 0.0
    %4641 = vmatprep.subr.mxu0 0.0
    %4642 = vmatpush1.msra.mxu0 0.0
    %4643 = vmatprep.subr.mxu0 0.0
    %4644 = vmatpush1.msra.mxu0 0.0
    %4645 = vmatprep.subr.mxu0 0.0
    %4646 = vmatpush1.msra.mxu0 0.0
    %4647 = vmatprep.subr.mxu0 0.0
    %4648 = vmatpush1.msra.mxu0 0.0
    %4649 = vmatprep.subr.mxu0 0.0
    %4650 = vmatpush1.msra.mxu0 0.0
    %4651 = vmatprep.subr.mxu0 0.0
    %4652 = vmatpush1.msra.mxu0 0.0
    %4653 = vmatprep.subr.mxu0 0.0
    %4654 = vmatpush1.msra.mxu0 0.0
    %4655 = vmatprep.subr.mxu0 0.0
    %4656 = vmatpush1.msra.mxu0 0.0
    %4657 = vmatprep.subr.mxu0 0.0
    %4658 = vmatpush1.msra.mxu0 0.0
    %4659 = vmatprep.subr.mxu0 0.0
    %4660 = vmatpush1.msra.mxu0 0.0
    %4661 = vmatprep.subr.mxu0 0.0
    %4662 = vmatpush1.msra.mxu0 0.0
    %4663 = vmatprep.subr.mxu0 0.0
    %4664 = vmatpush1.msra.mxu0 0.0
    %4665 = vmatprep.subr.mxu0 0.0
    %4666 = vmatpush1.msra.mxu0 0.0
    %4667 = vmatprep.subr.mxu0 0.0
    %4668 = vmatpush1.msra.mxu0 0.0
    %4669 = vmatprep.subr.mxu0 0.0
    %4670 = vmatpush1.msra.mxu0 0.0
    %4671 = vmatprep.subr.mxu0 0.0
    %4672 = vmatpush1.msra.mxu0 0.0
    %4673 = vmatprep.subr.mxu0 0.0
    %4674 = vmatpush1.msra.mxu0 0.0
    %4675 = vmatprep.mubr.f32.mxu0 0.0
    %4676 = vmatmul.mubr.f32.gmra.mrb[0].mxu0 %v4576
    %v4677 = vpop.f32.mrb[0].mxu0
    %v4678 = vadd.f32 0.0, %v4677
    %v4679 = vpop.f32.mrb[0].mxu0
    %4680 = vmatprep.mubr.f32.mxu0 0.0
    %4681 = vmatmul.mubr.f32.gmra.mrb[0].mxu0 %v4579
    %v4682 = vpop.f32.mrb[0].mxu0
    %v4683 = vadd.f32 0.0, %v4682
    %v4684 = vpop.f32.mrb[0].mxu0
    %4685 = vmatprep.mubr.f32.mxu0 0.0
    %4686 = vmatmul.mubr.f32.gmra.mrb[0].mxu0 %v4582
    %v4687 = vpop.f32.mrb[0].mxu0
    %v4688 = vadd.f32 0.0, %v4687
    %v4689 = vpop.f32.mrb[0].mxu0
    %4690 = vmatprep.mubr.f32.mxu0 0.0
    %4691 = vmatmul.mubr.f32.gmra.mrb[0].mxu0 %v4585
    %v4692 = vpop.f32.mrb[0].mxu0
    %v4693 = vadd.f32 0.0, %v4692
    %v4694 = vpop.f32.mrb[0].mxu0
    %4695 = vmatprep.mubr.f32.mxu0 0.0
    %4696 = vmatmul.mubr.f32.gmra.mrb[0].mxu0 %v4588
    %v4697 = vpop.f32.mrb[0].mxu0
    %v4698 = vadd.f32 0.0, %v4697
    %v4699 = vpop.f32.mrb[0].mxu0
    %4700 = vmatprep.mubr.f32.mxu0 0.0
    %4701 = vmatmul.mubr.f32.gmra.mrb[0].mxu0 %v4591
    %v4702 = vpop.f32.mrb[0].mxu0
    %v4703 = vadd.f32 0.0, %v4702
    %v4704 = vpop.f32.mrb[0].mxu0
    %4705 = vmatprep.mubr.f32.mxu0 0.0
    %4706 = vmatmul.mubr.f32.gmra.mrb[0].mxu0 %v4594
    %v4707 = vpop.f32.mrb[0].mxu0
    %v4708 = vadd.f32 0.0, %v4707
    %v4709 = vpop.f32.mrb[0].mxu0
    %4710 = vmatprep.mubr.f32.mxu0 0.0
    %4711 = vmatmul.mubr.f32.gmra.mrb[0].mxu0 %v4597
    %v4712 = vpop.f32.mrb[0].mxu0
    %v4713 = vadd.f32 0.0, %v4712
    %v4714 = vpop.f32.mrb[0].mxu0
    %4715 = vmatprep.mubr.f32.mxu0 0.0
    %4716 = vmatmul.mubr.f32.gmra.mrb[0].mxu0 %v4600
    %v4717 = vpop.f32.mrb[0].mxu0
    %v4718 = vadd.f32 0.0, %v4717
    %v4719 = vpop.f32.mrb[0].mxu0
    %4720 = vmatprep.mubr.f32.mxu0 0.0
    %4721 = vmatmul.mubr.f32.gmra.mrb[0].mxu0 %v4603
    %v4722 = vpop.f32.mrb[0].mxu0
    %v4723 = vadd.f32 0.0, %v4722
    %v4724 = vpop.f32.mrb[0].mxu0
    %4725 = vmatprep.mubr.f32.mxu0 0.0
    %4726 = vmatmul.mubr.f32.gmra.mrb[0].mxu0 %v4606
    %v4727 = vpop.f32.mrb[0].mxu0
    %v4728 = vadd.f32 0.0, %v4727
    %v4729 = vpop.f32.mrb[0].mxu0
    %4730 = vmatprep.mubr.f32.mxu0 0.0
    %4731 = vmatmul.mubr.f32.gmra.mrb[0].mxu0 %v4609
    %v4732 = vpop.f32.mrb[0].mxu0
    %v4733 = vadd.f32 0.0, %v4732
    %v4734 = vpop.f32.mrb[0].mxu0
    %4735 = vdwg.mxu0
    %v4736 = vadd.f32 %v4481, %v4678
    %v4737 = vadd.f32 %v4484, %v4683
    %v4738 = vadd.f32 %v4489, %v4688
    %v4739 = vadd.f32 %v4492, %v4693
    %v4740 = vadd.f32 %v4497, %v4698
    %v4741 = vadd.f32 %v4500, %v4703
    %v4742 = vadd.f32 %v4505, %v4708
    %v4743 = vadd.f32 %v4508, %v4713
    %v4744 = vadd.f32 %v4513, %v4718
    %v4745 = vadd.f32 %v4516, %v4723
    %v4746 = vadd.f32 %v4521, %v4728
    %v4747 = vadd.f32 %v4524, %v4733
    %v4749 = vsel %vm310, %v4529, 0
    %v4752 = vsel %vm310, %v4532, 0
    %v4755 = vsel %vm310, %v4537, 0
    %v4758 = vsel %vm310, %v4540, 0
    %v4761 = vsel %vm310, %v4545, 0
    %v4764 = vsel %vm310, %v4548, 0
    %v4767 = vsel %vm310, %v4553, 0
    %v4770 = vsel %vm310, %v4556, 0
    %v4773 = vsel %vm310, %v4561, 0
    %v4776 = vsel %vm310, %v4564, 0
    %v4779 = vsel %vm310, %v4569, 0
    %v4782 = vsel %vm310, %v4572, 0
    %4784 = vmatprep.subr.mxu0 0.0
    %4785 = vmatpush1.msra.mxu0 %v3091
    %4786 = vmatprep.subr.mxu0 0.0
    %4787 = vmatpush1.msra.mxu0 %v3092
    %4788 = vmatprep.subr.mxu0 0.0
    %4789 = vmatpush1.msra.mxu0 %v3093
    %4790 = vmatprep.subr.mxu0 0.0
    %4791 = vmatpush1.msra.mxu0 %v3094
    %4792 = vmatprep.subr.mxu0 0.0
    %4793 = vmatpush1.msra.mxu0 %v3095
    %4794 = vmatprep.subr.mxu0 0.0
    %4795 = vmatpush1.msra.mxu0 %v3096
    %4796 = vmatprep.subr.mxu0 0.0
    %4797 = vmatpush1.msra.mxu0 %v3097
    %4798 = vmatprep.subr.mxu0 0.0
    %4799 = vmatpush1.msra.mxu0 %v3098
    %4800 = vmatprep.subr.mxu0 0.0
    %4801 = vmatpush1.msra.mxu0 0.0
    %4802 = vmatprep.subr.mxu0 0.0
    %4803 = vmatpush1.msra.mxu0 0.0
    %4804 = vmatprep.subr.mxu0 0.0
    %4805 = vmatpush1.msra.mxu0 0.0
    %4806 = vmatprep.subr.mxu0 0.0
    %4807 = vmatpush1.msra.mxu0 0.0
    %4808 = vmatprep.subr.mxu0 0.0
    %4809 = vmatpush1.msra.mxu0 0.0
    %4810 = vmatprep.subr.mxu0 0.0
    %4811 = vmatpush1.msra.mxu0 0.0
    %4812 = vmatprep.subr.mxu0 0.0
    %4813 = vmatpush1.msra.mxu0 0.0
    %4814 = vmatprep.subr.mxu0 0.0
    %4815 = vmatpush1.msra.mxu0 0.0
    %4816 = vmatprep.subr.mxu0 0.0
    %4817 = vmatpush1.msra.mxu0 0.0
    %4818 = vmatprep.subr.mxu0 0.0
    %4819 = vmatpush1.msra.mxu0 0.0
    %4820 = vmatprep.subr.mxu0 0.0
    %4821 = vmatpush1.msra.mxu0 0.0
    %4822 = vmatprep.subr.mxu0 0.0
    %4823 = vmatpush1.msra.mxu0 0.0
    %4824 = vmatprep.subr.mxu0 0.0
    %4825 = vmatpush1.msra.mxu0 0.0
    %4826 = vmatprep.subr.mxu0 0.0
    %4827 = vmatpush1.msra.mxu0 0.0
    %4828 = vmatprep.subr.mxu0 0.0
    %4829 = vmatpush1.msra.mxu0 0.0
    %4830 = vmatprep.subr.mxu0 0.0
    %4831 = vmatpush1.msra.mxu0 0.0
    %4832 = vmatprep.subr.mxu0 0.0
    %4833 = vmatpush1.msra.mxu0 0.0
    %4834 = vmatprep.subr.mxu0 0.0
    %4835 = vmatpush1.msra.mxu0 0.0
    %4836 = vmatprep.subr.mxu0 0.0
    %4837 = vmatpush1.msra.mxu0 0.0
    %4838 = vmatprep.subr.mxu0 0.0
    %4839 = vmatpush1.msra.mxu0 0.0
    %4840 = vmatprep.subr.mxu0 0.0
    %4841 = vmatpush1.msra.mxu0 0.0
    %4842 = vmatprep.subr.mxu0 0.0
    %4843 = vmatpush1.msra.mxu0 0.0
    %4844 = vmatprep.subr.mxu0 0.0
    %4845 = vmatpush1.msra.mxu0 0.0
    %4846 = vmatprep.subr.mxu0 0.0
    %4847 = vmatpush1.msra.mxu0 0.0
    %4848 = vmatprep.mubr.f32.mxu0 0.0
    %4849 = vmatmul.mubr.f32.gmra.mrb[0].mxu0 %v4749
    %v4850 = vpop.f32.mrb[0].mxu0
    %v4851 = vadd.f32 0.0, %v4850
    %v4852 = vpop.f32.mrb[0].mxu0
    %4853 = vmatprep.mubr.f32.mxu0 0.0
    %4854 = vmatmul.mubr.f32.gmra.mrb[0].mxu0 %v4752
    %v4855 = vpop.f32.mrb[0].mxu0
    %v4856 = vadd.f32 0.0, %v4855
    %v4857 = vpop.f32.mrb[0].mxu0
    %4858 = vmatprep.mubr.f32.mxu0 0.0
    %4859 = vmatmul.mubr.f32.gmra.mrb[0].mxu0 %v4755
    %v4860 = vpop.f32.mrb[0].mxu0
    %v4861 = vadd.f32 0.0, %v4860
    %v4862 = vpop.f32.mrb[0].mxu0
    %4863 = vmatprep.mubr.f32.mxu0 0.0
    %4864 = vmatmul.mubr.f32.gmra.mrb[0].mxu0 %v4758
    %v4865 = vpop.f32.mrb[0].mxu0
    %v4866 = vadd.f32 0.0, %v4865
    %v4867 = vpop.f32.mrb[0].mxu0
    %4868 = vmatprep.mubr.f32.mxu0 0.0
    %4869 = vmatmul.mubr.f32.gmra.mrb[0].mxu0 %v4761
    %v4870 = vpop.f32.mrb[0].mxu0
    %v4871 = vadd.f32 0.0, %v4870
    %v4872 = vpop.f32.mrb[0].mxu0
    %4873 = vmatprep.mubr.f32.mxu0 0.0
    %4874 = vmatmul.mubr.f32.gmra.mrb[0].mxu0 %v4764
    %v4875 = vpop.f32.mrb[0].mxu0
    %v4876 = vadd.f32 0.0, %v4875
    %v4877 = vpop.f32.mrb[0].mxu0
    %4878 = vmatprep.mubr.f32.mxu0 0.0
    %4879 = vmatmul.mubr.f32.gmra.mrb[0].mxu0 %v4767
    %v4880 = vpop.f32.mrb[0].mxu0
    %v4881 = vadd.f32 0.0, %v4880
    %v4882 = vpop.f32.mrb[0].mxu0
    %4883 = vmatprep.mubr.f32.mxu0 0.0
    %4884 = vmatmul.mubr.f32.gmra.mrb[0].mxu0 %v4770
    %v4885 = vpop.f32.mrb[0].mxu0
    %v4886 = vadd.f32 0.0, %v4885
    %v4887 = vpop.f32.mrb[0].mxu0
    %4888 = vmatprep.mubr.f32.mxu0 0.0
    %4889 = vmatmul.mubr.f32.gmra.mrb[0].mxu0 %v4773
    %v4890 = vpop.f32.mrb[0].mxu0
    %v4891 = vadd.f32 0.0, %v4890
    %v4892 = vpop.f32.mrb[0].mxu0
    %4893 = vmatprep.mubr.f32.mxu0 0.0
    %4894 = vmatmul.mubr.f32.gmra.mrb[0].mxu0 %v4776
    %v4895 = vpop.f32.mrb[0].mxu0
    %v4896 = vadd.f32 0.0, %v4895
    %v4897 = vpop.f32.mrb[0].mxu0
    %4898 = vmatprep.mubr.f32.mxu0 0.0
    %4899 = vmatmul.mubr.f32.gmra.mrb[0].mxu0 %v4779
    %v4900 = vpop.f32.mrb[0].mxu0
    %v4901 = vadd.f32 0.0, %v4900
    %v4902 = vpop.f32.mrb[0].mxu0
    %4903 = vmatprep.mubr.f32.mxu0 0.0
    %4904 = vmatmul.mubr.f32.gmra.mrb[0].mxu0 %v4782
    %v4905 = vpop.f32.mrb[0].mxu0
    %v4906 = vadd.f32 0.0, %v4905
    %v4907 = vpop.f32.mrb[0].mxu0
    %4908 = vdwg.mxu0
    %v4909 = vadd.f32 %v4736, %v4851
    %v4910 = vadd.f32 %v4737, %v4856
    %v4911 = vadd.f32 %v4738, %v4861
    %v4912 = vadd.f32 %v4739, %v4866
    %v4913 = vadd.f32 %v4740, %v4871
    %v4914 = vadd.f32 %v4741, %v4876
    %v4915 = vadd.f32 %v4742, %v4881
    %v4916 = vadd.f32 %v4743, %v4886
    %v4917 = vadd.f32 %v4744, %v4891
    %v4918 = vadd.f32 %v4745, %v4896
    %v4919 = vadd.f32 %v4746, %v4901
    %v4920 = vadd.f32 %v4747, %v4906
    %v4921 = vld [vmem:[%s16] sm:$0xff]
    %v4922 = vld [vmem:[%s16 + $0x8] sm:$0xff]
    %v4923 = vld [vmem:[%s16 + $0x10] sm:$0xff]
    %v4924 = vld [vmem:[%s16 + $0x18] sm:$0xff]
    %v4925 = vld [vmem:[%s16 + $0x20] sm:$0xff]
    %v4926 = vld [vmem:[%s16 + $0x28] sm:$0xff]
    %v4927 = vld [vmem:[%s16 + $0x30] sm:$0xff]
    %v4928 = vld [vmem:[%s16 + $0x38] sm:$0xff]
    %v4929 = vld [vmem:[%s16 + $0x40] sm:$0xff]
    %v4930 = vld [vmem:[%s16 + $0x48] sm:$0xff]
    %v4931 = vld [vmem:[%s16 + $0x50] sm:$0xff]
    %v4932 = vld [vmem:[%s16 + $0x58] sm:$0xff]
    %4934 = vset.pattern.permute.xlu0 0
    %4935 = vperm.xlu0 %4934, %v4921
    %v4936 = vpop.permute.xlu0 %4935
    %4939 = vset.pattern.permute.xlu0 0
    %4940 = vperm.xlu0 %4939, %v4922
    %v4941 = vpop.permute.xlu0 %4940
    %4944 = vset.pattern.permute.xlu0 0
    %4945 = vperm.xlu0 %4944, %v4923
    %v4946 = vpop.permute.xlu0 %4945
    %4949 = vset.pattern.permute.xlu0 0
    %4950 = vperm.xlu0 %4949, %v4924
    %v4951 = vpop.permute.xlu0 %4950
    %4954 = vset.pattern.permute.xlu0 0
    %4955 = vperm.xlu0 %4954, %v4925
    %v4956 = vpop.permute.xlu0 %4955
    %4959 = vset.pattern.permute.xlu0 0
    %4960 = vperm.xlu0 %4959, %v4926
    %v4961 = vpop.permute.xlu0 %4960
    %4964 = vset.pattern.permute.xlu0 0
    %4965 = vperm.xlu0 %4964, %v4927
    %v4966 = vpop.permute.xlu0 %4965
    %4969 = vset.pattern.permute.xlu0 0
    %4970 = vperm.xlu0 %4969, %v4928
    %v4971 = vpop.permute.xlu0 %4970
    %4974 = vset.pattern.permute.xlu0 0
    %4975 = vperm.xlu0 %4974, %v4929
    %v4976 = vpop.permute.xlu0 %4975
    %4979 = vset.pattern.permute.xlu0 0
    %4980 = vperm.xlu0 %4979, %v4930
    %v4981 = vpop.permute.xlu0 %4980
    %4984 = vset.pattern.permute.xlu0 0
    %4985 = vperm.xlu0 %4984, %v4931
    %v4986 = vpop.permute.xlu0 %4985
    %4989 = vset.pattern.permute.xlu0 0
    %4990 = vperm.xlu0 %4989, %v4932
    %v4991 = vpop.permute.xlu0 %4990
    %v4993 = vadd.f32 %v4909, %v4936
    %v4994 = vadd.f32 %v4910, %v4941
    %v4995 = vadd.f32 %v4911, %v4946
    %v4996 = vadd.f32 %v4912, %v4951
    %v4997 = vadd.f32 %v4913, %v4956
    %v4998 = vadd.f32 %v4914, %v4961
    %v4999 = vadd.f32 %v4915, %v4966
    %v5000 = vadd.f32 %v4916, %v4971
    %v5001 = vadd.f32 %v4917, %v4976
    %v5002 = vadd.f32 %v4918, %v4981
    %v5003 = vadd.f32 %v4919, %v4986
    %v5004 = vadd.f32 %v4920, %v4991
    %5005 = vst.msk [vmem:[%s17] sm:$0xff] %vm310, %v4993
    %5006 = vst.msk [vmem:[%s17 + $0x8] sm:$0xff] %vm310, %v4994
    %5007 = vst.msk [vmem:[%s17 + $0x10] sm:$0xff] %vm310, %v4995
    %5008 = vst.msk [vmem:[%s17 + $0x18] sm:$0xff] %vm310, %v4996
    %5009 = vst.msk [vmem:[%s17 + $0x20] sm:$0xff] %vm310, %v4997
    %5010 = vst.msk [vmem:[%s17 + $0x28] sm:$0xff] %vm310, %v4998
    %5011 = vst.msk [vmem:[%s17 + $0x30] sm:$0xff] %vm310, %v4999
    %5012 = vst.msk [vmem:[%s17 + $0x38] sm:$0xff] %vm310, %v5000
    %5013 = vst.msk [vmem:[%s17 + $0x40] sm:$0xff] %vm310, %v5001
    %5014 = vst.msk [vmem:[%s17 + $0x48] sm:$0xff] %vm310, %v5002
    %5015 = vst.msk [vmem:[%s17 + $0x50] sm:$0xff] %vm310, %v5003
    %5016 = vst.msk [vmem:[%s17 + $0x58] sm:$0xff] %vm310, %v5004
    // Predicated region
    $region98: #{tpu_custom_call.1} parent=1 // pred_check
      _
    $region99: #{tpu_custom_call.1} parent=1 // pred_check_branch
      %5018 = sbr.rel (0) target = $region101
    $region100: #{tpu_custom_call.1} parent=1 // pred_region
      _
    $region101: #{tpu_custom_call.1} parent=1 // pred_fallthru
      _
    // Predicated region
    $region102: #{tpu_custom_call.1} parent=1 // pred_check
      _
    $region103: #{tpu_custom_call.1} parent=1 // pred_check_branch
      %5020 = sbr.rel (0) target = $region105
    $region104: #{tpu_custom_call.1} parent=1 // pred_region
      _
    $region105: #{tpu_custom_call.1} parent=1 // pred_fallthru
      _
    %5021 = vsyncpa [#allocation3], 1
    %5022 = vsyncpa [#allocation5], 1
    %5023 = vsyncpa [#allocation8], 1
    %5024 = vsyncpa [#allocation11], 1

</llo_original>
